<compile_context>
chip_gen: v5e
topology: v5e:2x2
jax: 0.10.0
libtpu: 0.0.40
codegen_flags: <defaults>
</compile_context>

<pallas_src>
import math
import numpy as np
import jax
import jax.numpy as jnp
from jax.experimental import pallas as pl
from jax.experimental.pallas import tpu as pltpu

K = 4          # Chebyshev polynomial order (3 + 1)
LANE = 128     # TPU lane width


def _rup(x, mult=LANE):
    return ((x + mult - 1) // mult) * mult


def _pad_to(a, shape):
    return jnp.pad(a, [(0, s - d) for d, s in zip(a.shape, shape)])


# --------------------------------------------------------------------------- kernel
def stock_block_kernel(x_ref, L_ref, c0_ref, b0_ref, w12r_ref, w12i_ref,
                       b12r_ref, b12i_ref, wg_ref, whead_ref, bhead_ref,
                       wfr_ref, bfr_ref, wbs_ref, bbs_ref, out_ref):
    f32 = jnp.float32
    bf16 = jnp.bfloat16
    Kc, TB, N, _ = L_ref.shape
    O0p = c0_ref.shape[2] // 4          # padded GLU hidden width (multiple of 128)
    Mp = wg_ref.shape[2]                # padded m*T
    Tp = wfr_ref.shape[1]               # padded time_step
    rows = TB * N

    x2d = x_ref[...]                    # (rows, T) bf16
    x3d = x2d.reshape(TB, N, -1)        # free leading-dim split

    # Graph conv (batched over TB) fused with the DFT-folded GLU-0 weights.
    # c0[k] = [C@Wrl_k | C@Wrr_k | -S@Wil_k | -S@Wir_k], so GLU-0's pre-activation
    # is sum_k (L_k @ x) @ c0[k] with no explicit FFT in the kernel.
    dn = (((2,), (1,)), ((0,), (0,)))   # L[b] @ x[b], batch over TB
    acc = jnp.zeros((rows, 4 * O0p), f32)
    for k in range(Kc):                 # K = 4, statically unrolled
        gk = jax.lax.dot_general(L_ref[k], x3d, dn,
                                 preferred_element_type=f32)      # (TB, N, T)
        acc += jnp.dot(gk.reshape(rows, -1).astype(bf16), c0_ref[k],
                       preferred_element_type=f32)
    acc += b0_ref[...]
    real = acc[:, :O0p] * jax.nn.sigmoid(acc[:, O0p:2 * O0p])
    img = acc[:, 2 * O0p:3 * O0p] * jax.nn.sigmoid(acc[:, 3 * O0p:])

    # GLU layers 1 and 2 (left|right weights concatenated; splits lane-aligned).
    for layer in range(2):
        hr = jnp.dot(real.astype(bf16), w12r_ref[layer],
                     preferred_element_type=f32) + b12r_ref[layer]
        hi = jnp.dot(img.astype(bf16), w12i_ref[layer],
                     preferred_element_type=f32) + b12i_ref[layer]
        real = hr[:, :O0p] * jax.nn.sigmoid(hr[:, O0p:])
        img = hi[:, :O0p] * jax.nn.sigmoid(hi[:, O0p:])

    # Re(IDFT) + graph-conv weight: two dots into one f32 accumulator (no concat).
    igf = jnp.dot(real.astype(bf16), wg_ref[0], preferred_element_type=f32)
    igf = igf + jnp.dot(img.astype(bf16), wg_ref[1], preferred_element_type=f32)

    # Forecast / backcast heads (forecast|backcast projections concatenated).
    h = jnp.dot(igf.astype(bf16), whead_ref[...],
                preferred_element_type=f32) + bhead_ref[...]      # (rows, Mp+Tp)
    fsrc = jax.nn.sigmoid(h[:, :Mp])
    fcst = jnp.dot(fsrc.astype(bf16), wfr_ref[...],
                   preferred_element_type=f32) + bfr_ref[...]     # (rows, Tp)
    # Tiny (T, Tp) shortcut matmul kept in f32: sigmoid(h - shortcut) is sensitive.
    bshort = jnp.dot(x2d.astype(f32), wbs_ref[...],
                     preferred_element_type=f32) + bbs_ref[...]   # (rows, Tp)
    bsrc = jax.nn.sigmoid(h[:, Mp:] - bshort)

    # Lane-dense bf16 output slab: [forecast | backcast], each Tp (=128k) lanes.
    out_ref[:, :Tp] = fcst.astype(out_ref.dtype)
    out_ref[:, Tp:] = bsrc.astype(out_ref.dtype)


# --------------------------------------------------------------------------- params
def init_params(key, T, N, m):
    """Deterministic synthetic parameters. Linear weights stored as [in, out]."""
    O0 = 4 * m * T          # time_step * output_channel, output_channel = 4*m
    keys = iter(jax.random.split(key, 64))

    def linear(in_dim, out_dim):
        w = jax.random.normal(next(keys), (in_dim, out_dim), jnp.float32) / math.sqrt(in_dim)
        b = 0.1 * jax.random.normal(next(keys), (1, out_dim), jnp.float32)
        return w, b

    glu_in = [4 * T, 4 * T, O0, O0, O0, O0]
    glu_wl, glu_bl, glu_wr, glu_br = [], [], [], []
    for i in range(6):
        w, b = linear(glu_in[i], O0); glu_wl.append(w); glu_bl.append(b)
        w, b = linear(glu_in[i], O0); glu_wr.append(w); glu_br.append(b)

    M = m * T
    # xavier_normal_ on [1, 4, 1, M, M]: std = sqrt(2 / (fan_in + fan_out))
    weight = math.sqrt(2.0 / (2 * M)) * jax.random.normal(
        next(keys), (1, K, 1, M, M), jnp.float32)
    wf, bf = linear(M, M)       # forecast
    wfr, bfr = linear(M, T)     # forecast_result
    wb, bb = linear(M, T)       # backcast (stack_cnt == 0)
    wbs, bbs = linear(T, T)     # backcast_short_cut
    return dict(glu_wl=glu_wl, glu_bl=glu_bl, glu_wr=glu_wr, glu_br=glu_br,
                weight=weight, wf=wf, bf=bf, wfr=wfr, bfr=bfr,
                wb=wb, bb=bb, wbs=wbs, bbs=bbs)


def make_kernel_params(p, T, m):
    """Fold DFT/IDFT constants into the weights, concat GLU left/right heads and
    zero-pad every output width to a multiple of 128 lanes."""
    f32, bf16 = jnp.float32, jnp.bfloat16
    hp = jax.lax.Precision.HIGHEST
    M, O0 = m * T, 4 * m * T
    O0p, Mp, Tp = _rup(O0), _rup(M), _rup(T)

    # Forward DFT matrices (angles reduced mod T for f32 robustness at large T).
    t = jnp.arange(T, dtype=f32)
    ang = 2.0 * math.pi * (jnp.outer(t, t) % T) / T
    dftc, dfts = jnp.cos(ang), jnp.sin(ang)

    # GLU-0 weights (real = GLUs[0], imag = GLUs[1]) split per Chebyshev order
    # and folded with the DFT:  c0[k] = [C@Wrl_k | C@Wrr_k | -S@Wil_k | -S@Wir_k]
    def fold0(d, w, sign):
        r = sign * jnp.einsum('tf,kfo->kto', d, w.reshape(K, T, O0), precision=hp)
        return _pad_to(r, (K, T, O0p))
    c0 = jnp.concatenate([fold0(dftc, p['glu_wl'][0], 1.0),
                          fold0(dftc, p['glu_wr'][0], 1.0),
                          fold0(dfts, p['glu_wl'][1], -1.0),
                          fold0(dfts, p['glu_wr'][1], -1.0)], axis=-1)   # (K, T, 4*O0p)
    padb = lambda b, w: _pad_to(b, (1, w))
    b0 = jnp.concatenate([padb(p['glu_bl'][0], O0p), padb(p['glu_br'][0], O0p),
                          padb(p['glu_bl'][1], O0p), padb(p['glu_br'][1], O0p)], axis=-1)

    # GLU layers 1, 2 (real = GLUs[2],[4]; imag = GLUs[3],[5]); left|right concat.
    pad2 = lambda w: _pad_to(w, (O0p, O0p))
    cat_lr = lambda i: jnp.concatenate([pad2(p['glu_wl'][i]), pad2(p['glu_wr'][i])], axis=-1)
    cat_lr_b = lambda i: jnp.concatenate([padb(p['glu_bl'][i], O0p),
                                          padb(p['glu_br'][i], O0p)], axis=-1)
    w12r = jnp.stack([cat_lr(2), cat_lr(4)])
    w12i = jnp.stack([cat_lr(3), cat_lr(5)])
    b12r = jnp.stack([cat_lr_b(2), cat_lr_b(4)])
    b12i = jnp.stack([cat_lr_b(3), cat_lr_b(5)])

    # Inverse DFT (size M, incl. 1/M) folded into the graph-conv weight; kept as
    # two halves so the kernel accumulates real@wg[0] + img@wg[1] (no lane concat).
    f = jnp.arange(M, dtype=f32)
    iang = 2.0 * math.pi * (jnp.outer(f, f) % M) / M
    icos, isin = jnp.cos(iang) / M, jnp.sin(iang) / M
    Wc = p['weight'][0, :, 0]                                           # (K, M, M)
    wg_re = jnp.concatenate([jnp.matmul(icos, Wc[c], precision=hp) for c in range(K)], axis=0)
    wg_im = jnp.concatenate([jnp.matmul(isin, Wc[c], precision=hp) for c in range(K)], axis=0)
    wg = jnp.stack([_pad_to(wg_re, (O0p, Mp)), _pad_to(-wg_im, (O0p, Mp))])

    # Heads: forecast | backcast projections from igf concatenated.
    whead = jnp.concatenate([_pad_to(p['wf'], (Mp, Mp)), _pad_to(p['wb'], (Mp, Tp))], axis=-1)
    bhead = jnp.concatenate([padb(p['bf'], Mp), padb(p['bb'], Tp)], axis=-1)

    return [c0.astype(bf16), b0,
            w12r.astype(bf16), w12i.astype(bf16), b12r, b12i,
            wg.astype(bf16),
            whead.astype(bf16), bhead,
            _pad_to(p['wfr'], (Mp, Tp)).astype(bf16), padb(p['bfr'], Tp),
            _pad_to(p['wbs'], (T, Tp)),              # shortcut weight stays f32
            padb(p['bbs'], Tp)]


# --------------------------------------------------------------------------- wrapper
def _pick_block_batch(B, N):
    """Largest divisor of B that keeps >=2 grid steps (v7x megacore / pipelining),
    <=1024 rows per block, and an 8-aligned sublane dimension."""
    best = B
    for d in range(1, B + 1):
        if B % d:
            continue
        if d < B and (d * N) % 8 != 0:
            continue
        if B // d >= 2 and d * N <= 1024:
            best = d
    return best


def stock_block_forward(x, mul_L, params, T, m, block_batch=None):
    """x: [B, 1, T, N] (PyTorch layout), mul_L: [B, K, N, N]."""
    B, c, T_, N = x.shape
    assert c == 1 and T_ == T
    M, O0 = m * T, 4 * m * T
    O0p, Mp, Tp = _rup(O0), _rup(M), _rup(T)

    TB = _pick_block_batch(B, N) if block_batch is None else block_batch
    assert B % TB == 0
    assert (TB * N) % 8 == 0 or TB == B, "TB*N must be 8-aligned (or TB == B)"

    # Collapse (batch, node) into rows; pre-permute L to (K, B, N, N).
    x_rows = jnp.transpose(x[:, 0], (0, 2, 1)).reshape(B * N, T).astype(jnp.bfloat16)
    L_perm = jnp.transpose(mul_L, (1, 0, 2, 3)).astype(jnp.bfloat16)
    w_list = make_kernel_params(params, T, m)

    rows_blk, rows_all = TB * N, B * N
    nbytes = lambda a: a.size * a.dtype.itemsize

    # VMEM budget: single-buffered weights + double-buffered I/O blocks (lanes
    # padded to 128) + f32 activation intermediates.
    # TODO(synk): on v7x (64 MiB VMEM) pass a smaller block_batch so this stays
    # well under ~48 MiB; on v5e/v6e larger blocks are preferred.
    weight_bytes = sum(nbytes(a) for a in w_list)
    io_bytes = 2 * (rows_blk * LANE * 2 + K * TB * N * LANE * 2 + rows_blk * 2 * Tp * 2)
    act_bytes = rows_blk * (8 * O0p + 3 * Mp + 4 * Tp) * 4
    vmem_limit = int(min(max(2 * (weight_bytes + io_bytes + act_bytes),
                             32 * 1024 * 1024), 96 * 1024 * 1024))

    flops = 2 * (B * K * N * N * T                 # graph conv
                 + rows_all * K * T * 4 * O0p      # GLU-0 (DFT folded)
                 + rows_all * 4 * O0p * 2 * O0p    # GLU-1/2 (2 layers x 2 streams)
                 + rows_all * 2 * O0p * Mp         # IDFT + graph-conv weight
                 + rows_all * Mp * (Mp + Tp)       # forecast/backcast heads
                 + rows_all * Mp * Tp              # forecast_result
                 + rows_all * T * Tp)              # backcast shortcut
    transcendentals = rows_all * (6 * O0p + Mp + Tp)
    bytes_accessed = int(nbytes(x_rows) + nbytes(L_perm) + weight_bytes
                         + rows_all * 2 * Tp * 2)

    def build_call(single_buffer_consts):
        def const_spec(arr):
            zeros = (0,) * arr.ndim
            if single_buffer_consts:
                return pl.BlockSpec(arr.shape, lambda *_: zeros,
                                    pipeline_mode=pl.Buffered(1))
            return pl.BlockSpec(arr.shape, lambda *_: zeros)

        in_specs = [
            pl.BlockSpec((TB * N, T), lambda b: (b, 0)),
            pl.BlockSpec((K, TB, N, N), lambda b: (0, b, 0, 0)),
        ] + [const_spec(a) for a in w_list]
        out_specs = pl.BlockSpec((TB * N, 2 * Tp), lambda b: (b, 0))

        return pl.pallas_call(
            stock_block_kernel,
            out_shape=jax.ShapeDtypeStruct((B * N, 2 * Tp), jnp.bfloat16),
            grid=(B // TB,),
            in_specs=in_specs,
            out_specs=out_specs,
            compiler_params=pltpu.CompilerParams(
                dimension_semantics=("parallel",),   # batch blocks are independent
                vmem_limit_bytes=vmem_limit),
            cost_estimate=pl.CostEstimate(flops=flops,
                                          transcendentals=transcendentals,
                                          bytes_accessed=bytes_accessed),
        )

    try:
        out = jax.block_until_ready(build_call(True)(x_rows, L_perm, *w_list))
    except Exception:
        # Fallback if this JAX build rejects single-buffered constant operands.
        out = build_call(False)(x_rows, L_perm, *w_list)

    out = out.reshape(B, N, 2 * Tp)
    forecast = out[..., :T].astype(jnp.float32)                  # [B, N, T]
    backcast = out[..., Tp:Tp + T].astype(jnp.float32)[:, None]  # [B, 1, N, T]
    return forecast, backcast


# --------------------------------------------------------------------------- reference
def reference_forward(x, mul_L, p):
    """Literal JAX translation of the PyTorch forward (real FFT/IFFT, f32)."""
    hp = jax.lax.Precision.HIGHEST
    mul_L5 = mul_L[:, None]                                    # [B,1,K,N,N]
    x5 = jnp.transpose(x[:, None], (0, 1, 2, 4, 3))            # [B,1,1,N,T]
    gfted = jnp.matmul(mul_L5, x5, precision=hp)               # [B,1,K,N,T]
    bsz, _, _, nc, ts = gfted.shape
    inp = gfted.reshape(bsz, -1, nc, ts)                       # [B,K,N,T]
    ffted = jnp.fft.fft(inp, axis=-1)
    real = jnp.transpose(ffted.real, (0, 2, 1, 3)).reshape(bsz, nc, -1)
    img = jnp.transpose(ffted.imag, (0, 2, 1, 3)).reshape(bsz, nc, -1)

    def glu(v, i):
        left = jnp.dot(v, p['glu_wl'][i], precision=hp) + p['glu_bl'][i]
        right = jnp.dot(v, p['glu_wr'][i], precision=hp) + p['glu_br'][i]
        return left * jax.nn.sigmoid(right)

    for i in range(3):
        real = glu(real, 2 * i)
        img = glu(img, 2 * i + 1)
    real = jnp.transpose(real.reshape(bsz, nc, 4, -1), (0, 2, 1, 3))
    img = jnp.transpose(img.reshape(bsz, nc, 4, -1), (0, 2, 1, 3))
    iffted = jnp.fft.ifft(real + 1j * img, axis=-1).real       # [B,4,N,M]

    gconv = iffted[:, :, None]                                 # [B,4,1,N,M]
    igfted = jnp.matmul(gconv, p['weight'], precision=hp)      # [B,4,1,N,M]
    igfted = jnp.sum(igfted, axis=1)                           # [B,1,N,M]

    fsrc = jax.nn.sigmoid(jnp.dot(igfted, p['wf'], precision=hp) + p['bf'])[:, 0]
    forecast = jnp.dot(fsrc, p['wfr'], precision=hp) + p['bfr']
    bshort = (jnp.dot(x5, p['wbs'], precision=hp) + p['bbs'])[:, 0]      # [B,1,N,T]
    bsrc = jax.nn.sigmoid(jnp.dot(igfted, p['wb'], precision=hp) + p['bb'] - bshort)
    return forecast, bsrc


if __name__ == "__main__":
    B, T, N, m = 4, 8, 8, 2          # batch, time_step, unit (nodes), multi_layer
    key = jax.random.PRNGKey(0)
    kx, kl, kparam = jax.random.split(key, 3)
    x = 0.5 * jax.random.normal(kx, (B, 1, T, N), jnp.float32)       # [B, c=1, T, N]
    mul_L = 0.3 * jax.random.normal(kl, (B, K, N, N), jnp.float32)   # [B, K, N, N]
    params = init_params(kparam, T, N, m)

    forecast, backcast = stock_block_forward(x, mul_L, params, T, m)
    jax.block_until_ready((forecast, backcast))

    ref_f, ref_b = reference_forward(x, mul_L, params)
    assert forecast.shape == (B, N, T) and backcast.shape == (B, 1, N, T)
    # bf16 MXU path with f32 accumulation + bf16 output -> tolerance above bf16 eps.
    assert np.allclose(np.asarray(forecast), np.asarray(ref_f), rtol=3e-2, atol=3e-2), \
        "forecast mismatch vs reference"
    assert np.allclose(np.asarray(backcast), np.asarray(ref_b), rtol=3e-2, atol=3e-2), \
        "backcast mismatch vs reference"
    print("KERNEL_OK")
</pallas_src>

<mosaic_0001>
module attributes {stable_mosaic.version = 11 : i64} {
  func.func @stock_block_kernel(%arg0: i32, %arg1: memref<16x8xbf16, #tpu.memory_space<vmem>>, %arg2: memref<4x2x8x8xbf16, #tpu.memory_space<vmem>>, %arg3: memref<4x8x512xbf16, #tpu.memory_space<vmem>>, %arg4: memref<1x512xf32, #tpu.memory_space<vmem>>, %arg5: memref<2x128x256xbf16, #tpu.memory_space<vmem>>, %arg6: memref<2x128x256xbf16, #tpu.memory_space<vmem>>, %arg7: memref<2x1x256xf32, #tpu.memory_space<vmem>>, %arg8: memref<2x1x256xf32, #tpu.memory_space<vmem>>, %arg9: memref<2x128x128xbf16, #tpu.memory_space<vmem>>, %arg10: memref<128x256xbf16, #tpu.memory_space<vmem>>, %arg11: memref<1x256xf32, #tpu.memory_space<vmem>>, %arg12: memref<128x128xbf16, #tpu.memory_space<vmem>>, %arg13: memref<1x128xf32, #tpu.memory_space<vmem>>, %arg14: memref<8x128xf32, #tpu.memory_space<vmem>>, %arg15: memref<1x128xf32, #tpu.memory_space<vmem>>, %arg16: memref<16x256xbf16, #tpu.memory_space<vmem>>) attributes {dimension_semantics = [#tpu.dimension_semantics<parallel>], iteration_bounds = array<i64: 2>, scalar_prefetch = 0 : i64, scratch_operands = 0 : i64, tpu.core_type = #tpu.core_type<tc>, window_params = [{transform_indices = @transform_0, window_bounds = array<i64: 16, 8>}, {transform_indices = @transform_1, window_bounds = array<i64: 4, 2, 8, 8>}, {pipeline_mode = #tpu.pipeline_mode<synchronous>, transform_indices = @transform_2, window_bounds = array<i64: 4, 8, 512>}, {pipeline_mode = #tpu.pipeline_mode<synchronous>, transform_indices = @transform_3, window_bounds = array<i64: 1, 512>}, {pipeline_mode = #tpu.pipeline_mode<synchronous>, transform_indices = @transform_4, window_bounds = array<i64: 2, 128, 256>}, {pipeline_mode = #tpu.pipeline_mode<synchronous>, transform_indices = @transform_5, window_bounds = array<i64: 2, 128, 256>}, {pipeline_mode = #tpu.pipeline_mode<synchronous>, transform_indices = @transform_6, window_bounds = array<i64: 2, 1, 256>}, {pipeline_mode = #tpu.pipeline_mode<synchronous>, transform_indices = @transform_7, window_bounds = array<i64: 2, 1, 256>}, {pipeline_mode = #tpu.pipeline_mode<synchronous>, transform_indices = @transform_8, window_bounds = array<i64: 2, 128, 128>}, {pipeline_mode = #tpu.pipeline_mode<synchronous>, transform_indices = @transform_9, window_bounds = array<i64: 128, 256>}, {pipeline_mode = #tpu.pipeline_mode<synchronous>, transform_indices = @transform_10, window_bounds = array<i64: 1, 256>}, {pipeline_mode = #tpu.pipeline_mode<synchronous>, transform_indices = @transform_11, window_bounds = array<i64: 128, 128>}, {pipeline_mode = #tpu.pipeline_mode<synchronous>, transform_indices = @transform_12, window_bounds = array<i64: 1, 128>}, {pipeline_mode = #tpu.pipeline_mode<synchronous>, transform_indices = @transform_13, window_bounds = array<i64: 8, 128>}, {pipeline_mode = #tpu.pipeline_mode<synchronous>, transform_indices = @transform_14, window_bounds = array<i64: 1, 128>}, {transform_indices = @transform_15, window_bounds = array<i64: 16, 256>}]} {
    %c0 = arith.constant 0 : index
    %c0_0 = arith.constant 0 : index
    %0 = vector.load %arg1[%c0, %c0_0] : memref<16x8xbf16, #tpu.memory_space<vmem>>, vector<16x8xbf16>
    %1 = vector.shape_cast %0 : vector<16x8xbf16> to vector<2x8x8xbf16>
    %cst = arith.constant 0.000000e+00 : f32
    %2 = vector.broadcast %cst : f32 to vector<16x512xf32>
    %c0_1 = arith.constant 0 : index
    %c0_2 = arith.constant 0 : index
    %c0_3 = arith.constant 0 : index
    %c0_4 = arith.constant 0 : index
    %3 = vector.load %arg2[%c0_1, %c0_2, %c0_3, %c0_4] : memref<4x2x8x8xbf16, #tpu.memory_space<vmem>>, vector<1x2x8x8xbf16>
    %4 = vector.shape_cast %3 : vector<1x2x8x8xbf16> to vector<2x8x8xbf16>
    %cst_5 = arith.constant dense<0.000000e+00> : vector<2x8x8xf32>
    %5 = tpu.matmul %4, %1, %cst_5 {dimension_numbers = #tpu.dot_dimension_numbers<[2], [1], [1], [2], [0, 0, 0, 1, 1, 2], [0], [0]>} : vector<2x8x8xbf16>, vector<2x8x8xbf16>, vector<2x8x8xf32> -> vector<2x8x8xf32>
    %6 = vector.shape_cast %5 : vector<2x8x8xf32> to vector<16x8xf32>
    %7 = arith.truncf %6 : vector<16x8xf32> to vector<16x8xbf16>
    %c0_6 = arith.constant 0 : index
    %c0_7 = arith.constant 0 : index
    %c0_8 = arith.constant 0 : index
    %8 = vector.load %arg3[%c0_6, %c0_7, %c0_8] : memref<4x8x512xbf16, #tpu.memory_space<vmem>>, vector<1x8x512xbf16>
    %9 = vector.shape_cast %8 : vector<1x8x512xbf16> to vector<8x512xbf16>
    %cst_9 = arith.constant dense<0.000000e+00> : vector<16x512xf32>
    %10 = tpu.matmul %7, %9, %cst_9 {dimension_numbers = #tpu.dot_dimension_numbers<[1], [0], [0], [1], [0, 0, 1, 1], [], []>} : vector<16x8xbf16>, vector<8x512xbf16>, vector<16x512xf32> -> vector<16x512xf32>
    %11 = arith.addf %2, %10 : vector<16x512xf32>
    %c1 = arith.constant 1 : index
    %c0_10 = arith.constant 0 : index
    %c0_11 = arith.constant 0 : index
    %c0_12 = arith.constant 0 : index
    %12 = vector.load %arg2[%c1, %c0_10, %c0_11, %c0_12] : memref<4x2x8x8xbf16, #tpu.memory_space<vmem>>, vector<1x2x8x8xbf16>
    %13 = vector.shape_cast %12 : vector<1x2x8x8xbf16> to vector<2x8x8xbf16>
    %cst_13 = arith.constant dense<0.000000e+00> : vector<2x8x8xf32>
    %14 = tpu.matmul %13, %1, %cst_13 {dimension_numbers = #tpu.dot_dimension_numbers<[2], [1], [1], [2], [0, 0, 0, 1, 1, 2], [0], [0]>} : vector<2x8x8xbf16>, vector<2x8x8xbf16>, vector<2x8x8xf32> -> vector<2x8x8xf32>
    %15 = vector.shape_cast %14 : vector<2x8x8xf32> to vector<16x8xf32>
    %16 = arith.truncf %15 : vector<16x8xf32> to vector<16x8xbf16>
    %c1_14 = arith.constant 1 : index
    %c0_15 = arith.constant 0 : index
    %c0_16 = arith.constant 0 : index
    %17 = vector.load %arg3[%c1_14, %c0_15, %c0_16] : memref<4x8x512xbf16, #tpu.memory_space<vmem>>, vector<1x8x512xbf16>
    %18 = vector.shape_cast %17 : vector<1x8x512xbf16> to vector<8x512xbf16>
    %cst_17 = arith.constant dense<0.000000e+00> : vector<16x512xf32>
    %19 = tpu.matmul %16, %18, %cst_17 {dimension_numbers = #tpu.dot_dimension_numbers<[1], [0], [0], [1], [0, 0, 1, 1], [], []>} : vector<16x8xbf16>, vector<8x512xbf16>, vector<16x512xf32> -> vector<16x512xf32>
    %20 = arith.addf %11, %19 : vector<16x512xf32>
    %c2 = arith.constant 2 : index
    %c0_18 = arith.constant 0 : index
    %c0_19 = arith.constant 0 : index
    %c0_20 = arith.constant 0 : index
    %21 = vector.load %arg2[%c2, %c0_18, %c0_19, %c0_20] : memref<4x2x8x8xbf16, #tpu.memory_space<vmem>>, vector<1x2x8x8xbf16>
    %22 = vector.shape_cast %21 : vector<1x2x8x8xbf16> to vector<2x8x8xbf16>
    %cst_21 = arith.constant dense<0.000000e+00> : vector<2x8x8xf32>
    %23 = tpu.matmul %22, %1, %cst_21 {dimension_numbers = #tpu.dot_dimension_numbers<[2], [1], [1], [2], [0, 0, 0, 1, 1, 2], [0], [0]>} : vector<2x8x8xbf16>, vector<2x8x8xbf16>, vector<2x8x8xf32> -> vector<2x8x8xf32>
    %24 = vector.shape_cast %23 : vector<2x8x8xf32> to vector<16x8xf32>
    %25 = arith.truncf %24 : vector<16x8xf32> to vector<16x8xbf16>
    %c2_22 = arith.constant 2 : index
    %c0_23 = arith.constant 0 : index
    %c0_24 = arith.constant 0 : index
    %26 = vector.load %arg3[%c2_22, %c0_23, %c0_24] : memref<4x8x512xbf16, #tpu.memory_space<vmem>>, vector<1x8x512xbf16>
    %27 = vector.shape_cast %26 : vector<1x8x512xbf16> to vector<8x512xbf16>
    %cst_25 = arith.constant dense<0.000000e+00> : vector<16x512xf32>
    %28 = tpu.matmul %25, %27, %cst_25 {dimension_numbers = #tpu.dot_dimension_numbers<[1], [0], [0], [1], [0, 0, 1, 1], [], []>} : vector<16x8xbf16>, vector<8x512xbf16>, vector<16x512xf32> -> vector<16x512xf32>
    %29 = arith.addf %20, %28 : vector<16x512xf32>
    %c3 = arith.constant 3 : index
    %c0_26 = arith.constant 0 : index
    %c0_27 = arith.constant 0 : index
    %c0_28 = arith.constant 0 : index
    %30 = vector.load %arg2[%c3, %c0_26, %c0_27, %c0_28] : memref<4x2x8x8xbf16, #tpu.memory_space<vmem>>, vector<1x2x8x8xbf16>
    %31 = vector.shape_cast %30 : vector<1x2x8x8xbf16> to vector<2x8x8xbf16>
    %cst_29 = arith.constant dense<0.000000e+00> : vector<2x8x8xf32>
    %32 = tpu.matmul %31, %1, %cst_29 {dimension_numbers = #tpu.dot_dimension_numbers<[2], [1], [1], [2], [0, 0, 0, 1, 1, 2], [0], [0]>} : vector<2x8x8xbf16>, vector<2x8x8xbf16>, vector<2x8x8xf32> -> vector<2x8x8xf32>
    %33 = vector.shape_cast %32 : vector<2x8x8xf32> to vector<16x8xf32>
    %34 = arith.truncf %33 : vector<16x8xf32> to vector<16x8xbf16>
    %c3_30 = arith.constant 3 : index
    %c0_31 = arith.constant 0 : index
    %c0_32 = arith.constant 0 : index
    %35 = vector.load %arg3[%c3_30, %c0_31, %c0_32] : memref<4x8x512xbf16, #tpu.memory_space<vmem>>, vector<1x8x512xbf16>
    %36 = vector.shape_cast %35 : vector<1x8x512xbf16> to vector<8x512xbf16>
    %cst_33 = arith.constant dense<0.000000e+00> : vector<16x512xf32>
    %37 = tpu.matmul %34, %36, %cst_33 {dimension_numbers = #tpu.dot_dimension_numbers<[1], [0], [0], [1], [0, 0, 1, 1], [], []>} : vector<16x8xbf16>, vector<8x512xbf16>, vector<16x512xf32> -> vector<16x512xf32>
    %38 = arith.addf %29, %37 : vector<16x512xf32>
    %c0_34 = arith.constant 0 : index
    %c0_35 = arith.constant 0 : index
    %39 = vector.load %arg4[%c0_34, %c0_35] : memref<1x512xf32, #tpu.memory_space<vmem>>, vector<1x512xf32>
    %40 = vector.broadcast %39 : vector<1x512xf32> to vector<16x512xf32>
    %41 = arith.addf %38, %40 : vector<16x512xf32>
    %42 = vector.extract_strided_slice %41 {offsets = [0, 0], sizes = [16, 128], strides = [1, 1]} : vector<16x512xf32> to vector<16x128xf32>
    %43 = vector.extract_strided_slice %41 {offsets = [0, 128], sizes = [16, 128], strides = [1, 1]} : vector<16x512xf32> to vector<16x128xf32>
    %44 = arith.negf %43 : vector<16x128xf32>
    %45 = math.exp %44 : vector<16x128xf32>
    %cst_36 = arith.constant 1.000000e+00 : f32
    %46 = vector.broadcast %cst_36 : f32 to vector<16x128xf32>
    %47 = arith.addf %46, %45 : vector<16x128xf32>
    %48 = arith.divf %46, %47 : vector<16x128xf32>
    %49 = arith.mulf %42, %48 : vector<16x128xf32>
    %50 = vector.extract_strided_slice %41 {offsets = [0, 256], sizes = [16, 128], strides = [1, 1]} : vector<16x512xf32> to vector<16x128xf32>
    %51 = vector.extract_strided_slice %41 {offsets = [0, 384], sizes = [16, 128], strides = [1, 1]} : vector<16x512xf32> to vector<16x128xf32>
    %52 = arith.negf %51 : vector<16x128xf32>
    %53 = math.exp %52 : vector<16x128xf32>
    %cst_37 = arith.constant 1.000000e+00 : f32
    %54 = vector.broadcast %cst_37 : f32 to vector<16x128xf32>
    %55 = arith.addf %54, %53 : vector<16x128xf32>
    %56 = arith.divf %54, %55 : vector<16x128xf32>
    %57 = arith.mulf %50, %56 : vector<16x128xf32>
    %58 = arith.truncf %49 : vector<16x128xf32> to vector<16x128xbf16>
    %c0_38 = arith.constant 0 : index
    %c0_39 = arith.constant 0 : index
    %c0_40 = arith.constant 0 : index
    %59 = vector.load %arg5[%c0_38, %c0_39, %c0_40] : memref<2x128x256xbf16, #tpu.memory_space<vmem>>, vector<1x128x256xbf16>
    %60 = vector.shape_cast %59 : vector<1x128x256xbf16> to vector<128x256xbf16>
    %cst_41 = arith.constant dense<0.000000e+00> : vector<16x256xf32>
    %61 = tpu.matmul %58, %60, %cst_41 {dimension_numbers = #tpu.dot_dimension_numbers<[1], [0], [0], [1], [0, 0, 1, 1], [], []>} : vector<16x128xbf16>, vector<128x256xbf16>, vector<16x256xf32> -> vector<16x256xf32>
    %c0_42 = arith.constant 0 : index
    %c0_43 = arith.constant 0 : index
    %c0_44 = arith.constant 0 : index
    %62 = vector.load %arg7[%c0_42, %c0_43, %c0_44] : memref<2x1x256xf32, #tpu.memory_space<vmem>>, vector<1x1x256xf32>
    %63 = vector.shape_cast %62 : vector<1x1x256xf32> to vector<1x256xf32>
    %64 = vector.broadcast %63 : vector<1x256xf32> to vector<16x256xf32>
    %65 = arith.addf %61, %64 : vector<16x256xf32>
    %66 = arith.truncf %57 : vector<16x128xf32> to vector<16x128xbf16>
    %c0_45 = arith.constant 0 : index
    %c0_46 = arith.constant 0 : index
    %c0_47 = arith.constant 0 : index
    %67 = vector.load %arg6[%c0_45, %c0_46, %c0_47] : memref<2x128x256xbf16, #tpu.memory_space<vmem>>, vector<1x128x256xbf16>
    %68 = vector.shape_cast %67 : vector<1x128x256xbf16> to vector<128x256xbf16>
    %cst_48 = arith.constant dense<0.000000e+00> : vector<16x256xf32>
    %69 = tpu.matmul %66, %68, %cst_48 {dimension_numbers = #tpu.dot_dimension_numbers<[1], [0], [0], [1], [0, 0, 1, 1], [], []>} : vector<16x128xbf16>, vector<128x256xbf16>, vector<16x256xf32> -> vector<16x256xf32>
    %c0_49 = arith.constant 0 : index
    %c0_50 = arith.constant 0 : index
    %c0_51 = arith.constant 0 : index
    %70 = vector.load %arg8[%c0_49, %c0_50, %c0_51] : memref<2x1x256xf32, #tpu.memory_space<vmem>>, vector<1x1x256xf32>
    %71 = vector.shape_cast %70 : vector<1x1x256xf32> to vector<1x256xf32>
    %72 = vector.broadcast %71 : vector<1x256xf32> to vector<16x256xf32>
    %73 = arith.addf %69, %72 : vector<16x256xf32>
    %74 = vector.extract_strided_slice %65 {offsets = [0, 0], sizes = [16, 128], strides = [1, 1]} : vector<16x256xf32> to vector<16x128xf32>
    %75 = vector.extract_strided_slice %65 {offsets = [0, 128], sizes = [16, 128], strides = [1, 1]} : vector<16x256xf32> to vector<16x128xf32>
    %76 = arith.negf %75 : vector<16x128xf32>
    %77 = math.exp %76 : vector<16x128xf32>
    %cst_52 = arith.constant 1.000000e+00 : f32
    %78 = vector.broadcast %cst_52 : f32 to vector<16x128xf32>
    %79 = arith.addf %78, %77 : vector<16x128xf32>
    %80 = arith.divf %78, %79 : vector<16x128xf32>
    %81 = arith.mulf %74, %80 : vector<16x128xf32>
    %82 = vector.extract_strided_slice %73 {offsets = [0, 0], sizes = [16, 128], strides = [1, 1]} : vector<16x256xf32> to vector<16x128xf32>
    %83 = vector.extract_strided_slice %73 {offsets = [0, 128], sizes = [16, 128], strides = [1, 1]} : vector<16x256xf32> to vector<16x128xf32>
    %84 = arith.negf %83 : vector<16x128xf32>
    %85 = math.exp %84 : vector<16x128xf32>
    %cst_53 = arith.constant 1.000000e+00 : f32
    %86 = vector.broadcast %cst_53 : f32 to vector<16x128xf32>
    %87 = arith.addf %86, %85 : vector<16x128xf32>
    %88 = arith.divf %86, %87 : vector<16x128xf32>
    %89 = arith.mulf %82, %88 : vector<16x128xf32>
    %90 = arith.truncf %81 : vector<16x128xf32> to vector<16x128xbf16>
    %c1_54 = arith.constant 1 : index
    %c0_55 = arith.constant 0 : index
    %c0_56 = arith.constant 0 : index
    %91 = vector.load %arg5[%c1_54, %c0_55, %c0_56] : memref<2x128x256xbf16, #tpu.memory_space<vmem>>, vector<1x128x256xbf16>
    %92 = vector.shape_cast %91 : vector<1x128x256xbf16> to vector<128x256xbf16>
    %cst_57 = arith.constant dense<0.000000e+00> : vector<16x256xf32>
    %93 = tpu.matmul %90, %92, %cst_57 {dimension_numbers = #tpu.dot_dimension_numbers<[1], [0], [0], [1], [0, 0, 1, 1], [], []>} : vector<16x128xbf16>, vector<128x256xbf16>, vector<16x256xf32> -> vector<16x256xf32>
    %c1_58 = arith.constant 1 : index
    %c0_59 = arith.constant 0 : index
    %c0_60 = arith.constant 0 : index
    %94 = vector.load %arg7[%c1_58, %c0_59, %c0_60] : memref<2x1x256xf32, #tpu.memory_space<vmem>>, vector<1x1x256xf32>
    %95 = vector.shape_cast %94 : vector<1x1x256xf32> to vector<1x256xf32>
    %96 = vector.broadcast %95 : vector<1x256xf32> to vector<16x256xf32>
    %97 = arith.addf %93, %96 : vector<16x256xf32>
    %98 = arith.truncf %89 : vector<16x128xf32> to vector<16x128xbf16>
    %c1_61 = arith.constant 1 : index
    %c0_62 = arith.constant 0 : index
    %c0_63 = arith.constant 0 : index
    %99 = vector.load %arg6[%c1_61, %c0_62, %c0_63] : memref<2x128x256xbf16, #tpu.memory_space<vmem>>, vector<1x128x256xbf16>
    %100 = vector.shape_cast %99 : vector<1x128x256xbf16> to vector<128x256xbf16>
    %cst_64 = arith.constant dense<0.000000e+00> : vector<16x256xf32>
    %101 = tpu.matmul %98, %100, %cst_64 {dimension_numbers = #tpu.dot_dimension_numbers<[1], [0], [0], [1], [0, 0, 1, 1], [], []>} : vector<16x128xbf16>, vector<128x256xbf16>, vector<16x256xf32> -> vector<16x256xf32>
    %c1_65 = arith.constant 1 : index
    %c0_66 = arith.constant 0 : index
    %c0_67 = arith.constant 0 : index
    %102 = vector.load %arg8[%c1_65, %c0_66, %c0_67] : memref<2x1x256xf32, #tpu.memory_space<vmem>>, vector<1x1x256xf32>
    %103 = vector.shape_cast %102 : vector<1x1x256xf32> to vector<1x256xf32>
    %104 = vector.broadcast %103 : vector<1x256xf32> to vector<16x256xf32>
    %105 = arith.addf %101, %104 : vector<16x256xf32>
    %106 = vector.extract_strided_slice %97 {offsets = [0, 0], sizes = [16, 128], strides = [1, 1]} : vector<16x256xf32> to vector<16x128xf32>
    %107 = vector.extract_strided_slice %97 {offsets = [0, 128], sizes = [16, 128], strides = [1, 1]} : vector<16x256xf32> to vector<16x128xf32>
    %108 = arith.negf %107 : vector<16x128xf32>
    %109 = math.exp %108 : vector<16x128xf32>
    %cst_68 = arith.constant 1.000000e+00 : f32
    %110 = vector.broadcast %cst_68 : f32 to vector<16x128xf32>
    %111 = arith.addf %110, %109 : vector<16x128xf32>
    %112 = arith.divf %110, %111 : vector<16x128xf32>
    %113 = arith.mulf %106, %112 : vector<16x128xf32>
    %114 = vector.extract_strided_slice %105 {offsets = [0, 0], sizes = [16, 128], strides = [1, 1]} : vector<16x256xf32> to vector<16x128xf32>
    %115 = vector.extract_strided_slice %105 {offsets = [0, 128], sizes = [16, 128], strides = [1, 1]} : vector<16x256xf32> to vector<16x128xf32>
    %116 = arith.negf %115 : vector<16x128xf32>
    %117 = math.exp %116 : vector<16x128xf32>
    %cst_69 = arith.constant 1.000000e+00 : f32
    %118 = vector.broadcast %cst_69 : f32 to vector<16x128xf32>
    %119 = arith.addf %118, %117 : vector<16x128xf32>
    %120 = arith.divf %118, %119 : vector<16x128xf32>
    %121 = arith.mulf %114, %120 : vector<16x128xf32>
    %122 = arith.truncf %113 : vector<16x128xf32> to vector<16x128xbf16>
    %c0_70 = arith.constant 0 : index
    %c0_71 = arith.constant 0 : index
    %c0_72 = arith.constant 0 : index
    %123 = vector.load %arg9[%c0_70, %c0_71, %c0_72] : memref<2x128x128xbf16, #tpu.memory_space<vmem>>, vector<1x128x128xbf16>
    %124 = vector.shape_cast %123 : vector<1x128x128xbf16> to vector<128x128xbf16>
    %cst_73 = arith.constant dense<0.000000e+00> : vector<16x128xf32>
    %125 = tpu.matmul %122, %124, %cst_73 {dimension_numbers = #tpu.dot_dimension_numbers<[1], [0], [0], [1], [0, 0, 1, 1], [], []>} : vector<16x128xbf16>, vector<128x128xbf16>, vector<16x128xf32> -> vector<16x128xf32>
    %126 = arith.truncf %121 : vector<16x128xf32> to vector<16x128xbf16>
    %c1_74 = arith.constant 1 : index
    %c0_75 = arith.constant 0 : index
    %c0_76 = arith.constant 0 : index
    %127 = vector.load %arg9[%c1_74, %c0_75, %c0_76] : memref<2x128x128xbf16, #tpu.memory_space<vmem>>, vector<1x128x128xbf16>
    %128 = vector.shape_cast %127 : vector<1x128x128xbf16> to vector<128x128xbf16>
    %cst_77 = arith.constant dense<0.000000e+00> : vector<16x128xf32>
    %129 = tpu.matmul %126, %128, %cst_77 {dimension_numbers = #tpu.dot_dimension_numbers<[1], [0], [0], [1], [0, 0, 1, 1], [], []>} : vector<16x128xbf16>, vector<128x128xbf16>, vector<16x128xf32> -> vector<16x128xf32>
    %130 = arith.addf %125, %129 : vector<16x128xf32>
    %131 = arith.truncf %130 : vector<16x128xf32> to vector<16x128xbf16>
    %c0_78 = arith.constant 0 : index
    %c0_79 = arith.constant 0 : index
    %132 = vector.load %arg10[%c0_78, %c0_79] : memref<128x256xbf16, #tpu.memory_space<vmem>>, vector<128x256xbf16>
    %cst_80 = arith.constant dense<0.000000e+00> : vector<16x256xf32>
    %133 = tpu.matmul %131, %132, %cst_80 {dimension_numbers = #tpu.dot_dimension_numbers<[1], [0], [0], [1], [0, 0, 1, 1], [], []>} : vector<16x128xbf16>, vector<128x256xbf16>, vector<16x256xf32> -> vector<16x256xf32>
    %c0_81 = arith.constant 0 : index
    %c0_82 = arith.constant 0 : index
    %134 = vector.load %arg11[%c0_81, %c0_82] : memref<1x256xf32, #tpu.memory_space<vmem>>, vector<1x256xf32>
    %135 = vector.broadcast %134 : vector<1x256xf32> to vector<16x256xf32>
    %136 = arith.addf %133, %135 : vector<16x256xf32>
    %137 = vector.extract_strided_slice %136 {offsets = [0, 0], sizes = [16, 128], strides = [1, 1]} : vector<16x256xf32> to vector<16x128xf32>
    %138 = arith.negf %137 : vector<16x128xf32>
    %139 = math.exp %138 : vector<16x128xf32>
    %cst_83 = arith.constant 1.000000e+00 : f32
    %140 = vector.broadcast %cst_83 : f32 to vector<16x128xf32>
    %141 = arith.addf %140, %139 : vector<16x128xf32>
    %142 = arith.divf %140, %141 : vector<16x128xf32>
    %143 = arith.truncf %142 : vector<16x128xf32> to vector<16x128xbf16>
    %c0_84 = arith.constant 0 : index
    %c0_85 = arith.constant 0 : index
    %144 = vector.load %arg12[%c0_84, %c0_85] : memref<128x128xbf16, #tpu.memory_space<vmem>>, vector<128x128xbf16>
    %cst_86 = arith.constant dense<0.000000e+00> : vector<16x128xf32>
    %145 = tpu.matmul %143, %144, %cst_86 {dimension_numbers = #tpu.dot_dimension_numbers<[1], [0], [0], [1], [0, 0, 1, 1], [], []>} : vector<16x128xbf16>, vector<128x128xbf16>, vector<16x128xf32> -> vector<16x128xf32>
    %c0_87 = arith.constant 0 : index
    %c0_88 = arith.constant 0 : index
    %146 = vector.load %arg13[%c0_87, %c0_88] : memref<1x128xf32, #tpu.memory_space<vmem>>, vector<1x128xf32>
    %147 = vector.broadcast %146 : vector<1x128xf32> to vector<16x128xf32>
    %148 = arith.addf %145, %147 : vector<16x128xf32>
    %149 = arith.extf %0 : vector<16x8xbf16> to vector<16x8xf32>
    %c0_89 = arith.constant 0 : index
    %c0_90 = arith.constant 0 : index
    %150 = vector.load %arg14[%c0_89, %c0_90] : memref<8x128xf32, #tpu.memory_space<vmem>>, vector<8x128xf32>
    %cst_91 = arith.constant dense<0.000000e+00> : vector<16x128xf32>
    %151 = tpu.matmul %149, %150, %cst_91 {dimension_numbers = #tpu.dot_dimension_numbers<[1], [0], [0], [1], [0, 0, 1, 1], [], []>} : vector<16x8xf32>, vector<8x128xf32>, vector<16x128xf32> -> vector<16x128xf32>
    %c0_92 = arith.constant 0 : index
    %c0_93 = arith.constant 0 : index
    %152 = vector.load %arg15[%c0_92, %c0_93] : memref<1x128xf32, #tpu.memory_space<vmem>>, vector<1x128xf32>
    %153 = vector.broadcast %152 : vector<1x128xf32> to vector<16x128xf32>
    %154 = arith.addf %151, %153 : vector<16x128xf32>
    %155 = vector.extract_strided_slice %136 {offsets = [0, 128], sizes = [16, 128], strides = [1, 1]} : vector<16x256xf32> to vector<16x128xf32>
    %156 = arith.subf %155, %154 : vector<16x128xf32>
    %157 = arith.negf %156 : vector<16x128xf32>
    %158 = math.exp %157 : vector<16x128xf32>
    %cst_94 = arith.constant 1.000000e+00 : f32
    %159 = vector.broadcast %cst_94 : f32 to vector<16x128xf32>
    %160 = arith.addf %159, %158 : vector<16x128xf32>
    %161 = arith.divf %159, %160 : vector<16x128xf32>
    %162 = arith.truncf %148 : vector<16x128xf32> to vector<16x128xbf16>
    %c0_95 = arith.constant 0 : index
    %c0_96 = arith.constant 0 : index
    %163 = vector.load %arg16[%c0_95, %c0_96] : memref<16x256xbf16, #tpu.memory_space<vmem>>, vector<16x128xbf16>
    tpu.vector_store %arg16[%c0_95, %c0_96], %162 {strides = array<i32>} : memref<16x256xbf16, #tpu.memory_space<vmem>>, vector<16x128xbf16>,
    %164 = arith.truncf %161 : vector<16x128xf32> to vector<16x128xbf16>
    %c0_97 = arith.constant 0 : index
    %c128 = arith.constant 128 : index
    %165 = vector.load %arg16[%c0_97, %c128] : memref<16x256xbf16, #tpu.memory_space<vmem>>, vector<16x128xbf16>
    tpu.vector_store %arg16[%c0_97, %c128], %164 {strides = array<i32>} : memref<16x256xbf16, #tpu.memory_space<vmem>>, vector<16x128xbf16>,
    return
  }
  func.func @transform_0(%arg0: i32) -> (i32, i32) {
    %c0_i32 = arith.constant 0 : i32
    %c0_i32_0 = arith.constant 0 : i32
    return %arg0, %c0_i32 : i32, i32
  }
  func.func @transform_1(%arg0: i32) -> (i32, i32, i32, i32) {
    %c0_i32 = arith.constant 0 : i32
    %c0_i32_0 = arith.constant 0 : i32
    %c0_i32_1 = arith.constant 0 : i32
    %c0_i32_2 = arith.constant 0 : i32
    return %c0_i32, %arg0, %c0_i32_0, %c0_i32_1 : i32, i32, i32, i32
  }
  func.func @transform_2(%arg0: i32) -> (i32, i32, i32) {
    %c0_i32 = arith.constant 0 : i32
    %c0_i32_0 = arith.constant 0 : i32
    %c0_i32_1 = arith.constant 0 : i32
    %c0_i32_2 = arith.constant 0 : i32
    return %c0_i32, %c0_i32_0, %c0_i32_1 : i32, i32, i32
  }
  func.func @transform_3(%arg0: i32) -> (i32, i32) {
    %c0_i32 = arith.constant 0 : i32
    %c0_i32_0 = arith.constant 0 : i32
    %c0_i32_1 = arith.constant 0 : i32
    return %c0_i32, %c0_i32_0 : i32, i32
  }
  func.func @transform_4(%arg0: i32) -> (i32, i32, i32) {
    %c0_i32 = arith.constant 0 : i32
    %c0_i32_0 = arith.constant 0 : i32
    %c0_i32_1 = arith.constant 0 : i32
    %c0_i32_2 = arith.constant 0 : i32
    return %c0_i32, %c0_i32_0, %c0_i32_1 : i32, i32, i32
  }
  func.func @transform_5(%arg0: i32) -> (i32, i32, i32) {
    %c0_i32 = arith.constant 0 : i32
    %c0_i32_0 = arith.constant 0 : i32
    %c0_i32_1 = arith.constant 0 : i32
    %c0_i32_2 = arith.constant 0 : i32
    return %c0_i32, %c0_i32_0, %c0_i32_1 : i32, i32, i32
  }
  func.func @transform_6(%arg0: i32) -> (i32, i32, i32) {
    %c0_i32 = arith.constant 0 : i32
    %c0_i32_0 = arith.constant 0 : i32
    %c0_i32_1 = arith.constant 0 : i32
    %c0_i32_2 = arith.constant 0 : i32
    return %c0_i32, %c0_i32_0, %c0_i32_1 : i32, i32, i32
  }
  func.func @transform_7(%arg0: i32) -> (i32, i32, i32) {
    %c0_i32 = arith.constant 0 : i32
    %c0_i32_0 = arith.constant 0 : i32
    %c0_i32_1 = arith.constant 0 : i32
    %c0_i32_2 = arith.constant 0 : i32
    return %c0_i32, %c0_i32_0, %c0_i32_1 : i32, i32, i32
  }
  func.func @transform_8(%arg0: i32) -> (i32, i32, i32) {
    %c0_i32 = arith.constant 0 : i32
    %c0_i32_0 = arith.constant 0 : i32
    %c0_i32_1 = arith.constant 0 : i32
    %c0_i32_2 = arith.constant 0 : i32
    return %c0_i32, %c0_i32_0, %c0_i32_1 : i32, i32, i32
  }
  func.func @transform_9(%arg0: i32) -> (i32, i32) {
    %c0_i32 = arith.constant 0 : i32
    %c0_i32_0 = arith.constant 0 : i32
    %c0_i32_1 = arith.constant 0 : i32
    return %c0_i32, %c0_i32_0 : i32, i32
  }
  func.func @transform_10(%arg0: i32) -> (i32, i32) {
    %c0_i32 = arith.constant 0 : i32
    %c0_i32_0 = arith.constant 0 : i32
    %c0_i32_1 = arith.constant 0 : i32
    return %c0_i32, %c0_i32_0 : i32, i32
  }
  func.func @transform_11(%arg0: i32) -> (i32, i32) {
    %c0_i32 = arith.constant 0 : i32
    %c0_i32_0 = arith.constant 0 : i32
    %c0_i32_1 = arith.constant 0 : i32
    return %c0_i32, %c0_i32_0 : i32, i32
  }
  func.func @transform_12(%arg0: i32) -> (i32, i32) {
    %c0_i32 = arith.constant 0 : i32
    %c0_i32_0 = arith.constant 0 : i32
    %c0_i32_1 = arith.constant 0 : i32
    return %c0_i32, %c0_i32_0 : i32, i32
  }
  func.func @transform_13(%arg0: i32) -> (i32, i32) {
    %c0_i32 = arith.constant 0 : i32
    %c0_i32_0 = arith.constant 0 : i32
    %c0_i32_1 = arith.constant 0 : i32
    return %c0_i32, %c0_i32_0 : i32, i32
  }
  func.func @transform_14(%arg0: i32) -> (i32, i32) {
    %c0_i32 = arith.constant 0 : i32
    %c0_i32_0 = arith.constant 0 : i32
    %c0_i32_1 = arith.constant 0 : i32
    return %c0_i32, %c0_i32_0 : i32, i32
  }
  func.func @transform_15(%arg0: i32) -> (i32, i32) {
    %c0_i32 = arith.constant 0 : i32
    %c0_i32_0 = arith.constant 0 : i32
    return %arg0, %c0_i32 : i32, i32
  }
}

module attributes {stable_mosaic.version = 11 : i64} {
  func.func @stock_block_kernel(%arg0: i32, %arg1: memref<16x8xbf16, #tpu.memory_space<vmem>>, %arg2: memref<4x2x8x8xbf16, #tpu.memory_space<vmem>>, %arg3: memref<4x8x512xbf16, #tpu.memory_space<vmem>>, %arg4: memref<1x512xf32, #tpu.memory_space<vmem>>, %arg5: memref<2x128x256xbf16, #tpu.memory_space<vmem>>, %arg6: memref<2x128x256xbf16, #tpu.memory_space<vmem>>, %arg7: memref<2x1x256xf32, #tpu.memory_space<vmem>>, %arg8: memref<2x1x256xf32, #tpu.memory_space<vmem>>, %arg9: memref<2x128x128xbf16, #tpu.memory_space<vmem>>, %arg10: memref<128x256xbf16, #tpu.memory_space<vmem>>, %arg11: memref<1x256xf32, #tpu.memory_space<vmem>>, %arg12: memref<128x128xbf16, #tpu.memory_space<vmem>>, %arg13: memref<1x128xf32, #tpu.memory_space<vmem>>, %arg14: memref<8x128xf32, #tpu.memory_space<vmem>>, %arg15: memref<1x128xf32, #tpu.memory_space<vmem>>, %arg16: memref<16x256xbf16, #tpu.memory_space<vmem>>) attributes {dimension_semantics = [#tpu.dimension_semantics<parallel>], iteration_bounds = array<i64: 2>, scalar_prefetch = 0 : i64, scratch_operands = 0 : i64, tpu.core_type = #tpu.core_type<tc>, window_params = [{transform_indices = @transform_0, window_bounds = array<i64: 16, 8>}, {transform_indices = @transform_1, window_bounds = array<i64: 4, 2, 8, 8>}, {pipeline_mode = #tpu.pipeline_mode<synchronous>, transform_indices = @transform_2, window_bounds = array<i64: 4, 8, 512>}, {pipeline_mode = #tpu.pipeline_mode<synchronous>, transform_indices = @transform_3, window_bounds = array<i64: 1, 512>}, {pipeline_mode = #tpu.pipeline_mode<synchronous>, transform_indices = @transform_4, window_bounds = array<i64: 2, 128, 256>}, {pipeline_mode = #tpu.pipeline_mode<synchronous>, transform_indices = @transform_5, window_bounds = array<i64: 2, 128, 256>}, {pipeline_mode = #tpu.pipeline_mode<synchronous>, transform_indices = @transform_6, window_bounds = array<i64: 2, 1, 256>}, {pipeline_mode = #tpu.pipeline_mode<synchronous>, transform_indices = @transform_7, window_bounds = array<i64: 2, 1, 256>}, {pipeline_mode = #tpu.pipeline_mode<synchronous>, transform_indices = @transform_8, window_bounds = array<i64: 2, 128, 128>}, {pipeline_mode = #tpu.pipeline_mode<synchronous>, transform_indices = @transform_9, window_bounds = array<i64: 128, 256>}, {pipeline_mode = #tpu.pipeline_mode<synchronous>, transform_indices = @transform_10, window_bounds = array<i64: 1, 256>}, {pipeline_mode = #tpu.pipeline_mode<synchronous>, transform_indices = @transform_11, window_bounds = array<i64: 128, 128>}, {pipeline_mode = #tpu.pipeline_mode<synchronous>, transform_indices = @transform_12, window_bounds = array<i64: 1, 128>}, {pipeline_mode = #tpu.pipeline_mode<synchronous>, transform_indices = @transform_13, window_bounds = array<i64: 8, 128>}, {pipeline_mode = #tpu.pipeline_mode<synchronous>, transform_indices = @transform_14, window_bounds = array<i64: 1, 128>}, {transform_indices = @transform_15, window_bounds = array<i64: 16, 256>}]} {
    %c0 = arith.constant 0 : index
    %c0_0 = arith.constant 0 : index
    %0 = vector.load %arg1[%c0, %c0_0] : memref<16x8xbf16, #tpu.memory_space<vmem>>, vector<16x8xbf16>
    %1 = vector.shape_cast %0 : vector<16x8xbf16> to vector<2x8x8xbf16>
    %cst = arith.constant 0.000000e+00 : f32
    %2 = vector.broadcast %cst : f32 to vector<16x512xf32>
    %c0_1 = arith.constant 0 : index
    %c0_2 = arith.constant 0 : index
    %c0_3 = arith.constant 0 : index
    %c0_4 = arith.constant 0 : index
    %3 = vector.load %arg2[%c0_1, %c0_2, %c0_3, %c0_4] : memref<4x2x8x8xbf16, #tpu.memory_space<vmem>>, vector<1x2x8x8xbf16>
    %4 = vector.shape_cast %3 : vector<1x2x8x8xbf16> to vector<2x8x8xbf16>
    %cst_5 = arith.constant dense<0.000000e+00> : vector<2x8x8xf32>
    %5 = tpu.matmul %4, %1, %cst_5 {dimension_numbers = #tpu.dot_dimension_numbers<[2], [1], [1], [2], [0, 0, 0, 1, 1, 2], [0], [0]>} : vector<2x8x8xbf16>, vector<2x8x8xbf16>, vector<2x8x8xf32> -> vector<2x8x8xf32>
    %6 = vector.shape_cast %5 : vector<2x8x8xf32> to vector<16x8xf32>
    %7 = arith.truncf %6 : vector<16x8xf32> to vector<16x8xbf16>
    %c0_6 = arith.constant 0 : index
    %c0_7 = arith.constant 0 : index
    %c0_8 = arith.constant 0 : index
    %8 = vector.load %arg3[%c0_6, %c0_7, %c0_8] : memref<4x8x512xbf16, #tpu.memory_space<vmem>>, vector<1x8x512xbf16>
    %9 = vector.shape_cast %8 : vector<1x8x512xbf16> to vector<8x512xbf16>
    %cst_9 = arith.constant dense<0.000000e+00> : vector<16x512xf32>
    %10 = tpu.matmul %7, %9, %cst_9 {dimension_numbers = #tpu.dot_dimension_numbers<[1], [0], [0], [1], [0, 0, 1, 1], [], []>} : vector<16x8xbf16>, vector<8x512xbf16>, vector<16x512xf32> -> vector<16x512xf32>
    %11 = arith.addf %2, %10 : vector<16x512xf32>
    %c1 = arith.constant 1 : index
    %c0_10 = arith.constant 0 : index
    %c0_11 = arith.constant 0 : index
    %c0_12 = arith.constant 0 : index
    %12 = vector.load %arg2[%c1, %c0_10, %c0_11, %c0_12] : memref<4x2x8x8xbf16, #tpu.memory_space<vmem>>, vector<1x2x8x8xbf16>
    %13 = vector.shape_cast %12 : vector<1x2x8x8xbf16> to vector<2x8x8xbf16>
    %cst_13 = arith.constant dense<0.000000e+00> : vector<2x8x8xf32>
    %14 = tpu.matmul %13, %1, %cst_13 {dimension_numbers = #tpu.dot_dimension_numbers<[2], [1], [1], [2], [0, 0, 0, 1, 1, 2], [0], [0]>} : vector<2x8x8xbf16>, vector<2x8x8xbf16>, vector<2x8x8xf32> -> vector<2x8x8xf32>
    %15 = vector.shape_cast %14 : vector<2x8x8xf32> to vector<16x8xf32>
    %16 = arith.truncf %15 : vector<16x8xf32> to vector<16x8xbf16>
    %c1_14 = arith.constant 1 : index
    %c0_15 = arith.constant 0 : index
    %c0_16 = arith.constant 0 : index
    %17 = vector.load %arg3[%c1_14, %c0_15, %c0_16] : memref<4x8x512xbf16, #tpu.memory_space<vmem>>, vector<1x8x512xbf16>
    %18 = vector.shape_cast %17 : vector<1x8x512xbf16> to vector<8x512xbf16>
    %cst_17 = arith.constant dense<0.000000e+00> : vector<16x512xf32>
    %19 = tpu.matmul %16, %18, %cst_17 {dimension_numbers = #tpu.dot_dimension_numbers<[1], [0], [0], [1], [0, 0, 1, 1], [], []>} : vector<16x8xbf16>, vector<8x512xbf16>, vector<16x512xf32> -> vector<16x512xf32>
    %20 = arith.addf %11, %19 : vector<16x512xf32>
    %c2 = arith.constant 2 : index
    %c0_18 = arith.constant 0 : index
    %c0_19 = arith.constant 0 : index
    %c0_20 = arith.constant 0 : index
    %21 = vector.load %arg2[%c2, %c0_18, %c0_19, %c0_20] : memref<4x2x8x8xbf16, #tpu.memory_space<vmem>>, vector<1x2x8x8xbf16>
    %22 = vector.shape_cast %21 : vector<1x2x8x8xbf16> to vector<2x8x8xbf16>
    %cst_21 = arith.constant dense<0.000000e+00> : vector<2x8x8xf32>
    %23 = tpu.matmul %22, %1, %cst_21 {dimension_numbers = #tpu.dot_dimension_numbers<[2], [1], [1], [2], [0, 0, 0, 1, 1, 2], [0], [0]>} : vector<2x8x8xbf16>, vector<2x8x8xbf16>, vector<2x8x8xf32> -> vector<2x8x8xf32>
    %24 = vector.shape_cast %23 : vector<2x8x8xf32> to vector<16x8xf32>
    %25 = arith.truncf %24 : vector<16x8xf32> to vector<16x8xbf16>
    %c2_22 = arith.constant 2 : index
    %c0_23 = arith.constant 0 : index
    %c0_24 = arith.constant 0 : index
    %26 = vector.load %arg3[%c2_22, %c0_23, %c0_24] : memref<4x8x512xbf16, #tpu.memory_space<vmem>>, vector<1x8x512xbf16>
    %27 = vector.shape_cast %26 : vector<1x8x512xbf16> to vector<8x512xbf16>
    %cst_25 = arith.constant dense<0.000000e+00> : vector<16x512xf32>
    %28 = tpu.matmul %25, %27, %cst_25 {dimension_numbers = #tpu.dot_dimension_numbers<[1], [0], [0], [1], [0, 0, 1, 1], [], []>} : vector<16x8xbf16>, vector<8x512xbf16>, vector<16x512xf32> -> vector<16x512xf32>
    %29 = arith.addf %20, %28 : vector<16x512xf32>
    %c3 = arith.constant 3 : index
    %c0_26 = arith.constant 0 : index
    %c0_27 = arith.constant 0 : index
    %c0_28 = arith.constant 0 : index
    %30 = vector.load %arg2[%c3, %c0_26, %c0_27, %c0_28] : memref<4x2x8x8xbf16, #tpu.memory_space<vmem>>, vector<1x2x8x8xbf16>
    %31 = vector.shape_cast %30 : vector<1x2x8x8xbf16> to vector<2x8x8xbf16>
    %cst_29 = arith.constant dense<0.000000e+00> : vector<2x8x8xf32>
    %32 = tpu.matmul %31, %1, %cst_29 {dimension_numbers = #tpu.dot_dimension_numbers<[2], [1], [1], [2], [0, 0, 0, 1, 1, 2], [0], [0]>} : vector<2x8x8xbf16>, vector<2x8x8xbf16>, vector<2x8x8xf32> -> vector<2x8x8xf32>
    %33 = vector.shape_cast %32 : vector<2x8x8xf32> to vector<16x8xf32>
    %34 = arith.truncf %33 : vector<16x8xf32> to vector<16x8xbf16>
    %c3_30 = arith.constant 3 : index
    %c0_31 = arith.constant 0 : index
    %c0_32 = arith.constant 0 : index
    %35 = vector.load %arg3[%c3_30, %c0_31, %c0_32] : memref<4x8x512xbf16, #tpu.memory_space<vmem>>, vector<1x8x512xbf16>
    %36 = vector.shape_cast %35 : vector<1x8x512xbf16> to vector<8x512xbf16>
    %cst_33 = arith.constant dense<0.000000e+00> : vector<16x512xf32>
    %37 = tpu.matmul %34, %36, %cst_33 {dimension_numbers = #tpu.dot_dimension_numbers<[1], [0], [0], [1], [0, 0, 1, 1], [], []>} : vector<16x8xbf16>, vector<8x512xbf16>, vector<16x512xf32> -> vector<16x512xf32>
    %38 = arith.addf %29, %37 : vector<16x512xf32>
    %c0_34 = arith.constant 0 : index
    %c0_35 = arith.constant 0 : index
    %39 = vector.load %arg4[%c0_34, %c0_35] : memref<1x512xf32, #tpu.memory_space<vmem>>, vector<1x512xf32>
    %40 = vector.broadcast %39 : vector<1x512xf32> to vector<16x512xf32>
    %41 = arith.addf %38, %40 : vector<16x512xf32>
    %42 = vector.extract_strided_slice %41 {offsets = [0, 0], sizes = [16, 128], strides = [1, 1]} : vector<16x512xf32> to vector<16x128xf32>
    %43 = vector.extract_strided_slice %41 {offsets = [0, 128], sizes = [16, 128], strides = [1, 1]} : vector<16x512xf32> to vector<16x128xf32>
    %44 = arith.negf %43 : vector<16x128xf32>
    %45 = math.exp %44 : vector<16x128xf32>
    %cst_36 = arith.constant 1.000000e+00 : f32
    %46 = vector.broadcast %cst_36 : f32 to vector<16x128xf32>
    %47 = arith.addf %46, %45 : vector<16x128xf32>
    %48 = arith.divf %46, %47 : vector<16x128xf32>
    %49 = arith.mulf %42, %48 : vector<16x128xf32>
    %50 = vector.extract_strided_slice %41 {offsets = [0, 256], sizes = [16, 128], strides = [1, 1]} : vector<16x512xf32> to vector<16x128xf32>
    %51 = vector.extract_strided_slice %41 {offsets = [0, 384], sizes = [16, 128], strides = [1, 1]} : vector<16x512xf32> to vector<16x128xf32>
    %52 = arith.negf %51 : vector<16x128xf32>
    %53 = math.exp %52 : vector<16x128xf32>
    %cst_37 = arith.constant 1.000000e+00 : f32
    %54 = vector.broadcast %cst_37 : f32 to vector<16x128xf32>
    %55 = arith.addf %54, %53 : vector<16x128xf32>
    %56 = arith.divf %54, %55 : vector<16x128xf32>
    %57 = arith.mulf %50, %56 : vector<16x128xf32>
    %58 = arith.truncf %49 : vector<16x128xf32> to vector<16x128xbf16>
    %c0_38 = arith.constant 0 : index
    %c0_39 = arith.constant 0 : index
    %c0_40 = arith.constant 0 : index
    %59 = vector.load %arg5[%c0_38, %c0_39, %c0_40] : memref<2x128x256xbf16, #tpu.memory_space<vmem>>, vector<1x128x256xbf16>
    %60 = vector.shape_cast %59 : vector<1x128x256xbf16> to vector<128x256xbf16>
    %cst_41 = arith.constant dense<0.000000e+00> : vector<16x256xf32>
    %61 = tpu.matmul %58, %60, %cst_41 {dimension_numbers = #tpu.dot_dimension_numbers<[1], [0], [0], [1], [0, 0, 1, 1], [], []>} : vector<16x128xbf16>, vector<128x256xbf16>, vector<16x256xf32> -> vector<16x256xf32>
    %c0_42 = arith.constant 0 : index
    %c0_43 = arith.constant 0 : index
    %c0_44 = arith.constant 0 : index
    %62 = vector.load %arg7[%c0_42, %c0_43, %c0_44] : memref<2x1x256xf32, #tpu.memory_space<vmem>>, vector<1x1x256xf32>
    %63 = vector.shape_cast %62 : vector<1x1x256xf32> to vector<1x256xf32>
    %64 = vector.broadcast %63 : vector<1x256xf32> to vector<16x256xf32>
    %65 = arith.addf %61, %64 : vector<16x256xf32>
    %66 = arith.truncf %57 : vector<16x128xf32> to vector<16x128xbf16>
    %c0_45 = arith.constant 0 : index
    %c0_46 = arith.constant 0 : index
    %c0_47 = arith.constant 0 : index
    %67 = vector.load %arg6[%c0_45, %c0_46, %c0_47] : memref<2x128x256xbf16, #tpu.memory_space<vmem>>, vector<1x128x256xbf16>
    %68 = vector.shape_cast %67 : vector<1x128x256xbf16> to vector<128x256xbf16>
    %cst_48 = arith.constant dense<0.000000e+00> : vector<16x256xf32>
    %69 = tpu.matmul %66, %68, %cst_48 {dimension_numbers = #tpu.dot_dimension_numbers<[1], [0], [0], [1], [0, 0, 1, 1], [], []>} : vector<16x128xbf16>, vector<128x256xbf16>, vector<16x256xf32> -> vector<16x256xf32>
    %c0_49 = arith.constant 0 : index
    %c0_50 = arith.constant 0 : index
    %c0_51 = arith.constant 0 : index
    %70 = vector.load %arg8[%c0_49, %c0_50, %c0_51] : memref<2x1x256xf32, #tpu.memory_space<vmem>>, vector<1x1x256xf32>
    %71 = vector.shape_cast %70 : vector<1x1x256xf32> to vector<1x256xf32>
    %72 = vector.broadcast %71 : vector<1x256xf32> to vector<16x256xf32>
    %73 = arith.addf %69, %72 : vector<16x256xf32>
    %74 = vector.extract_strided_slice %65 {offsets = [0, 0], sizes = [16, 128], strides = [1, 1]} : vector<16x256xf32> to vector<16x128xf32>
    %75 = vector.extract_strided_slice %65 {offsets = [0, 128], sizes = [16, 128], strides = [1, 1]} : vector<16x256xf32> to vector<16x128xf32>
    %76 = arith.negf %75 : vector<16x128xf32>
    %77 = math.exp %76 : vector<16x128xf32>
    %cst_52 = arith.constant 1.000000e+00 : f32
    %78 = vector.broadcast %cst_52 : f32 to vector<16x128xf32>
    %79 = arith.addf %78, %77 : vector<16x128xf32>
    %80 = arith.divf %78, %79 : vector<16x128xf32>
    %81 = arith.mulf %74, %80 : vector<16x128xf32>
    %82 = vector.extract_strided_slice %73 {offsets = [0, 0], sizes = [16, 128], strides = [1, 1]} : vector<16x256xf32> to vector<16x128xf32>
    %83 = vector.extract_strided_slice %73 {offsets = [0, 128], sizes = [16, 128], strides = [1, 1]} : vector<16x256xf32> to vector<16x128xf32>
    %84 = arith.negf %83 : vector<16x128xf32>
    %85 = math.exp %84 : vector<16x128xf32>
    %cst_53 = arith.constant 1.000000e+00 : f32
    %86 = vector.broadcast %cst_53 : f32 to vector<16x128xf32>
    %87 = arith.addf %86, %85 : vector<16x128xf32>
    %88 = arith.divf %86, %87 : vector<16x128xf32>
    %89 = arith.mulf %82, %88 : vector<16x128xf32>
    %90 = arith.truncf %81 : vector<16x128xf32> to vector<16x128xbf16>
    %c1_54 = arith.constant 1 : index
    %c0_55 = arith.constant 0 : index
    %c0_56 = arith.constant 0 : index
    %91 = vector.load %arg5[%c1_54, %c0_55, %c0_56] : memref<2x128x256xbf16, #tpu.memory_space<vmem>>, vector<1x128x256xbf16>
    %92 = vector.shape_cast %91 : vector<1x128x256xbf16> to vector<128x256xbf16>
    %cst_57 = arith.constant dense<0.000000e+00> : vector<16x256xf32>
    %93 = tpu.matmul %90, %92, %cst_57 {dimension_numbers = #tpu.dot_dimension_numbers<[1], [0], [0], [1], [0, 0, 1, 1], [], []>} : vector<16x128xbf16>, vector<128x256xbf16>, vector<16x256xf32> -> vector<16x256xf32>
    %c1_58 = arith.constant 1 : index
    %c0_59 = arith.constant 0 : index
    %c0_60 = arith.constant 0 : index
    %94 = vector.load %arg7[%c1_58, %c0_59, %c0_60] : memref<2x1x256xf32, #tpu.memory_space<vmem>>, vector<1x1x256xf32>
    %95 = vector.shape_cast %94 : vector<1x1x256xf32> to vector<1x256xf32>
    %96 = vector.broadcast %95 : vector<1x256xf32> to vector<16x256xf32>
    %97 = arith.addf %93, %96 : vector<16x256xf32>
    %98 = arith.truncf %89 : vector<16x128xf32> to vector<16x128xbf16>
    %c1_61 = arith.constant 1 : index
    %c0_62 = arith.constant 0 : index
    %c0_63 = arith.constant 0 : index
    %99 = vector.load %arg6[%c1_61, %c0_62, %c0_63] : memref<2x128x256xbf16, #tpu.memory_space<vmem>>, vector<1x128x256xbf16>
    %100 = vector.shape_cast %99 : vector<1x128x256xbf16> to vector<128x256xbf16>
    %cst_64 = arith.constant dense<0.000000e+00> : vector<16x256xf32>
    %101 = tpu.matmul %98, %100, %cst_64 {dimension_numbers = #tpu.dot_dimension_numbers<[1], [0], [0], [1], [0, 0, 1, 1], [], []>} : vector<16x128xbf16>, vector<128x256xbf16>, vector<16x256xf32> -> vector<16x256xf32>
    %c1_65 = arith.constant 1 : index
    %c0_66 = arith.constant 0 : index
    %c0_67 = arith.constant 0 : index
    %102 = vector.load %arg8[%c1_65, %c0_66, %c0_67] : memref<2x1x256xf32, #tpu.memory_space<vmem>>, vector<1x1x256xf32>
    %103 = vector.shape_cast %102 : vector<1x1x256xf32> to vector<1x256xf32>
    %104 = vector.broadcast %103 : vector<1x256xf32> to vector<16x256xf32>
    %105 = arith.addf %101, %104 : vector<16x256xf32>
    %106 = vector.extract_strided_slice %97 {offsets = [0, 0], sizes = [16, 128], strides = [1, 1]} : vector<16x256xf32> to vector<16x128xf32>
    %107 = vector.extract_strided_slice %97 {offsets = [0, 128], sizes = [16, 128], strides = [1, 1]} : vector<16x256xf32> to vector<16x128xf32>
    %108 = arith.negf %107 : vector<16x128xf32>
    %109 = math.exp %108 : vector<16x128xf32>
    %cst_68 = arith.constant 1.000000e+00 : f32
    %110 = vector.broadcast %cst_68 : f32 to vector<16x128xf32>
    %111 = arith.addf %110, %109 : vector<16x128xf32>
    %112 = arith.divf %110, %111 : vector<16x128xf32>
    %113 = arith.mulf %106, %112 : vector<16x128xf32>
    %114 = vector.extract_strided_slice %105 {offsets = [0, 0], sizes = [16, 128], strides = [1, 1]} : vector<16x256xf32> to vector<16x128xf32>
    %115 = vector.extract_strided_slice %105 {offsets = [0, 128], sizes = [16, 128], strides = [1, 1]} : vector<16x256xf32> to vector<16x128xf32>
    %116 = arith.negf %115 : vector<16x128xf32>
    %117 = math.exp %116 : vector<16x128xf32>
    %cst_69 = arith.constant 1.000000e+00 : f32
    %118 = vector.broadcast %cst_69 : f32 to vector<16x128xf32>
    %119 = arith.addf %118, %117 : vector<16x128xf32>
    %120 = arith.divf %118, %119 : vector<16x128xf32>
    %121 = arith.mulf %114, %120 : vector<16x128xf32>
    %122 = arith.truncf %113 : vector<16x128xf32> to vector<16x128xbf16>
    %c0_70 = arith.constant 0 : index
    %c0_71 = arith.constant 0 : index
    %c0_72 = arith.constant 0 : index
    %123 = vector.load %arg9[%c0_70, %c0_71, %c0_72] : memref<2x128x128xbf16, #tpu.memory_space<vmem>>, vector<1x128x128xbf16>
    %124 = vector.shape_cast %123 : vector<1x128x128xbf16> to vector<128x128xbf16>
    %cst_73 = arith.constant dense<0.000000e+00> : vector<16x128xf32>
    %125 = tpu.matmul %122, %124, %cst_73 {dimension_numbers = #tpu.dot_dimension_numbers<[1], [0], [0], [1], [0, 0, 1, 1], [], []>} : vector<16x128xbf16>, vector<128x128xbf16>, vector<16x128xf32> -> vector<16x128xf32>
    %126 = arith.truncf %121 : vector<16x128xf32> to vector<16x128xbf16>
    %c1_74 = arith.constant 1 : index
    %c0_75 = arith.constant 0 : index
    %c0_76 = arith.constant 0 : index
    %127 = vector.load %arg9[%c1_74, %c0_75, %c0_76] : memref<2x128x128xbf16, #tpu.memory_space<vmem>>, vector<1x128x128xbf16>
    %128 = vector.shape_cast %127 : vector<1x128x128xbf16> to vector<128x128xbf16>
    %cst_77 = arith.constant dense<0.000000e+00> : vector<16x128xf32>
    %129 = tpu.matmul %126, %128, %cst_77 {dimension_numbers = #tpu.dot_dimension_numbers<[1], [0], [0], [1], [0, 0, 1, 1], [], []>} : vector<16x128xbf16>, vector<128x128xbf16>, vector<16x128xf32> -> vector<16x128xf32>
    %130 = arith.addf %125, %129 : vector<16x128xf32>
    %131 = arith.truncf %130 : vector<16x128xf32> to vector<16x128xbf16>
    %c0_78 = arith.constant 0 : index
    %c0_79 = arith.constant 0 : index
    %132 = vector.load %arg10[%c0_78, %c0_79] : memref<128x256xbf16, #tpu.memory_space<vmem>>, vector<128x256xbf16>
    %cst_80 = arith.constant dense<0.000000e+00> : vector<16x256xf32>
    %133 = tpu.matmul %131, %132, %cst_80 {dimension_numbers = #tpu.dot_dimension_numbers<[1], [0], [0], [1], [0, 0, 1, 1], [], []>} : vector<16x128xbf16>, vector<128x256xbf16>, vector<16x256xf32> -> vector<16x256xf32>
    %c0_81 = arith.constant 0 : index
    %c0_82 = arith.constant 0 : index
    %134 = vector.load %arg11[%c0_81, %c0_82] : memref<1x256xf32, #tpu.memory_space<vmem>>, vector<1x256xf32>
    %135 = vector.broadcast %134 : vector<1x256xf32> to vector<16x256xf32>
    %136 = arith.addf %133, %135 : vector<16x256xf32>
    %137 = vector.extract_strided_slice %136 {offsets = [0, 0], sizes = [16, 128], strides = [1, 1]} : vector<16x256xf32> to vector<16x128xf32>
    %138 = arith.negf %137 : vector<16x128xf32>
    %139 = math.exp %138 : vector<16x128xf32>
    %cst_83 = arith.constant 1.000000e+00 : f32
    %140 = vector.broadcast %cst_83 : f32 to vector<16x128xf32>
    %141 = arith.addf %140, %139 : vector<16x128xf32>
    %142 = arith.divf %140, %141 : vector<16x128xf32>
    %143 = arith.truncf %142 : vector<16x128xf32> to vector<16x128xbf16>
    %c0_84 = arith.constant 0 : index
    %c0_85 = arith.constant 0 : index
    %144 = vector.load %arg12[%c0_84, %c0_85] : memref<128x128xbf16, #tpu.memory_space<vmem>>, vector<128x128xbf16>
    %cst_86 = arith.constant dense<0.000000e+00> : vector<16x128xf32>
    %145 = tpu.matmul %143, %144, %cst_86 {dimension_numbers = #tpu.dot_dimension_numbers<[1], [0], [0], [1], [0, 0, 1, 1], [], []>} : vector<16x128xbf16>, vector<128x128xbf16>, vector<16x128xf32> -> vector<16x128xf32>
    %c0_87 = arith.constant 0 : index
    %c0_88 = arith.constant 0 : index
    %146 = vector.load %arg13[%c0_87, %c0_88] : memref<1x128xf32, #tpu.memory_space<vmem>>, vector<1x128xf32>
    %147 = vector.broadcast %146 : vector<1x128xf32> to vector<16x128xf32>
    %148 = arith.addf %145, %147 : vector<16x128xf32>
    %149 = arith.extf %0 : vector<16x8xbf16> to vector<16x8xf32>
    %c0_89 = arith.constant 0 : index
    %c0_90 = arith.constant 0 : index
    %150 = vector.load %arg14[%c0_89, %c0_90] : memref<8x128xf32, #tpu.memory_space<vmem>>, vector<8x128xf32>
    %cst_91 = arith.constant dense<0.000000e+00> : vector<16x128xf32>
    %151 = tpu.matmul %149, %150, %cst_91 {dimension_numbers = #tpu.dot_dimension_numbers<[1], [0], [0], [1], [0, 0, 1, 1], [], []>} : vector<16x8xf32>, vector<8x128xf32>, vector<16x128xf32> -> vector<16x128xf32>
    %c0_92 = arith.constant 0 : index
    %c0_93 = arith.constant 0 : index
    %152 = vector.load %arg15[%c0_92, %c0_93] : memref<1x128xf32, #tpu.memory_space<vmem>>, vector<1x128xf32>
    %153 = vector.broadcast %152 : vector<1x128xf32> to vector<16x128xf32>
    %154 = arith.addf %151, %153 : vector<16x128xf32>
    %155 = vector.extract_strided_slice %136 {offsets = [0, 128], sizes = [16, 128], strides = [1, 1]} : vector<16x256xf32> to vector<16x128xf32>
    %156 = arith.subf %155, %154 : vector<16x128xf32>
    %157 = arith.negf %156 : vector<16x128xf32>
    %158 = math.exp %157 : vector<16x128xf32>
    %cst_94 = arith.constant 1.000000e+00 : f32
    %159 = vector.broadcast %cst_94 : f32 to vector<16x128xf32>
    %160 = arith.addf %159, %158 : vector<16x128xf32>
    %161 = arith.divf %159, %160 : vector<16x128xf32>
    %162 = arith.truncf %148 : vector<16x128xf32> to vector<16x128xbf16>
    %c0_95 = arith.constant 0 : index
    %c0_96 = arith.constant 0 : index
    %163 = vector.load %arg16[%c0_95, %c0_96] : memref<16x256xbf16, #tpu.memory_space<vmem>>, vector<16x128xbf16>
    tpu.vector_store %arg16[%c0_95, %c0_96], %162 {strides = array<i32>} : memref<16x256xbf16, #tpu.memory_space<vmem>>, vector<16x128xbf16>,
    %164 = arith.truncf %161 : vector<16x128xf32> to vector<16x128xbf16>
    %c0_97 = arith.constant 0 : index
    %c128 = arith.constant 128 : index
    %165 = vector.load %arg16[%c0_97, %c128] : memref<16x256xbf16, #tpu.memory_space<vmem>>, vector<16x128xbf16>
    tpu.vector_store %arg16[%c0_97, %c128], %164 {strides = array<i32>} : memref<16x256xbf16, #tpu.memory_space<vmem>>, vector<16x128xbf16>,
    return
  }
  func.func @transform_0(%arg0: i32) -> (i32, i32) {
    %c0_i32 = arith.constant 0 : i32
    %c0_i32_0 = arith.constant 0 : i32
    return %arg0, %c0_i32 : i32, i32
  }
  func.func @transform_1(%arg0: i32) -> (i32, i32, i32, i32) {
    %c0_i32 = arith.constant 0 : i32
    %c0_i32_0 = arith.constant 0 : i32
    %c0_i32_1 = arith.constant 0 : i32
    %c0_i32_2 = arith.constant 0 : i32
    return %c0_i32, %arg0, %c0_i32_0, %c0_i32_1 : i32, i32, i32, i32
  }
  func.func @transform_2(%arg0: i32) -> (i32, i32, i32) {
    %c0_i32 = arith.constant 0 : i32
    %c0_i32_0 = arith.constant 0 : i32
    %c0_i32_1 = arith.constant 0 : i32
    %c0_i32_2 = arith.constant 0 : i32
    return %c0_i32, %c0_i32_0, %c0_i32_1 : i32, i32, i32
  }
  func.func @transform_3(%arg0: i32) -> (i32, i32) {
    %c0_i32 = arith.constant 0 : i32
    %c0_i32_0 = arith.constant 0 : i32
    %c0_i32_1 = arith.constant 0 : i32
    return %c0_i32, %c0_i32_0 : i32, i32
  }
  func.func @transform_4(%arg0: i32) -> (i32, i32, i32) {
    %c0_i32 = arith.constant 0 : i32
    %c0_i32_0 = arith.constant 0 : i32
    %c0_i32_1 = arith.constant 0 : i32
    %c0_i32_2 = arith.constant 0 : i32
    return %c0_i32, %c0_i32_0, %c0_i32_1 : i32, i32, i32
  }
  func.func @transform_5(%arg0: i32) -> (i32, i32, i32) {
    %c0_i32 = arith.constant 0 : i32
    %c0_i32_0 = arith.constant 0 : i32
    %c0_i32_1 = arith.constant 0 : i32
    %c0_i32_2 = arith.constant 0 : i32
    return %c0_i32, %c0_i32_0, %c0_i32_1 : i32, i32, i32
  }
  func.func @transform_6(%arg0: i32) -> (i32, i32, i32) {
    %c0_i32 = arith.constant 0 : i32
    %c0_i32_0 = arith.constant 0 : i32
    %c0_i32_1 = arith.constant 0 : i32
    %c0_i32_2 = arith.constant 0 : i32
    return %c0_i32, %c0_i32_0, %c0_i32_1 : i32, i32, i32
  }
  func.func @transform_7(%arg0: i32) -> (i32, i32, i32) {
    %c0_i32 = arith.constant 0 : i32
    %c0_i32_0 = arith.constant 0 : i32
    %c0_i32_1 = arith.constant 0 : i32
    %c0_i32_2 = arith.constant 0 : i32
    return %c0_i32, %c0_i32_0, %c0_i32_1 : i32, i32, i32
  }
  func.func @transform_8(%arg0: i32) -> (i32, i32, i32) {
    %c0_i32 = arith.constant 0 : i32
    %c0_i32_0 = arith.constant 0 : i32
    %c0_i32_1 = arith.constant 0 : i32
    %c0_i32_2 = arith.constant 0 : i32
    return %c0_i32, %c0_i32_0, %c0_i32_1 : i32, i32, i32
  }
  func.func @transform_9(%arg0: i32) -> (i32, i32) {
    %c0_i32 = arith.constant 0 : i32
    %c0_i32_0 = arith.constant 0 : i32
    %c0_i32_1 = arith.constant 0 : i32
    return %c0_i32, %c0_i32_0 : i32, i32
  }
  func.func @transform_10(%arg0: i32) -> (i32, i32) {
    %c0_i32 = arith.constant 0 : i32
    %c0_i32_0 = arith.constant 0 : i32
    %c0_i32_1 = arith.constant 0 : i32
    return %c0_i32, %c0_i32_0 : i32, i32
  }
  func.func @transform_11(%arg0: i32) -> (i32, i32) {
    %c0_i32 = arith.constant 0 : i32
    %c0_i32_0 = arith.constant 0 : i32
    %c0_i32_1 = arith.constant 0 : i32
    return %c0_i32, %c0_i32_0 : i32, i32
  }
  func.func @transform_12(%arg0: i32) -> (i32, i32) {
    %c0_i32 = arith.constant 0 : i32
    %c0_i32_0 = arith.constant 0 : i32
    %c0_i32_1 = arith.constant 0 : i32
    return %c0_i32, %c0_i32_0 : i32, i32
  }
  func.func @transform_13(%arg0: i32) -> (i32, i32) {
    %c0_i32 = arith.constant 0 : i32
    %c0_i32_0 = arith.constant 0 : i32
    %c0_i32_1 = arith.constant 0 : i32
    return %c0_i32, %c0_i32_0 : i32, i32
  }
  func.func @transform_14(%arg0: i32) -> (i32, i32) {
    %c0_i32 = arith.constant 0 : i32
    %c0_i32_0 = arith.constant 0 : i32
    %c0_i32_1 = arith.constant 0 : i32
    return %c0_i32, %c0_i32_0 : i32, i32
  }
  func.func @transform_15(%arg0: i32) -> (i32, i32) {
    %c0_i32 = arith.constant 0 : i32
    %c0_i32_0 = arith.constant 0 : i32
    return %arg0, %c0_i32 : i32, i32
  }
}

</mosaic_0001>

<llo_original>
// kernel: tpu_custom_call.1
$region0: #{tpu_custom_call.1}
  #allocation0 [shape = 'u32[]', space=smem, size = 0x4, offset = 0x4, fixed_abs, tag = 'smem constant byte address 0x4 - core index']
  #allocation1 [shape = 'u32[72,128]{1,0:T(1,128)}', space=vmem, size = 0x9000, scoped, tag = 'internal scratch']
  #allocation15 [shape = 's32[]', space=sflag, size = 0x4, offset = 0, fixed_abs, tag = 'sflag constant byte address 0x0 - dummy sync flag']
  %s0 = inlined_call_operand.vmem [shape: bf16[32,8], index: 0, kind: input, shape index: {}]
  %s1 = inlined_call_operand.hbm [shape: bf16[4,4,8,8], index: 1, kind: input, shape index: {}]
  %s2 = inlined_call_operand.hbm [shape: bf16[4,8,512], index: 2, kind: input, shape index: {}]
  %s3 = inlined_call_operand.vmem [shape: f32[1,512], index: 3, kind: input, shape index: {}]
  %s4 = inlined_call_operand.hbm [shape: bf16[2,128,256], index: 4, kind: input, shape index: {}]
  %s5 = inlined_call_operand.hbm [shape: bf16[2,128,256], index: 5, kind: input, shape index: {}]
  %s6 = inlined_call_operand.vmem [shape: f32[2,1,256], index: 6, kind: input, shape index: {}]
  %s7 = inlined_call_operand.vmem [shape: f32[2,1,256], index: 7, kind: input, shape index: {}]
  %s8 = inlined_call_operand.hbm [shape: bf16[2,128,128], index: 8, kind: input, shape index: {}]
  %s9 = inlined_call_operand.hbm [shape: bf16[128,256], index: 9, kind: input, shape index: {}]
  %s10 = inlined_call_operand.vmem [shape: f32[1,256], index: 10, kind: input, shape index: {}]
  %s11 = inlined_call_operand.hbm [shape: bf16[128,128], index: 11, kind: input, shape index: {}]
  %s12 = inlined_call_operand.vmem [shape: f32[1,128], index: 12, kind: input, shape index: {}]
  %s13 = inlined_call_operand.vmem [shape: f32[8,128], index: 13, kind: input, shape index: {}]
  %s14 = inlined_call_operand.vmem [shape: f32[1,128], index: 14, kind: input, shape index: {}]
  %s15 = inlined_call_operand.hbm [shape: bf16[32,256], index: 15, kind: output, shape index: {}]
  %s16 = sld [smem:[#allocation0]]
  $region121: #{tpu_custom_call.1} parent=0
    _
  %s18 = ssub.s32 1, %s16
  %s19 = scalar_select 0, %s18, %s16
  $region1: #{tpu_custom_call.1} parent=0
    #allocation2 [shape = 'u8[32768]{0}', space=vmem, size = 0x8000, scoped, tag = 'input window, operand 1']
    #allocation3 [shape = 's32[2]{0}', space=sflag, size = 0x8, scoped, tag = 'scoped memory for tpu_custom_call.1']
    #allocation4 [shape = 's32[2]{0}', space=sflag, size = 0x8, scoped, tag = 'scoped memory for tpu_custom_call.1']
    #allocation5 [shape = 'u8[32768]{0}', space=vmem, size = 0x8000, scoped, tag = 'input window, operand 2, single buffered']
    #allocation6 [shape = 's32[1]{0}', space=sflag, size = 0x4, scoped, tag = 'scoped memory for tpu_custom_call.1']
    #allocation7 [shape = 'u8[131072]{0}', space=vmem, size = 0x20000, scoped, tag = 'input window, operand 4, single buffered']
    #allocation8 [shape = 'u8[131072]{0}', space=vmem, size = 0x20000, scoped, tag = 'input window, operand 5, single buffered']
    #allocation9 [shape = 's32[1]{0}', space=sflag, size = 0x4, scoped, tag = 'scoped memory for tpu_custom_call.1']
    #allocation10 [shape = 'u8[65536]{0}', space=vmem, size = 0x10000, scoped, tag = 'input window, operand 8, single buffered']
    #allocation11 [shape = 'u8[65536]{0}', space=vmem, size = 0x10000, scoped, tag = 'input window, operand 9, single buffered']
    #allocation12 [shape = 's32[1]{0}', space=sflag, size = 0x4, scoped, tag = 'scoped memory for tpu_custom_call.1']
    #allocation13 [shape = 'u8[32768]{0}', space=vmem, size = 0x8000, scoped, tag = 'input window, operand 11, single buffered']
    #allocation14 [shape = 'u8[16384]{0}', space=vmem, size = 0x4000, scoped, tag = 'output window, operand 0']
    %20 = vsyncpa [#allocation3], 0
    %s21 = scalar_lea.sflag [#allocation3], 1
    %22 = vsyncpa %s21, 0
    %23 = vsyncpa [#allocation6], 0
    %24 = vsyncpa [#allocation9], 0
    %25 = vsyncpa [#allocation12], 0
    %26 = vsyncpa [#allocation4], 0
    %s27 = scalar_lea.sflag [#allocation4], 1
    %28 = vsyncpa %s27, 0
    loop: start=0, step=1, limit=4
    $region2: #{tpu_custom_call.1} parent=1 // loop_pre_header
      _
    $region3: #{tpu_custom_call.1} parent=1 // loop_header
      %s30 = sphi 0, %s34
      %p31 = scmp.ge.s32.totalorder %s30, 4
      %s40 = sphi 0, %s42
      %s43 = sphi 0, %s40
      %s44 = sphi 0, %s43
      %s60 = sphi 0, %s44
      %s66 = sphi 0, %s68
      %s69 = sphi 0, %s66
      %s70 = sphi 0, %s69
      %s86 = sphi 0, %s70
      %s90 = sphi 0, %s90
      %s92 = sphi 0, %s90
      %s93 = sphi 0, %s92
      %s107 = sphi 0, %s93
      %s111 = sphi 0, %s111
      %s113 = sphi 0, %s111
      %s114 = sphi 0, %s113
      %s128 = sphi 0, %s114
      %s132 = sphi 0, %s132
      %s134 = sphi 0, %s132
      %s135 = sphi 0, %s134
      %s149 = sphi 0, %s135
      %s153 = sphi 0, %s153
      %s155 = sphi 0, %s153
      %s156 = sphi 0, %s155
      %s170 = sphi 0, %s156
      %s174 = sphi 0, %s174
      %s176 = sphi 0, %s174
      %s177 = sphi 0, %s176
      %s191 = sphi 0, %s177
      %s195 = sphi 0, %s195
      %s197 = sphi 0, %s195
      %s198 = sphi 0, %s197
      %s212 = sphi 0, %s198
      %s216 = sphi 0, %s216
      %s218 = sphi 0, %s216
      %s219 = sphi 0, %s218
      %s233 = sphi 0, %s219
      %s237 = sphi 0, %s237
      %s239 = sphi 0, %s237
      %s240 = sphi 0, %s239
      %s254 = sphi 0, %s240
      %s258 = sphi 0, %s258
      %s260 = sphi 0, %s258
      %s261 = sphi 0, %s260
      %s275 = sphi 0, %s261
      %s279 = sphi 0, %s279
      %s281 = sphi 0, %s279
      %s282 = sphi 0, %s281
      %s296 = sphi 0, %s282
      %s300 = sphi 0, %s300
      %s302 = sphi 0, %s300
      %s303 = sphi 0, %s302
      %s317 = sphi 0, %s303
      %s321 = sphi 0, %s321
      %s323 = sphi 0, %s321
      %s324 = sphi 0, %s323
      %s338 = sphi 0, %s324
      %s342 = sphi 0, %s342
      %s344 = sphi 0, %s342
      %s345 = sphi 0, %s344
      %s359 = sphi 0, %s345
      %s365 = sphi 0, %s367
      %s368 = sphi 0, %s365
      %s369 = sphi 0, %s368
      %s385 = sphi 0, %s369
    $region4: #{tpu_custom_call.1} parent=1 // loop_header_branch
      %33 = sbr.rel (%p31) target = $region8
    $region5: #{tpu_custom_call.1} parent=1 // loop_body
      %s35 = ssub.s32 %s30, 1
      %s36 = ssub.s32 %s30, 2
      %s37 = sadd.s32 %s30, 1
      %s38 = ssub.s32 %s30, %s37
      %p39 = scmp.eq.s32.totalorder %s38, 0
      %s41 = sadd.s32 %s40, 1
      %s42 = scalar_select %p39, %s40, %s41
      %p45 = pneg %p39
      %p46 = scmp.eq.s32.totalorder %s30, 1
      %p47 = por %p45, %p46
      %p48 = scmp.ne.s32.totalorder %s40, %s43
      %p49 = scmp.eq.s32.totalorder %s30, 0
      %p50 = por %p48, %p49
      %p51 = scmp.ne.s32.totalorder %s40, %s43
      %p52 = scmp.eq.s32.totalorder %s35, 1
      %p53 = por %p51, %p52
      %p54 = scmp.ne.s32.totalorder %s43, %s44
      %p55 = scmp.eq.s32.totalorder %s35, 0
      %p56 = por %p54, %p55
      %p57 = scmp.ne.s32.totalorder %s43, %s44
      %p58 = scmp.eq.s32.totalorder %s36, 1
      %p59 = por %p57, %p58
      %p61 = scmp.ne.s32.totalorder %s44, %s60
      %p62 = scmp.eq.s32.totalorder %s36, 0
      %p63 = por %p61, %p62
      %s64 = ssub.s32 %s30, %s37
      %p65 = scmp.eq.s32.totalorder %s64, 0
      %s67 = sadd.s32 %s66, 1
      %s68 = scalar_select %p65, %s66, %s67
      %p71 = pneg %p65
      %p72 = scmp.eq.s32.totalorder %s30, 1
      %p73 = por %p71, %p72
      %p74 = scmp.ne.s32.totalorder %s66, %s69
      %p75 = scmp.eq.s32.totalorder %s30, 0
      %p76 = por %p74, %p75
      %p77 = scmp.ne.s32.totalorder %s66, %s69
      %p78 = scmp.eq.s32.totalorder %s35, 1
      %p79 = por %p77, %p78
      %p80 = scmp.ne.s32.totalorder %s69, %s70
      %p81 = scmp.eq.s32.totalorder %s35, 0
      %p82 = por %p80, %p81
      %p83 = scmp.ne.s32.totalorder %s69, %s70
      %p84 = scmp.eq.s32.totalorder %s36, 1
      %p85 = por %p83, %p84
      %p87 = scmp.ne.s32.totalorder %s70, %s86
      %p88 = scmp.eq.s32.totalorder %s36, 0
      %p89 = por %p87, %p88
      %s91 = sadd.s32 %s90, 1
      %p94 = scmp.eq.s32.totalorder %s30, 1
      %p95 = scmp.ne.s32.totalorder %s90, %s92
      %p96 = scmp.eq.s32.totalorder %s30, 0
      %p97 = por %p95, %p96
      %p98 = scmp.ne.s32.totalorder %s90, %s92
      %p99 = scmp.eq.s32.totalorder %s35, 1
      %p100 = por %p98, %p99
      %p101 = scmp.ne.s32.totalorder %s92, %s93
      %p102 = scmp.eq.s32.totalorder %s35, 0
      %p103 = por %p101, %p102
      %p104 = scmp.ne.s32.totalorder %s92, %s93
      %p105 = scmp.eq.s32.totalorder %s36, 1
      %p106 = por %p104, %p105
      %p108 = scmp.ne.s32.totalorder %s93, %s107
      %p109 = scmp.eq.s32.totalorder %s36, 0
      %p110 = por %p108, %p109
      %s112 = sadd.s32 %s111, 1
      %p115 = scmp.eq.s32.totalorder %s30, 1
      %p116 = scmp.ne.s32.totalorder %s111, %s113
      %p117 = scmp.eq.s32.totalorder %s30, 0
      %p118 = por %p116, %p117
      %p119 = scmp.ne.s32.totalorder %s111, %s113
      %p120 = scmp.eq.s32.totalorder %s35, 1
      %p121 = por %p119, %p120
      %p122 = scmp.ne.s32.totalorder %s113, %s114
      %p123 = scmp.eq.s32.totalorder %s35, 0
      %p124 = por %p122, %p123
      %p125 = scmp.ne.s32.totalorder %s113, %s114
      %p126 = scmp.eq.s32.totalorder %s36, 1
      %p127 = por %p125, %p126
      %p129 = scmp.ne.s32.totalorder %s114, %s128
      %p130 = scmp.eq.s32.totalorder %s36, 0
      %p131 = por %p129, %p130
      %s133 = sadd.s32 %s132, 1
      %p136 = scmp.eq.s32.totalorder %s30, 1
      %p137 = scmp.ne.s32.totalorder %s132, %s134
      %p138 = scmp.eq.s32.totalorder %s30, 0
      %p139 = por %p137, %p138
      %p140 = scmp.ne.s32.totalorder %s132, %s134
      %p141 = scmp.eq.s32.totalorder %s35, 1
      %p142 = por %p140, %p141
      %p143 = scmp.ne.s32.totalorder %s134, %s135
      %p144 = scmp.eq.s32.totalorder %s35, 0
      %p145 = por %p143, %p144
      %p146 = scmp.ne.s32.totalorder %s134, %s135
      %p147 = scmp.eq.s32.totalorder %s36, 1
      %p148 = por %p146, %p147
      %p150 = scmp.ne.s32.totalorder %s135, %s149
      %p151 = scmp.eq.s32.totalorder %s36, 0
      %p152 = por %p150, %p151
      %s154 = sadd.s32 %s153, 1
      %p157 = scmp.eq.s32.totalorder %s30, 1
      %p158 = scmp.ne.s32.totalorder %s153, %s155
      %p159 = scmp.eq.s32.totalorder %s30, 0
      %p160 = por %p158, %p159
      %p161 = scmp.ne.s32.totalorder %s153, %s155
      %p162 = scmp.eq.s32.totalorder %s35, 1
      %p163 = por %p161, %p162
      %p164 = scmp.ne.s32.totalorder %s155, %s156
      %p165 = scmp.eq.s32.totalorder %s35, 0
      %p166 = por %p164, %p165
      %p167 = scmp.ne.s32.totalorder %s155, %s156
      %p168 = scmp.eq.s32.totalorder %s36, 1
      %p169 = por %p167, %p168
      %p171 = scmp.ne.s32.totalorder %s156, %s170
      %p172 = scmp.eq.s32.totalorder %s36, 0
      %p173 = por %p171, %p172
      %s175 = sadd.s32 %s174, 1
      %p178 = scmp.eq.s32.totalorder %s30, 1
      %p179 = scmp.ne.s32.totalorder %s174, %s176
      %p180 = scmp.eq.s32.totalorder %s30, 0
      %p181 = por %p179, %p180
      %p182 = scmp.ne.s32.totalorder %s174, %s176
      %p183 = scmp.eq.s32.totalorder %s35, 1
      %p184 = por %p182, %p183
      %p185 = scmp.ne.s32.totalorder %s176, %s177
      %p186 = scmp.eq.s32.totalorder %s35, 0
      %p187 = por %p185, %p186
      %p188 = scmp.ne.s32.totalorder %s176, %s177
      %p189 = scmp.eq.s32.totalorder %s36, 1
      %p190 = por %p188, %p189
      %p192 = scmp.ne.s32.totalorder %s177, %s191
      %p193 = scmp.eq.s32.totalorder %s36, 0
      %p194 = por %p192, %p193
      %s196 = sadd.s32 %s195, 1
      %p199 = scmp.eq.s32.totalorder %s30, 1
      %p200 = scmp.ne.s32.totalorder %s195, %s197
      %p201 = scmp.eq.s32.totalorder %s30, 0
      %p202 = por %p200, %p201
      %p203 = scmp.ne.s32.totalorder %s195, %s197
      %p204 = scmp.eq.s32.totalorder %s35, 1
      %p205 = por %p203, %p204
      %p206 = scmp.ne.s32.totalorder %s197, %s198
      %p207 = scmp.eq.s32.totalorder %s35, 0
      %p208 = por %p206, %p207
      %p209 = scmp.ne.s32.totalorder %s197, %s198
      %p210 = scmp.eq.s32.totalorder %s36, 1
      %p211 = por %p209, %p210
      %p213 = scmp.ne.s32.totalorder %s198, %s212
      %p214 = scmp.eq.s32.totalorder %s36, 0
      %p215 = por %p213, %p214
      %s217 = sadd.s32 %s216, 1
      %p220 = scmp.eq.s32.totalorder %s30, 1
      %p221 = scmp.ne.s32.totalorder %s216, %s218
      %p222 = scmp.eq.s32.totalorder %s30, 0
      %p223 = por %p221, %p222
      %p224 = scmp.ne.s32.totalorder %s216, %s218
      %p225 = scmp.eq.s32.totalorder %s35, 1
      %p226 = por %p224, %p225
      %p227 = scmp.ne.s32.totalorder %s218, %s219
      %p228 = scmp.eq.s32.totalorder %s35, 0
      %p229 = por %p227, %p228
      %p230 = scmp.ne.s32.totalorder %s218, %s219
      %p231 = scmp.eq.s32.totalorder %s36, 1
      %p232 = por %p230, %p231
      %p234 = scmp.ne.s32.totalorder %s219, %s233
      %p235 = scmp.eq.s32.totalorder %s36, 0
      %p236 = por %p234, %p235
      %s238 = sadd.s32 %s237, 1
      %p241 = scmp.eq.s32.totalorder %s30, 1
      %p242 = scmp.ne.s32.totalorder %s237, %s239
      %p243 = scmp.eq.s32.totalorder %s30, 0
      %p244 = por %p242, %p243
      %p245 = scmp.ne.s32.totalorder %s237, %s239
      %p246 = scmp.eq.s32.totalorder %s35, 1
      %p247 = por %p245, %p246
      %p248 = scmp.ne.s32.totalorder %s239, %s240
      %p249 = scmp.eq.s32.totalorder %s35, 0
      %p250 = por %p248, %p249
      %p251 = scmp.ne.s32.totalorder %s239, %s240
      %p252 = scmp.eq.s32.totalorder %s36, 1
      %p253 = por %p251, %p252
      %p255 = scmp.ne.s32.totalorder %s240, %s254
      %p256 = scmp.eq.s32.totalorder %s36, 0
      %p257 = por %p255, %p256
      %s259 = sadd.s32 %s258, 1
      %p262 = scmp.eq.s32.totalorder %s30, 1
      %p263 = scmp.ne.s32.totalorder %s258, %s260
      %p264 = scmp.eq.s32.totalorder %s30, 0
      %p265 = por %p263, %p264
      %p266 = scmp.ne.s32.totalorder %s258, %s260
      %p267 = scmp.eq.s32.totalorder %s35, 1
      %p268 = por %p266, %p267
      %p269 = scmp.ne.s32.totalorder %s260, %s261
      %p270 = scmp.eq.s32.totalorder %s35, 0
      %p271 = por %p269, %p270
      %p272 = scmp.ne.s32.totalorder %s260, %s261
      %p273 = scmp.eq.s32.totalorder %s36, 1
      %p274 = por %p272, %p273
      %p276 = scmp.ne.s32.totalorder %s261, %s275
      %p277 = scmp.eq.s32.totalorder %s36, 0
      %p278 = por %p276, %p277
      %s280 = sadd.s32 %s279, 1
      %p283 = scmp.eq.s32.totalorder %s30, 1
      %p284 = scmp.ne.s32.totalorder %s279, %s281
      %p285 = scmp.eq.s32.totalorder %s30, 0
      %p286 = por %p284, %p285
      %p287 = scmp.ne.s32.totalorder %s279, %s281
      %p288 = scmp.eq.s32.totalorder %s35, 1
      %p289 = por %p287, %p288
      %p290 = scmp.ne.s32.totalorder %s281, %s282
      %p291 = scmp.eq.s32.totalorder %s35, 0
      %p292 = por %p290, %p291
      %p293 = scmp.ne.s32.totalorder %s281, %s282
      %p294 = scmp.eq.s32.totalorder %s36, 1
      %p295 = por %p293, %p294
      %p297 = scmp.ne.s32.totalorder %s282, %s296
      %p298 = scmp.eq.s32.totalorder %s36, 0
      %p299 = por %p297, %p298
      %s301 = sadd.s32 %s300, 1
      %p304 = scmp.eq.s32.totalorder %s30, 1
      %p305 = scmp.ne.s32.totalorder %s300, %s302
      %p306 = scmp.eq.s32.totalorder %s30, 0
      %p307 = por %p305, %p306
      %p308 = scmp.ne.s32.totalorder %s300, %s302
      %p309 = scmp.eq.s32.totalorder %s35, 1
      %p310 = por %p308, %p309
      %p311 = scmp.ne.s32.totalorder %s302, %s303
      %p312 = scmp.eq.s32.totalorder %s35, 0
      %p313 = por %p311, %p312
      %p314 = scmp.ne.s32.totalorder %s302, %s303
      %p315 = scmp.eq.s32.totalorder %s36, 1
      %p316 = por %p314, %p315
      %p318 = scmp.ne.s32.totalorder %s303, %s317
      %p319 = scmp.eq.s32.totalorder %s36, 0
      %p320 = por %p318, %p319
      %s322 = sadd.s32 %s321, 1
      %p325 = scmp.eq.s32.totalorder %s30, 1
      %p326 = scmp.ne.s32.totalorder %s321, %s323
      %p327 = scmp.eq.s32.totalorder %s30, 0
      %p328 = por %p326, %p327
      %p329 = scmp.ne.s32.totalorder %s321, %s323
      %p330 = scmp.eq.s32.totalorder %s35, 1
      %p331 = por %p329, %p330
      %p332 = scmp.ne.s32.totalorder %s323, %s324
      %p333 = scmp.eq.s32.totalorder %s35, 0
      %p334 = por %p332, %p333
      %p335 = scmp.ne.s32.totalorder %s323, %s324
      %p336 = scmp.eq.s32.totalorder %s36, 1
      %p337 = por %p335, %p336
      %p339 = scmp.ne.s32.totalorder %s324, %s338
      %p340 = scmp.eq.s32.totalorder %s36, 0
      %p341 = por %p339, %p340
      %s343 = sadd.s32 %s342, 1
      %p346 = scmp.eq.s32.totalorder %s30, 1
      %p347 = scmp.ne.s32.totalorder %s342, %s344
      %p348 = scmp.eq.s32.totalorder %s30, 0
      %p349 = por %p347, %p348
      %p350 = scmp.ne.s32.totalorder %s342, %s344
      %p351 = scmp.eq.s32.totalorder %s35, 1
      %p352 = por %p350, %p351
      %p353 = scmp.ne.s32.totalorder %s344, %s345
      %p354 = scmp.eq.s32.totalorder %s35, 0
      %p355 = por %p353, %p354
      %p356 = scmp.ne.s32.totalorder %s344, %s345
      %p357 = scmp.eq.s32.totalorder %s36, 1
      %p358 = por %p356, %p357
      %p360 = scmp.ne.s32.totalorder %s345, %s359
      %p361 = scmp.eq.s32.totalorder %s36, 0
      %p362 = por %p360, %p361
      %s363 = ssub.s32 %s30, %s37
      %p364 = scmp.eq.s32.totalorder %s363, 0
      %s366 = sadd.s32 %s365, 1
      %s367 = scalar_select %p364, %s365, %s366
      %p370 = pneg %p364
      %p371 = scmp.eq.s32.totalorder %s30, 1
      %p372 = por %p370, %p371
      %p373 = scmp.ne.s32.totalorder %s365, %s368
      %p374 = scmp.eq.s32.totalorder %s30, 0
      %p375 = por %p373, %p374
      %p376 = scmp.ne.s32.totalorder %s365, %s368
      %p377 = scmp.eq.s32.totalorder %s35, 1
      %p378 = por %p376, %p377
      %p379 = scmp.ne.s32.totalorder %s368, %s369
      %p380 = scmp.eq.s32.totalorder %s35, 0
      %p381 = por %p379, %p380
      %p382 = scmp.ne.s32.totalorder %s368, %s369
      %p383 = scmp.eq.s32.totalorder %s36, 1
      %p384 = por %p382, %p383
      %p386 = scmp.ne.s32.totalorder %s369, %s385
      %p387 = scmp.eq.s32.totalorder %s36, 0
      %p388 = por %p386, %p387
      %p389 = scmp.le.s32.totalorder 1, %s30
      %p390 = scmp.lt.s32.totalorder %s30, 3
      %p391 = pnand %p389, %p390
      %p392 = pneg %p391
      // Predicated region
      $region9: #{tpu_custom_call.1} parent=5 // pred_check
        _
      $region10: #{tpu_custom_call.1} parent=5 // pred_check_branch
        %394 = sbr.rel (%p391) target = $region12
      $region11: #{tpu_custom_call.1} parent=5 // pred_region
        %s395 = ssub.s32 %s30, 1
        // Predicated region
        $region13: #{tpu_custom_call.1} parent=11 // pred_check
          %p396 = pneg %p103
        $region14: #{tpu_custom_call.1} parent=11 // pred_check_branch
          %398 = sbr.rel (%p396) target = $region16
        $region15: #{tpu_custom_call.1} parent=11 // pred_region
          %400 = vsyncadd [#allocation6], 0
          %s401 = sshll.u32 %s2, 4
          %s402 = int_to_ptr.hbm [resolvable:$true] %s401
          %s403 = sshll.u32 [#allocation5], 4
          %s404 = int_to_ptr.vmem [resolvable:$true] %s403
          %409 = dma.hbm_to_vmem [thread:$0]  %s402, 1024, %s404, [#allocation6], 256, 256, 16
        $region16: #{tpu_custom_call.1} parent=11 // pred_fallthru
          _
        // Predicated region
        $region17: #{tpu_custom_call.1} parent=11 // pred_check
          %p410 = pneg %p124
        $region18: #{tpu_custom_call.1} parent=11 // pred_check_branch
          %412 = sbr.rel (%p410) target = $region20
        $region19: #{tpu_custom_call.1} parent=11 // pred_region
          _
        $region20: #{tpu_custom_call.1} parent=11 // pred_fallthru
          _
        // Predicated region
        $region21: #{tpu_custom_call.1} parent=11 // pred_check
          %p413 = pneg %p145
        $region22: #{tpu_custom_call.1} parent=11 // pred_check_branch
          %415 = sbr.rel (%p413) target = $region24
        $region23: #{tpu_custom_call.1} parent=11 // pred_region
          %417 = vsyncadd [#allocation6], 0
          %s418 = sshll.u32 %s4, 4
          %s419 = int_to_ptr.hbm [resolvable:$true] %s418
          %s420 = sshll.u32 [#allocation7], 4
          %s421 = int_to_ptr.vmem [resolvable:$true] %s420
          %426 = dma.hbm_to_vmem [thread:$0]  %s419, 4096, %s421, [#allocation6], 128, 128, 8
        $region24: #{tpu_custom_call.1} parent=11 // pred_fallthru
          _
        // Predicated region
        $region25: #{tpu_custom_call.1} parent=11 // pred_check
          %p427 = pneg %p166
        $region26: #{tpu_custom_call.1} parent=11 // pred_check_branch
          %429 = sbr.rel (%p427) target = $region28
        $region27: #{tpu_custom_call.1} parent=11 // pred_region
          %431 = vsyncadd [#allocation9], 0
          %s432 = sshll.u32 %s5, 4
          %s433 = int_to_ptr.hbm [resolvable:$true] %s432
          %s434 = sshll.u32 [#allocation8], 4
          %s435 = int_to_ptr.vmem [resolvable:$true] %s434
          %440 = dma.hbm_to_vmem [thread:$0]  %s433, 4096, %s435, [#allocation9], 128, 128, 8
        $region28: #{tpu_custom_call.1} parent=11 // pred_fallthru
          _
        // Predicated region
        $region29: #{tpu_custom_call.1} parent=11 // pred_check
          %p441 = pneg %p187
        $region30: #{tpu_custom_call.1} parent=11 // pred_check_branch
          %443 = sbr.rel (%p441) target = $region32
        $region31: #{tpu_custom_call.1} parent=11 // pred_region
          _
        $region32: #{tpu_custom_call.1} parent=11 // pred_fallthru
          _
        // Predicated region
        $region33: #{tpu_custom_call.1} parent=11 // pred_check
          %p444 = pneg %p208
        $region34: #{tpu_custom_call.1} parent=11 // pred_check_branch
          %446 = sbr.rel (%p444) target = $region36
        $region35: #{tpu_custom_call.1} parent=11 // pred_region
          _
        $region36: #{tpu_custom_call.1} parent=11 // pred_fallthru
          _
        // Predicated region
        $region37: #{tpu_custom_call.1} parent=11 // pred_check
          %p447 = pneg %p229
        $region38: #{tpu_custom_call.1} parent=11 // pred_check_branch
          %449 = sbr.rel (%p447) target = $region40
        $region39: #{tpu_custom_call.1} parent=11 // pred_region
          %451 = vsyncadd [#allocation9], 0
          %s452 = sshll.u32 %s8, 4
          %s453 = int_to_ptr.hbm [resolvable:$true] %s452
          %s454 = sshll.u32 [#allocation10], 4
          %s455 = int_to_ptr.vmem [resolvable:$true] %s454
          %460 = dma.hbm_to_vmem [thread:$0]  %s453, 2048, %s455, [#allocation9], 64, 64, 4
        $region40: #{tpu_custom_call.1} parent=11 // pred_fallthru
          _
        // Predicated region
        $region41: #{tpu_custom_call.1} parent=11 // pred_check
          %p461 = pneg %p250
        $region42: #{tpu_custom_call.1} parent=11 // pred_check_branch
          %463 = sbr.rel (%p461) target = $region44
        $region43: #{tpu_custom_call.1} parent=11 // pred_region
          %465 = vsyncadd [#allocation12], 0
          %s466 = sshll.u32 %s9, 4
          %s467 = int_to_ptr.hbm [resolvable:$true] %s466
          %s468 = sshll.u32 [#allocation11], 4
          %s469 = int_to_ptr.vmem [resolvable:$true] %s468
          %474 = dma.hbm_to_vmem [thread:$0]  %s467, 2048, %s469, [#allocation12], 128, 128, 8
        $region44: #{tpu_custom_call.1} parent=11 // pred_fallthru
          _
        // Predicated region
        $region45: #{tpu_custom_call.1} parent=11 // pred_check
          %p475 = pneg %p271
        $region46: #{tpu_custom_call.1} parent=11 // pred_check_branch
          %477 = sbr.rel (%p475) target = $region48
        $region47: #{tpu_custom_call.1} parent=11 // pred_region
          _
        $region48: #{tpu_custom_call.1} parent=11 // pred_fallthru
          _
        // Predicated region
        $region49: #{tpu_custom_call.1} parent=11 // pred_check
          %p478 = pneg %p292
        $region50: #{tpu_custom_call.1} parent=11 // pred_check_branch
          %480 = sbr.rel (%p478) target = $region52
        $region51: #{tpu_custom_call.1} parent=11 // pred_region
          %482 = vsyncadd [#allocation12], 0
          %s483 = sshll.u32 %s11, 4
          %s484 = int_to_ptr.hbm [resolvable:$true] %s483
          %s485 = sshll.u32 [#allocation13], 4
          %s486 = int_to_ptr.vmem [resolvable:$true] %s485
          %491 = dma.hbm_to_vmem [thread:$0]  %s484, 1024, %s486, [#allocation12], 64, 64, 4
        $region52: #{tpu_custom_call.1} parent=11 // pred_fallthru
          _
        // Predicated region
        $region53: #{tpu_custom_call.1} parent=11 // pred_check
          %p492 = pneg %p313
        $region54: #{tpu_custom_call.1} parent=11 // pred_check_branch
          %494 = sbr.rel (%p492) target = $region56
        $region55: #{tpu_custom_call.1} parent=11 // pred_region
          _
        $region56: #{tpu_custom_call.1} parent=11 // pred_fallthru
          _
        // Predicated region
        $region57: #{tpu_custom_call.1} parent=11 // pred_check
          %p495 = pneg %p334
        $region58: #{tpu_custom_call.1} parent=11 // pred_check_branch
          %497 = sbr.rel (%p495) target = $region60
        $region59: #{tpu_custom_call.1} parent=11 // pred_region
          _
        $region60: #{tpu_custom_call.1} parent=11 // pred_fallthru
          _
        // Predicated region
        $region61: #{tpu_custom_call.1} parent=11 // pred_check
          %p498 = pneg %p355
        $region62: #{tpu_custom_call.1} parent=11 // pred_check_branch
          %500 = sbr.rel (%p498) target = $region64
        $region63: #{tpu_custom_call.1} parent=11 // pred_region
          _
        $region64: #{tpu_custom_call.1} parent=11 // pred_fallthru
          _
      $region12: #{tpu_custom_call.1} parent=5 // pred_fallthru
        _
      %p501 = scmp.lt.s32.totalorder %s30, 2
      // Predicated region
      $region65: #{tpu_custom_call.1} parent=5 // pred_check
        %p502 = pneg %p501
      $region66: #{tpu_custom_call.1} parent=5 // pred_check_branch
        %504 = sbr.rel (%p502) target = $region68
      $region67: #{tpu_custom_call.1} parent=5 // pred_region
        // Predicated region
        $region69: #{tpu_custom_call.1} parent=67 // pred_check
          %p505 = pneg %p50
        $region70: #{tpu_custom_call.1} parent=67 // pred_check_branch
          %507 = sbr.rel (%p505) target = $region72
        $region71: #{tpu_custom_call.1} parent=67 // pred_region
          %s508 = smul.u32 2, %s30
          %p509 = scmp.lt.s32.totalorder %s508, 3
          %s510 = scalar_select %p509, %s508, 3
          %s511 = smul.addr %s510, 4
          %s512 = scalar_lea.vmem %s0, %s511
          %s513 = smul.u32 2, %s30
        $region72: #{tpu_custom_call.1} parent=67 // pred_fallthru
          _
        // Predicated region
        $region73: #{tpu_custom_call.1} parent=67 // pred_check
          %p514 = pneg %p76
        $region74: #{tpu_custom_call.1} parent=67 // pred_check_branch
          %516 = sbr.rel (%p514) target = $region76
        $region75: #{tpu_custom_call.1} parent=67 // pred_region
          #allocation16 [shape = 'u32[6]{0}', space=smem, size = 0x18, scoped, tag = 'DMA stride descriptor']
          %s517 = sand.u32 %s66, 1
          %s518 = scalar_lea.sflag [#allocation3], %s517
          %s519 = sand.u32 %s66, 1
          %s520 = smul.addr %s519, 32
          %s521 = scalar_lea.vmem [#allocation2], %s520
          %s522 = smul.u32 2, %s30
          %524 = vsyncadd %s518, 0
          %s525 = smul.addr %s522, 4
          %s526 = scalar_lea.hbm %s1, %s525
          %s528 = sshll.u32 1, 14
          %s529 = sxor.u32 4294967295, %s528
          %s531 = sld [smem:[#allocation0]]
          %s532 = sadd.s32 2, %s531
          %s534 = sshll.u32 7, 26
          %s535 = sxor.u32 4294967295, %s534
          %s536 = sand.u32 0, %s535
          %s537 = sshll.u32 %s532, 26
          %s538 = sor.u32 %s536, %s537
          %s539 = sshll.u32 %s526, 4
          %s540 = int_to_ptr.hbm [resolvable:$true] %s539
          %s541 = sshll.u32 %s521, 4
          %s542 = int_to_ptr.vmem [resolvable:$true] %s541
          %548 = sst [smem:[#allocation16]] 256
          %s549 = scalar_lea.smem [#allocation16], 1
          %550 = sst [smem:[%s549]] 128
          %s551 = scalar_lea.smem [#allocation16], 2
          %552 = sst [smem:[%s551]] 2
          %s553 = scalar_lea.smem [#allocation16], 3
          %554 = sst [smem:[%s553]] 64
          %s555 = scalar_lea.smem [#allocation16], 4
          %556 = sst [smem:[%s555]] 64
          %s557 = scalar_lea.smem [#allocation16], 5
          %558 = sst [smem:[%s557]] 4
          %560 = dma.general %s540, 512, %s542, %s518, [#allocation15], [#allocation16], %s538, 0
        $region76: #{tpu_custom_call.1} parent=67 // pred_fallthru
          _
      $region68: #{tpu_custom_call.1} parent=5 // pred_fallthru
        _
      %p561 = scmp.le.s32.totalorder 1, %s30
      %p562 = scmp.lt.s32.totalorder %s30, 3
      %p563 = pnand %p561, %p562
      %p564 = pneg %p563
      // Predicated region
      $region77: #{tpu_custom_call.1} parent=5 // pred_check
        _
      $region78: #{tpu_custom_call.1} parent=5 // pred_check_branch
        %566 = sbr.rel (%p563) target = $region80
      $region79: #{tpu_custom_call.1} parent=5 // pred_region
        %s567 = ssub.s32 %s30, 1
        %s568 = sand.u32 %s69, 1
        %s569 = scalar_lea.sflag [#allocation3], %s568
        %s570 = sand.u32 %s69, 1
        %s571 = smul.addr %s570, 32
        %s572 = scalar_lea.vmem [#allocation2], %s571
        // Predicated region
        $region81: #{tpu_custom_call.1} parent=79 // pred_check
          %p573 = pneg %p82
        $region82: #{tpu_custom_call.1} parent=79 // pred_check_branch
          %575 = sbr.rel (%p573) target = $region84
        $region83: #{tpu_custom_call.1} parent=79 // pred_region
          %577 = dma.done %s569, 512
        $region84: #{tpu_custom_call.1} parent=79 // pred_fallthru
          _
        // Predicated region
        $region85: #{tpu_custom_call.1} parent=79 // pred_check
          %p578 = pneg %p103
        $region86: #{tpu_custom_call.1} parent=79 // pred_check_branch
          %580 = sbr.rel (%p578) target = $region88
        $region87: #{tpu_custom_call.1} parent=79 // pred_region
          %582 = dma.done [#allocation6], 1024
        $region88: #{tpu_custom_call.1} parent=79 // pred_fallthru
          _
        // Predicated region
        $region89: #{tpu_custom_call.1} parent=79 // pred_check
          %p583 = pneg %p145
        $region90: #{tpu_custom_call.1} parent=79 // pred_check_branch
          %585 = sbr.rel (%p583) target = $region92
        $region91: #{tpu_custom_call.1} parent=79 // pred_region
          %587 = dma.done [#allocation6], 4096
        $region92: #{tpu_custom_call.1} parent=79 // pred_fallthru
          _
        // Predicated region
        $region93: #{tpu_custom_call.1} parent=79 // pred_check
          %p588 = pneg %p166
        $region94: #{tpu_custom_call.1} parent=79 // pred_check_branch
          %590 = sbr.rel (%p588) target = $region96
        $region95: #{tpu_custom_call.1} parent=79 // pred_region
          %592 = dma.done [#allocation9], 4096
        $region96: #{tpu_custom_call.1} parent=79 // pred_fallthru
          _
        // Predicated region
        $region97: #{tpu_custom_call.1} parent=79 // pred_check
          %p593 = pneg %p229
        $region98: #{tpu_custom_call.1} parent=79 // pred_check_branch
          %595 = sbr.rel (%p593) target = $region100
        $region99: #{tpu_custom_call.1} parent=79 // pred_region
          %597 = dma.done [#allocation9], 2048
        $region100: #{tpu_custom_call.1} parent=79 // pred_fallthru
          _
        // Predicated region
        $region101: #{tpu_custom_call.1} parent=79 // pred_check
          %p598 = pneg %p250
        $region102: #{tpu_custom_call.1} parent=79 // pred_check_branch
          %600 = sbr.rel (%p598) target = $region104
        $region103: #{tpu_custom_call.1} parent=79 // pred_region
          %602 = dma.done [#allocation12], 2048
        $region104: #{tpu_custom_call.1} parent=79 // pred_fallthru
          _
        // Predicated region
        $region105: #{tpu_custom_call.1} parent=79 // pred_check
          %p603 = pneg %p292
        $region106: #{tpu_custom_call.1} parent=79 // pred_check_branch
          %605 = sbr.rel (%p603) target = $region108
        $region107: #{tpu_custom_call.1} parent=79 // pred_region
          %607 = dma.done [#allocation12], 1024
        $region108: #{tpu_custom_call.1} parent=79 // pred_fallthru
          _
        %s608 = smul.u32 2, %s35
        %p609 = scmp.lt.s32.totalorder %s608, 3
        %s610 = scalar_select %p609, %s608, 3
        %s611 = smul.addr %s610, 4
        %s612 = scalar_lea.vmem %s0, %s611
        %p613 = pneg %p56
        %p614 = pneg %p53
        %s615 = sand.u32 %s69, 1
        %s616 = scalar_lea.sflag [#allocation3], %s615
        %s617 = sand.u32 %s69, 1
        %s618 = smul.addr %s617, 32
        %s619 = scalar_lea.vmem [#allocation2], %s618
        %p620 = pneg %p82
        %p621 = pneg %p79
        %p622 = pneg %p103
        %p623 = pneg %p100
        %p624 = pneg %p124
        %p625 = pneg %p121
        %p626 = pneg %p145
        %p627 = pneg %p142
        %p628 = pneg %p166
        %p629 = pneg %p163
        %p630 = pneg %p187
        %p631 = pneg %p184
        %p632 = pneg %p208
        %p633 = pneg %p205
        %p634 = pneg %p229
        %p635 = pneg %p226
        %p636 = pneg %p250
        %p637 = pneg %p247
        %p638 = pneg %p271
        %p639 = pneg %p268
        %p640 = pneg %p292
        %p641 = pneg %p289
        %p642 = pneg %p313
        %p643 = pneg %p310
        %p644 = pneg %p334
        %p645 = pneg %p331
        %p646 = pneg %p355
        %p647 = pneg %p352
        %p648 = pneg %p381
        %p649 = pneg %p378
        %s650 = sand.u32 %s368, 1
        %s651 = scalar_lea.sflag [#allocation4], %s650
        %s652 = sand.u32 %s368, 1
        %s653 = smul.addr %s652, 16
        %s654 = scalar_lea.vmem [#allocation14], %s653
        %s655 = smul.u32 2, %s35
        %p656 = scmp.lt.s32.totalorder %s655, 3
        %s657 = scalar_select %p656, %s655, 3
        %s658 = smul.addr %s657, 4
        %s659 = scalar_lea.vmem %s0, %s658
        %s660 = smul.u32 2, %s35
        %s661 = smul.u32 2, %s35
        %s662 = smul.u32 2, %s35
        %v664 = vld [vmem:[%s659] sm:$0xf]
        %v665 = vld [vmem:[%s659 + $0x4] sm:$0xf]
        %v666 = vld [vmem:[%s572] sm:$0xf]
        %v667 = vld [vmem:[%s572 + $0x4] sm:$0xf]
        %vm668 = vcmask 64512
        %v670 = vsel %vm668, %v666, 0
        %vm672 = vcmask 1043456
        %v674 = vsel %vm672, %v664, 0
        %676 = vmatpush.bf16.msra.mxu0 0
        %677 = vmatpush.bf16.msra.mxu0 0
        %678 = vmatpush.bf16.msra.mxu0 0
        %679 = vmatpush.bf16.msra.mxu0 0
        %680 = vmatpush.bf16.msra.mxu0 0
        %681 = vmatpush.bf16.msra.mxu0 0
        %682 = vmatpush.bf16.msra.mxu0 0
        %683 = vmatpush.bf16.msra.mxu0 %v674
        %684 = vmatmul.bf16.gmra.mxu0 %v670
        %v685 = vpop.f32.mrf.mxu0
        %v686 = vadd.f32 0.0, %v685
        %v687 = vpop.f32.mrf.mxu0
        %688 = vdwg.mxu0
        %v690 = vsel %vm668, %v667, 0
        %v693 = vsel %vm672, %v665, 0
        %695 = vmatpush.bf16.msra.mxu0 0
        %696 = vmatpush.bf16.msra.mxu0 0
        %697 = vmatpush.bf16.msra.mxu0 0
        %698 = vmatpush.bf16.msra.mxu0 0
        %699 = vmatpush.bf16.msra.mxu0 0
        %700 = vmatpush.bf16.msra.mxu0 0
        %701 = vmatpush.bf16.msra.mxu0 0
        %702 = vmatpush.bf16.msra.mxu0 %v693
        %703 = vmatmul.bf16.gmra.mxu0 %v690
        %v704 = vpop.f32.mrf.mxu0
        %v705 = vadd.f32 0.0, %v704
        %v706 = vpop.f32.mrf.mxu0
        %707 = vdwg.mxu0
        %v708 = vpack.c.bf16 %v705, %v686
        %v709 = vld [vmem:[#allocation5] sm:$0xff]
        %v710 = vld [vmem:[#allocation5 + $0x8] sm:$0xff]
        %s711 = scalar_lea.vmem %s572, 8 [#allocation2]
        %v712 = vld [vmem:[%s711] sm:$0xf]
        %v713 = vld [vmem:[%s711 + $0x4] sm:$0xf]
        %v715 = vsel %vm668, %v712, 0
        %717 = vmatpush.bf16.msra.mxu0 0
        %718 = vmatpush.bf16.msra.mxu0 0
        %719 = vmatpush.bf16.msra.mxu0 0
        %720 = vmatpush.bf16.msra.mxu0 0
        %721 = vmatpush.bf16.msra.mxu0 0
        %722 = vmatpush.bf16.msra.mxu0 0
        %723 = vmatpush.bf16.msra.mxu0 0
        %724 = vmatpush.bf16.msra.mxu0 %v674
        %725 = vmatmul.bf16.gmra.mxu0 %v715
        %v726 = vpop.f32.mrf.mxu0
        %v727 = vadd.f32 0.0, %v726
        %v728 = vpop.f32.mrf.mxu0
        %729 = vdwg.mxu0
        %v731 = vsel %vm668, %v713, 0
        %733 = vmatpush.bf16.msra.mxu0 0
        %734 = vmatpush.bf16.msra.mxu0 0
        %735 = vmatpush.bf16.msra.mxu0 0
        %736 = vmatpush.bf16.msra.mxu0 0
        %737 = vmatpush.bf16.msra.mxu0 0
        %738 = vmatpush.bf16.msra.mxu0 0
        %739 = vmatpush.bf16.msra.mxu0 0
        %740 = vmatpush.bf16.msra.mxu0 %v693
        %741 = vmatmul.bf16.gmra.mxu0 %v731
        %v742 = vpop.f32.mrf.mxu0
        %v743 = vadd.f32 0.0, %v742
        %v744 = vpop.f32.mrf.mxu0
        %745 = vdwg.mxu0
        %v746 = vpack.c.bf16 %v743, %v727
        %s747 = scalar_lea.vmem [#allocation5], 16
        %v748 = vld [vmem:[%s747] sm:$0xff]
        %v749 = vld [vmem:[%s747 + $0x8] sm:$0xff]
        %v752 = vunpack.c.l.b16 %v748
        %v753 = vunpack.c.h.b16 %v748
        %v754 = vunpack.c.l.b16 %v749
        %v755 = vunpack.c.h.b16 %v749
        %v756 = vpack.c.b16 %v752, %v752
        %v757 = vpack.c.b16 %v753, %v753
        %v758 = vpack.c.b16 %v754, %v754
        %v759 = vpack.c.b16 %v755, %v755
        %v761 = vsel %vm668, %v746, 0
        %v764 = vsel %vm672, %v756, 0
        %v767 = vsel %vm672, %v757, 0
        %v770 = vsel %vm672, %v758, 0
        %v773 = vsel %vm672, %v759, 0
        %775 = vmatpush.bf16.msra.mxu0 0
        %776 = vmatpush.bf16.msra.mxu0 0
        %777 = vmatpush.bf16.msra.mxu0 0
        %778 = vmatpush.bf16.msra.mxu0 0
        %779 = vmatpush.bf16.msra.mxu0 0
        %780 = vmatpush.bf16.msra.mxu0 0
        %781 = vmatpush.bf16.msra.mxu0 0
        %782 = vmatpush.bf16.msra.mxu0 %v764
        %783 = vmatmul.bf16.gmra.mxu0 %v761
        %v784 = vpop.f32.mrf.mxu0
        %v785 = vadd.f32 0.0, %v784
        %v786 = vpop.f32.mrf.mxu0
        %v787 = vadd.f32 0.0, %v786
        %788 = vdwg.mxu0
        %789 = vmatpush.bf16.msra.mxu0 0
        %790 = vmatpush.bf16.msra.mxu0 0
        %791 = vmatpush.bf16.msra.mxu0 0
        %792 = vmatpush.bf16.msra.mxu0 0
        %793 = vmatpush.bf16.msra.mxu0 0
        %794 = vmatpush.bf16.msra.mxu0 0
        %795 = vmatpush.bf16.msra.mxu0 0
        %796 = vmatpush.bf16.msra.mxu0 %v767
        %797 = vmatmul.bf16.gmra.mxu0 %v761
        %v798 = vpop.f32.mrf.mxu0
        %v799 = vadd.f32 0.0, %v798
        %v800 = vpop.f32.mrf.mxu0
        %v801 = vadd.f32 0.0, %v800
        %802 = vdwg.mxu0
        %803 = vmatpush.bf16.msra.mxu0 0
        %804 = vmatpush.bf16.msra.mxu0 0
        %805 = vmatpush.bf16.msra.mxu0 0
        %806 = vmatpush.bf16.msra.mxu0 0
        %807 = vmatpush.bf16.msra.mxu0 0
        %808 = vmatpush.bf16.msra.mxu0 0
        %809 = vmatpush.bf16.msra.mxu0 0
        %810 = vmatpush.bf16.msra.mxu0 %v770
        %811 = vmatmul.bf16.gmra.mxu0 %v761
        %v812 = vpop.f32.mrf.mxu0
        %v813 = vadd.f32 0.0, %v812
        %v814 = vpop.f32.mrf.mxu0
        %v815 = vadd.f32 0.0, %v814
        %816 = vdwg.mxu0
        %817 = vmatpush.bf16.msra.mxu0 0
        %818 = vmatpush.bf16.msra.mxu0 0
        %819 = vmatpush.bf16.msra.mxu0 0
        %820 = vmatpush.bf16.msra.mxu0 0
        %821 = vmatpush.bf16.msra.mxu0 0
        %822 = vmatpush.bf16.msra.mxu0 0
        %823 = vmatpush.bf16.msra.mxu0 0
        %824 = vmatpush.bf16.msra.mxu0 %v773
        %825 = vmatmul.bf16.gmra.mxu0 %v761
        %v826 = vpop.f32.mrf.mxu0
        %v827 = vadd.f32 0.0, %v826
        %v828 = vpop.f32.mrf.mxu0
        %v829 = vadd.f32 0.0, %v828
        %830 = vdwg.mxu0
        %v833 = vunpack.c.l.b16 %v709
        %v834 = vunpack.c.h.b16 %v709
        %v835 = vunpack.c.l.b16 %v710
        %v836 = vunpack.c.h.b16 %v710
        %v837 = vpack.c.b16 %v833, %v833
        %v838 = vpack.c.b16 %v834, %v834
        %v839 = vpack.c.b16 %v835, %v835
        %v840 = vpack.c.b16 %v836, %v836
        %v842 = vsel %vm668, %v708, 0
        %v845 = vsel %vm672, %v837, 0
        %v848 = vsel %vm672, %v838, 0
        %v851 = vsel %vm672, %v839, 0
        %v854 = vsel %vm672, %v840, 0
        %856 = vmatpush.bf16.msra.mxu0 0
        %857 = vmatpush.bf16.msra.mxu0 0
        %858 = vmatpush.bf16.msra.mxu0 0
        %859 = vmatpush.bf16.msra.mxu0 0
        %860 = vmatpush.bf16.msra.mxu0 0
        %861 = vmatpush.bf16.msra.mxu0 0
        %862 = vmatpush.bf16.msra.mxu0 0
        %863 = vmatpush.bf16.msra.mxu0 %v845
        %864 = vmatmul.bf16.gmra.mxu0 %v842
        %v865 = vpop.f32.mrf.mxu0
        %v866 = vadd.f32 %v785, %v865
        %v867 = vpop.f32.mrf.mxu0
        %v868 = vadd.f32 %v787, %v867
        %869 = vdwg.mxu0
        %870 = vmatpush.bf16.msra.mxu0 0
        %871 = vmatpush.bf16.msra.mxu0 0
        %872 = vmatpush.bf16.msra.mxu0 0
        %873 = vmatpush.bf16.msra.mxu0 0
        %874 = vmatpush.bf16.msra.mxu0 0
        %875 = vmatpush.bf16.msra.mxu0 0
        %876 = vmatpush.bf16.msra.mxu0 0
        %877 = vmatpush.bf16.msra.mxu0 %v848
        %878 = vmatmul.bf16.gmra.mxu0 %v842
        %v879 = vpop.f32.mrf.mxu0
        %v880 = vadd.f32 %v799, %v879
        %v881 = vpop.f32.mrf.mxu0
        %v882 = vadd.f32 %v801, %v881
        %883 = vdwg.mxu0
        %884 = vmatpush.bf16.msra.mxu0 0
        %885 = vmatpush.bf16.msra.mxu0 0
        %886 = vmatpush.bf16.msra.mxu0 0
        %887 = vmatpush.bf16.msra.mxu0 0
        %888 = vmatpush.bf16.msra.mxu0 0
        %889 = vmatpush.bf16.msra.mxu0 0
        %890 = vmatpush.bf16.msra.mxu0 0
        %891 = vmatpush.bf16.msra.mxu0 %v851
        %892 = vmatmul.bf16.gmra.mxu0 %v842
        %v893 = vpop.f32.mrf.mxu0
        %v894 = vadd.f32 %v813, %v893
        %v895 = vpop.f32.mrf.mxu0
        %v896 = vadd.f32 %v815, %v895
        %897 = vdwg.mxu0
        %898 = vmatpush.bf16.msra.mxu0 0
        %899 = vmatpush.bf16.msra.mxu0 0
        %900 = vmatpush.bf16.msra.mxu0 0
        %901 = vmatpush.bf16.msra.mxu0 0
        %902 = vmatpush.bf16.msra.mxu0 0
        %903 = vmatpush.bf16.msra.mxu0 0
        %904 = vmatpush.bf16.msra.mxu0 0
        %905 = vmatpush.bf16.msra.mxu0 %v854
        %906 = vmatmul.bf16.gmra.mxu0 %v842
        %v907 = vpop.f32.mrf.mxu0
        %v908 = vadd.f32 %v827, %v907
        %v909 = vpop.f32.mrf.mxu0
        %v910 = vadd.f32 %v829, %v909
        %911 = vdwg.mxu0
        %s912 = scalar_lea.vmem %s572, 16 [#allocation2]
        %v913 = vld [vmem:[%s912] sm:$0xf]
        %v914 = vld [vmem:[%s912 + $0x4] sm:$0xf]
        %v916 = vsel %vm668, %v913, 0
        %918 = vmatpush.bf16.msra.mxu0 0
        %919 = vmatpush.bf16.msra.mxu0 0
        %920 = vmatpush.bf16.msra.mxu0 0
        %921 = vmatpush.bf16.msra.mxu0 0
        %922 = vmatpush.bf16.msra.mxu0 0
        %923 = vmatpush.bf16.msra.mxu0 0
        %924 = vmatpush.bf16.msra.mxu0 0
        %925 = vmatpush.bf16.msra.mxu0 %v674
        %926 = vmatmul.bf16.gmra.mxu0 %v916
        %v927 = vpop.f32.mrf.mxu0
        %v928 = vadd.f32 0.0, %v927
        %v929 = vpop.f32.mrf.mxu0
        %930 = vdwg.mxu0
        %v932 = vsel %vm668, %v914, 0
        %934 = vmatpush.bf16.msra.mxu0 0
        %935 = vmatpush.bf16.msra.mxu0 0
        %936 = vmatpush.bf16.msra.mxu0 0
        %937 = vmatpush.bf16.msra.mxu0 0
        %938 = vmatpush.bf16.msra.mxu0 0
        %939 = vmatpush.bf16.msra.mxu0 0
        %940 = vmatpush.bf16.msra.mxu0 0
        %941 = vmatpush.bf16.msra.mxu0 %v693
        %942 = vmatmul.bf16.gmra.mxu0 %v932
        %v943 = vpop.f32.mrf.mxu0
        %v944 = vadd.f32 0.0, %v943
        %v945 = vpop.f32.mrf.mxu0
        %946 = vdwg.mxu0
        %v947 = vpack.c.bf16 %v944, %v928
        %s948 = scalar_lea.vmem [#allocation5], 32
        %v949 = vld [vmem:[%s948] sm:$0xff]
        %v950 = vld [vmem:[%s948 + $0x8] sm:$0xff]
        %v953 = vunpack.c.l.b16 %v949
        %v954 = vunpack.c.h.b16 %v949
        %v955 = vunpack.c.l.b16 %v950
        %v956 = vunpack.c.h.b16 %v950
        %v957 = vpack.c.b16 %v953, %v953
        %v958 = vpack.c.b16 %v954, %v954
        %v959 = vpack.c.b16 %v955, %v955
        %v960 = vpack.c.b16 %v956, %v956
        %v962 = vsel %vm668, %v947, 0
        %v965 = vsel %vm672, %v957, 0
        %v968 = vsel %vm672, %v958, 0
        %v971 = vsel %vm672, %v959, 0
        %v974 = vsel %vm672, %v960, 0
        %976 = vmatpush.bf16.msra.mxu0 0
        %977 = vmatpush.bf16.msra.mxu0 0
        %978 = vmatpush.bf16.msra.mxu0 0
        %979 = vmatpush.bf16.msra.mxu0 0
        %980 = vmatpush.bf16.msra.mxu0 0
        %981 = vmatpush.bf16.msra.mxu0 0
        %982 = vmatpush.bf16.msra.mxu0 0
        %983 = vmatpush.bf16.msra.mxu0 %v965
        %984 = vmatmul.bf16.gmra.mxu0 %v962
        %v985 = vpop.f32.mrf.mxu0
        %v986 = vadd.f32 0.0, %v985
        %v987 = vpop.f32.mrf.mxu0
        %v988 = vadd.f32 0.0, %v987
        %989 = vdwg.mxu0
        %990 = vmatpush.bf16.msra.mxu0 0
        %991 = vmatpush.bf16.msra.mxu0 0
        %992 = vmatpush.bf16.msra.mxu0 0
        %993 = vmatpush.bf16.msra.mxu0 0
        %994 = vmatpush.bf16.msra.mxu0 0
        %995 = vmatpush.bf16.msra.mxu0 0
        %996 = vmatpush.bf16.msra.mxu0 0
        %997 = vmatpush.bf16.msra.mxu0 %v968
        %998 = vmatmul.bf16.gmra.mxu0 %v962
        %v999 = vpop.f32.mrf.mxu0
        %v1000 = vadd.f32 0.0, %v999
        %v1001 = vpop.f32.mrf.mxu0
        %v1002 = vadd.f32 0.0, %v1001
        %1003 = vdwg.mxu0
        %1004 = vmatpush.bf16.msra.mxu0 0
        %1005 = vmatpush.bf16.msra.mxu0 0
        %1006 = vmatpush.bf16.msra.mxu0 0
        %1007 = vmatpush.bf16.msra.mxu0 0
        %1008 = vmatpush.bf16.msra.mxu0 0
        %1009 = vmatpush.bf16.msra.mxu0 0
        %1010 = vmatpush.bf16.msra.mxu0 0
        %1011 = vmatpush.bf16.msra.mxu0 %v971
        %1012 = vmatmul.bf16.gmra.mxu0 %v962
        %v1013 = vpop.f32.mrf.mxu0
        %v1014 = vadd.f32 0.0, %v1013
        %v1015 = vpop.f32.mrf.mxu0
        %v1016 = vadd.f32 0.0, %v1015
        %1017 = vdwg.mxu0
        %1018 = vmatpush.bf16.msra.mxu0 0
        %1019 = vmatpush.bf16.msra.mxu0 0
        %1020 = vmatpush.bf16.msra.mxu0 0
        %1021 = vmatpush.bf16.msra.mxu0 0
        %1022 = vmatpush.bf16.msra.mxu0 0
        %1023 = vmatpush.bf16.msra.mxu0 0
        %1024 = vmatpush.bf16.msra.mxu0 0
        %1025 = vmatpush.bf16.msra.mxu0 %v974
        %1026 = vmatmul.bf16.gmra.mxu0 %v962
        %v1027 = vpop.f32.mrf.mxu0
        %v1028 = vadd.f32 0.0, %v1027
        %v1029 = vpop.f32.mrf.mxu0
        %v1030 = vadd.f32 0.0, %v1029
        %1031 = vdwg.mxu0
        %v1032 = vadd.f32 %v866, %v986
        %v1033 = vadd.f32 %v880, %v1000
        %v1034 = vadd.f32 %v894, %v1014
        %v1035 = vadd.f32 %v908, %v1028
        %v1036 = vadd.f32 %v868, %v988
        %v1037 = vadd.f32 %v882, %v1002
        %v1038 = vadd.f32 %v896, %v1016
        %v1039 = vadd.f32 %v910, %v1030
        %s1040 = scalar_lea.vmem %s572, 24 [#allocation2]
        %v1041 = vld [vmem:[%s1040] sm:$0xf]
        %v1042 = vld [vmem:[%s1040 + $0x4] sm:$0xf]
        %v1044 = vsel %vm668, %v1041, 0
        %1046 = vmatpush.bf16.msra.mxu0 0
        %1047 = vmatpush.bf16.msra.mxu0 0
        %1048 = vmatpush.bf16.msra.mxu0 0
        %1049 = vmatpush.bf16.msra.mxu0 0
        %1050 = vmatpush.bf16.msra.mxu0 0
        %1051 = vmatpush.bf16.msra.mxu0 0
        %1052 = vmatpush.bf16.msra.mxu0 0
        %1053 = vmatpush.bf16.msra.mxu0 %v674
        %1054 = vmatmul.bf16.gmra.mxu0 %v1044
        %v1055 = vpop.f32.mrf.mxu0
        %v1056 = vadd.f32 0.0, %v1055
        %v1057 = vpop.f32.mrf.mxu0
        %1058 = vdwg.mxu0
        %v1060 = vsel %vm668, %v1042, 0
        %1062 = vmatpush.bf16.msra.mxu0 0
        %1063 = vmatpush.bf16.msra.mxu0 0
        %1064 = vmatpush.bf16.msra.mxu0 0
        %1065 = vmatpush.bf16.msra.mxu0 0
        %1066 = vmatpush.bf16.msra.mxu0 0
        %1067 = vmatpush.bf16.msra.mxu0 0
        %1068 = vmatpush.bf16.msra.mxu0 0
        %1069 = vmatpush.bf16.msra.mxu0 %v693
        %1070 = vmatmul.bf16.gmra.mxu0 %v1060
        %v1071 = vpop.f32.mrf.mxu0
        %v1072 = vadd.f32 0.0, %v1071
        %v1073 = vpop.f32.mrf.mxu0
        %1074 = vdwg.mxu0
        %v1075 = vpack.c.bf16 %v1072, %v1056
        %s1076 = scalar_lea.vmem [#allocation5], 48
        %v1077 = vld [vmem:[%s1076] sm:$0xff]
        %v1078 = vld [vmem:[%s1076 + $0x8] sm:$0xff]
        %v1081 = vunpack.c.l.b16 %v1077
        %v1082 = vunpack.c.h.b16 %v1077
        %v1083 = vunpack.c.l.b16 %v1078
        %v1084 = vunpack.c.h.b16 %v1078
        %v1085 = vpack.c.b16 %v1081, %v1081
        %v1086 = vpack.c.b16 %v1082, %v1082
        %v1087 = vpack.c.b16 %v1083, %v1083
        %v1088 = vpack.c.b16 %v1084, %v1084
        %v1090 = vsel %vm668, %v1075, 0
        %v1093 = vsel %vm672, %v1085, 0
        %v1096 = vsel %vm672, %v1086, 0
        %v1099 = vsel %vm672, %v1087, 0
        %v1102 = vsel %vm672, %v1088, 0
        %1104 = vmatpush.bf16.msra.mxu0 0
        %1105 = vmatpush.bf16.msra.mxu0 0
        %1106 = vmatpush.bf16.msra.mxu0 0
        %1107 = vmatpush.bf16.msra.mxu0 0
        %1108 = vmatpush.bf16.msra.mxu0 0
        %1109 = vmatpush.bf16.msra.mxu0 0
        %1110 = vmatpush.bf16.msra.mxu0 0
        %1111 = vmatpush.bf16.msra.mxu0 %v1093
        %1112 = vmatmul.bf16.gmra.mxu0 %v1090
        %v1113 = vpop.f32.mrf.mxu0
        %v1114 = vadd.f32 0.0, %v1113
        %v1115 = vpop.f32.mrf.mxu0
        %v1116 = vadd.f32 0.0, %v1115
        %1117 = vdwg.mxu0
        %1118 = vmatpush.bf16.msra.mxu0 0
        %1119 = vmatpush.bf16.msra.mxu0 0
        %1120 = vmatpush.bf16.msra.mxu0 0
        %1121 = vmatpush.bf16.msra.mxu0 0
        %1122 = vmatpush.bf16.msra.mxu0 0
        %1123 = vmatpush.bf16.msra.mxu0 0
        %1124 = vmatpush.bf16.msra.mxu0 0
        %1125 = vmatpush.bf16.msra.mxu0 %v1096
        %1126 = vmatmul.bf16.gmra.mxu0 %v1090
        %v1127 = vpop.f32.mrf.mxu0
        %v1128 = vadd.f32 0.0, %v1127
        %v1129 = vpop.f32.mrf.mxu0
        %v1130 = vadd.f32 0.0, %v1129
        %1131 = vdwg.mxu0
        %1132 = vmatpush.bf16.msra.mxu0 0
        %1133 = vmatpush.bf16.msra.mxu0 0
        %1134 = vmatpush.bf16.msra.mxu0 0
        %1135 = vmatpush.bf16.msra.mxu0 0
        %1136 = vmatpush.bf16.msra.mxu0 0
        %1137 = vmatpush.bf16.msra.mxu0 0
        %1138 = vmatpush.bf16.msra.mxu0 0
        %1139 = vmatpush.bf16.msra.mxu0 %v1099
        %1140 = vmatmul.bf16.gmra.mxu0 %v1090
        %v1141 = vpop.f32.mrf.mxu0
        %v1142 = vadd.f32 0.0, %v1141
        %v1143 = vpop.f32.mrf.mxu0
        %v1144 = vadd.f32 0.0, %v1143
        %1145 = vdwg.mxu0
        %1146 = vmatpush.bf16.msra.mxu0 0
        %1147 = vmatpush.bf16.msra.mxu0 0
        %1148 = vmatpush.bf16.msra.mxu0 0
        %1149 = vmatpush.bf16.msra.mxu0 0
        %1150 = vmatpush.bf16.msra.mxu0 0
        %1151 = vmatpush.bf16.msra.mxu0 0
        %1152 = vmatpush.bf16.msra.mxu0 0
        %1153 = vmatpush.bf16.msra.mxu0 %v1102
        %1154 = vmatmul.bf16.gmra.mxu0 %v1090
        %v1155 = vpop.f32.mrf.mxu0
        %v1156 = vadd.f32 0.0, %v1155
        %v1157 = vpop.f32.mrf.mxu0
        %v1158 = vadd.f32 0.0, %v1157
        %1159 = vdwg.mxu0
        %v1160 = vadd.f32 %v1032, %v1114
        %v1161 = vadd.f32 %v1033, %v1128
        %v1162 = vadd.f32 %v1034, %v1142
        %v1163 = vadd.f32 %v1035, %v1156
        %v1164 = vadd.f32 %v1036, %v1116
        %v1165 = vadd.f32 %v1037, %v1130
        %v1166 = vadd.f32 %v1038, %v1144
        %v1167 = vadd.f32 %v1039, %v1158
        %v1168 = vld [vmem:[%s3] sm:$0xf]
        %v1170 = vperm.slane %v1168, 0
        %v1171 = vperm.slane %v1168, 1
        %v1172 = vperm.slane %v1168, 2
        %v1173 = vperm.slane %v1168, 3
        %v1178 = vadd.f32 %v1160, %v1170
        %v1179 = vadd.f32 %v1161, %v1171
        %v1180 = vadd.f32 %v1162, %v1172
        %v1181 = vadd.f32 %v1163, %v1173
        %v1182 = vadd.f32 %v1164, %v1170
        %v1183 = vadd.f32 %v1165, %v1171
        %v1184 = vadd.f32 %v1166, %v1172
        %v1185 = vadd.f32 %v1167, %v1173
        %v1186 = vxor.u32 %v1179, 2147483648
        %v1187 = vxor.u32 %v1183, 2147483648
        %v1188 = vmul.f32 %v1186, 1.442695
        %v1189 = vpow.pop %v1188
        %v1190 = vmul.f32 %v1187, 1.442695
        %v1191 = vpow.pop %v1190
        %v1192 = vadd.f32 %v1189, 1.0
        %v1193 = vadd.f32 %v1191, 1.0
        %v1194 = vrcp.pop %v1192
        %v1195 = vmul.f32 %v1192, %v1194
        %v1196 = vsub.f32 1.0, %v1195
        %v1197 = vmul.f32 %v1194, %v1196
        %v1198 = vadd.f32 %v1194, %v1197
        %vm1199 = vweird.f32 %v1192
        %vm1200 = vweird.f32 %v1194
        %vm1201 = vmor %vm1199, %vm1200
        %v1202 = vsel %vm1201, %v1194, %v1198
        %v1203 = vand.u32 2147483647, %v1192
        %vm1204 = vcmp.eq.f32.partialorder %v1203, 8.507059e+37
        %v1205 = vand.u32 %v1192, 2147483648
        %v1206 = vor.u32 1.1754944e-38, %v1205
        %v1207 = vsel %vm1204, %v1206, %v1202
        %v1208 = vmul.f32 1.0, %v1207
        %v1209 = vrcp.pop %v1193
        %v1210 = vmul.f32 %v1193, %v1209
        %v1211 = vsub.f32 1.0, %v1210
        %v1212 = vmul.f32 %v1209, %v1211
        %v1213 = vadd.f32 %v1209, %v1212
        %vm1214 = vweird.f32 %v1193
        %vm1215 = vweird.f32 %v1209
        %vm1216 = vmor %vm1214, %vm1215
        %v1217 = vsel %vm1216, %v1209, %v1213
        %v1218 = vand.u32 2147483647, %v1193
        %vm1219 = vcmp.eq.f32.partialorder %v1218, 8.507059e+37
        %v1220 = vand.u32 %v1193, 2147483648
        %v1221 = vor.u32 1.1754944e-38, %v1220
        %v1222 = vsel %vm1219, %v1221, %v1217
        %v1223 = vmul.f32 1.0, %v1222
        %v1224 = vmul.f32 %v1178, %v1208
        %v1225 = vmul.f32 %v1182, %v1223
        %v1226 = vxor.u32 %v1181, 2147483648
        %v1227 = vxor.u32 %v1185, 2147483648
        %v1228 = vmul.f32 %v1226, 1.442695
        %v1229 = vpow.pop %v1228
        %v1230 = vmul.f32 %v1227, 1.442695
        %v1231 = vpow.pop %v1230
        %v1232 = vadd.f32 %v1229, 1.0
        %v1233 = vadd.f32 %v1231, 1.0
        %v1234 = vrcp.pop %v1232
        %v1235 = vmul.f32 %v1232, %v1234
        %v1236 = vsub.f32 1.0, %v1235
        %v1237 = vmul.f32 %v1234, %v1236
        %v1238 = vadd.f32 %v1234, %v1237
        %vm1239 = vweird.f32 %v1232
        %vm1240 = vweird.f32 %v1234
        %vm1241 = vmor %vm1239, %vm1240
        %v1242 = vsel %vm1241, %v1234, %v1238
        %v1243 = vand.u32 2147483647, %v1232
        %vm1244 = vcmp.eq.f32.partialorder %v1243, 8.507059e+37
        %v1245 = vand.u32 %v1232, 2147483648
        %v1246 = vor.u32 1.1754944e-38, %v1245
        %v1247 = vsel %vm1244, %v1246, %v1242
        %v1248 = vmul.f32 1.0, %v1247
        %v1249 = vrcp.pop %v1233
        %v1250 = vmul.f32 %v1233, %v1249
        %v1251 = vsub.f32 1.0, %v1250
        %v1252 = vmul.f32 %v1249, %v1251
        %v1253 = vadd.f32 %v1249, %v1252
        %vm1254 = vweird.f32 %v1233
        %vm1255 = vweird.f32 %v1249
        %vm1256 = vmor %vm1254, %vm1255
        %v1257 = vsel %vm1256, %v1249, %v1253
        %v1258 = vand.u32 2147483647, %v1233
        %vm1259 = vcmp.eq.f32.partialorder %v1258, 8.507059e+37
        %v1260 = vand.u32 %v1233, 2147483648
        %v1261 = vor.u32 1.1754944e-38, %v1260
        %v1262 = vsel %vm1259, %v1261, %v1257
        %v1263 = vmul.f32 1.0, %v1262
        %v1264 = vmul.f32 %v1180, %v1248
        %v1265 = vmul.f32 %v1184, %v1263
        %v1266 = vpack.c.bf16 %v1225, %v1224
        %v1267 = vld [vmem:[#allocation7] sm:$0xff]
        %v1268 = vld [vmem:[#allocation7 + $0x8] sm:$0xff]
        %v1269 = vld [vmem:[#allocation7 + $0x10] sm:$0xff]
        %v1270 = vld [vmem:[#allocation7 + $0x18] sm:$0xff]
        %v1271 = vld [vmem:[#allocation7 + $0x20] sm:$0xff]
        %v1272 = vld [vmem:[#allocation7 + $0x28] sm:$0xff]
        %v1273 = vld [vmem:[#allocation7 + $0x30] sm:$0xff]
        %v1274 = vld [vmem:[#allocation7 + $0x38] sm:$0xff]
        %v1275 = vld [vmem:[#allocation7 + $0x40] sm:$0xff]
        %v1276 = vld [vmem:[#allocation7 + $0x48] sm:$0xff]
        %v1277 = vld [vmem:[#allocation7 + $0x50] sm:$0xff]
        %v1278 = vld [vmem:[#allocation7 + $0x58] sm:$0xff]
        %v1279 = vld [vmem:[#allocation7 + $0x60] sm:$0xff]
        %v1280 = vld [vmem:[#allocation7 + $0x68] sm:$0xff]
        %v1281 = vld [vmem:[#allocation7 + $0x70] sm:$0xff]
        %v1282 = vld [vmem:[#allocation7 + $0x78] sm:$0xff]
        %v1283 = vld [vmem:[%s6] sm:$0x3]
        %v1285 = vperm.slane %v1283, 0
        %v1286 = vperm.slane %v1283, 1
        %v1305 = vunpack.c.l.b16 %v1267
        %v1306 = vunpack.c.h.b16 %v1267
        %v1307 = vunpack.c.l.b16 %v1268
        %v1308 = vunpack.c.h.b16 %v1268
        %v1309 = vunpack.c.l.b16 %v1269
        %v1310 = vunpack.c.h.b16 %v1269
        %v1311 = vunpack.c.l.b16 %v1270
        %v1312 = vunpack.c.h.b16 %v1270
        %v1313 = vunpack.c.l.b16 %v1271
        %v1314 = vunpack.c.h.b16 %v1271
        %v1315 = vunpack.c.l.b16 %v1272
        %v1316 = vunpack.c.h.b16 %v1272
        %v1317 = vunpack.c.l.b16 %v1273
        %v1318 = vunpack.c.h.b16 %v1273
        %v1319 = vunpack.c.l.b16 %v1274
        %v1320 = vunpack.c.h.b16 %v1274
        %v1321 = vunpack.c.l.b16 %v1275
        %v1322 = vunpack.c.h.b16 %v1275
        %v1323 = vunpack.c.l.b16 %v1276
        %v1324 = vunpack.c.h.b16 %v1276
        %v1325 = vunpack.c.l.b16 %v1277
        %v1326 = vunpack.c.h.b16 %v1277
        %v1327 = vunpack.c.l.b16 %v1278
        %v1328 = vunpack.c.h.b16 %v1278
        %v1329 = vunpack.c.l.b16 %v1279
        %v1330 = vunpack.c.h.b16 %v1279
        %v1331 = vunpack.c.l.b16 %v1280
        %v1332 = vunpack.c.h.b16 %v1280
        %v1333 = vunpack.c.l.b16 %v1281
        %v1334 = vunpack.c.h.b16 %v1281
        %v1335 = vunpack.c.l.b16 %v1282
        %v1336 = vunpack.c.h.b16 %v1282
        %v1337 = vpack.c.b16 %v1307, %v1305
        %v1338 = vpack.c.b16 %v1308, %v1306
        %v1339 = vpack.c.b16 %v1311, %v1309
        %v1340 = vpack.c.b16 %v1312, %v1310
        %v1341 = vpack.c.b16 %v1315, %v1313
        %v1342 = vpack.c.b16 %v1316, %v1314
        %v1343 = vpack.c.b16 %v1319, %v1317
        %v1344 = vpack.c.b16 %v1320, %v1318
        %v1345 = vpack.c.b16 %v1323, %v1321
        %v1346 = vpack.c.b16 %v1324, %v1322
        %v1347 = vpack.c.b16 %v1327, %v1325
        %v1348 = vpack.c.b16 %v1328, %v1326
        %v1349 = vpack.c.b16 %v1331, %v1329
        %v1350 = vpack.c.b16 %v1332, %v1330
        %v1351 = vpack.c.b16 %v1335, %v1333
        %v1352 = vpack.c.b16 %v1336, %v1334
        %1369 = vmatpush.bf16.msra.mxu0 %v1351
        %1370 = vmatpush.bf16.msra.mxu0 %v1349
        %1371 = vmatpush.bf16.msra.mxu0 %v1347
        %1372 = vmatpush.bf16.msra.mxu0 %v1345
        %1373 = vmatpush.bf16.msra.mxu0 %v1343
        %1374 = vmatpush.bf16.msra.mxu0 %v1341
        %1375 = vmatpush.bf16.msra.mxu0 %v1339
        %1376 = vmatpush.bf16.msra.mxu0 %v1337
        %1377 = vmatmul.bf16.gmra.mxu0 %v1266
        %v1378 = vpop.f32.mrf.mxu0
        %v1379 = vadd.f32 %v1285, %v1378
        %v1380 = vpop.f32.mrf.mxu0
        %v1381 = vadd.f32 %v1285, %v1380
        %1382 = vdwg.mxu0
        %1383 = vmatpush.bf16.msra.mxu0 %v1352
        %1384 = vmatpush.bf16.msra.mxu0 %v1350
        %1385 = vmatpush.bf16.msra.mxu0 %v1348
        %1386 = vmatpush.bf16.msra.mxu0 %v1346
        %1387 = vmatpush.bf16.msra.mxu0 %v1344
        %1388 = vmatpush.bf16.msra.mxu0 %v1342
        %1389 = vmatpush.bf16.msra.mxu0 %v1340
        %1390 = vmatpush.bf16.msra.mxu0 %v1338
        %1391 = vmatmul.bf16.gmra.mxu0 %v1266
        %v1392 = vpop.f32.mrf.mxu0
        %v1393 = vadd.f32 %v1286, %v1392
        %v1394 = vpop.f32.mrf.mxu0
        %v1395 = vadd.f32 %v1286, %v1394
        %1396 = vdwg.mxu0
        %v1397 = vpack.c.bf16 %v1265, %v1264
        %v1398 = vld [vmem:[#allocation8] sm:$0xff]
        %v1399 = vld [vmem:[#allocation8 + $0x8] sm:$0xff]
        %v1400 = vld [vmem:[#allocation8 + $0x10] sm:$0xff]
        %v1401 = vld [vmem:[#allocation8 + $0x18] sm:$0xff]
        %v1402 = vld [vmem:[#allocation8 + $0x20] sm:$0xff]
        %v1403 = vld [vmem:[#allocation8 + $0x28] sm:$0xff]
        %v1404 = vld [vmem:[#allocation8 + $0x30] sm:$0xff]
        %v1405 = vld [vmem:[#allocation8 + $0x38] sm:$0xff]
        %v1406 = vld [vmem:[#allocation8 + $0x40] sm:$0xff]
        %v1407 = vld [vmem:[#allocation8 + $0x48] sm:$0xff]
        %v1408 = vld [vmem:[#allocation8 + $0x50] sm:$0xff]
        %v1409 = vld [vmem:[#allocation8 + $0x58] sm:$0xff]
        %v1410 = vld [vmem:[#allocation8 + $0x60] sm:$0xff]
        %v1411 = vld [vmem:[#allocation8 + $0x68] sm:$0xff]
        %v1412 = vld [vmem:[#allocation8 + $0x70] sm:$0xff]
        %v1413 = vld [vmem:[#allocation8 + $0x78] sm:$0xff]
        %v1414 = vld [vmem:[%s7] sm:$0x3]
        %v1416 = vperm.slane %v1414, 0
        %v1417 = vperm.slane %v1414, 1
        %v1436 = vunpack.c.l.b16 %v1398
        %v1437 = vunpack.c.h.b16 %v1398
        %v1438 = vunpack.c.l.b16 %v1399
        %v1439 = vunpack.c.h.b16 %v1399
        %v1440 = vunpack.c.l.b16 %v1400
        %v1441 = vunpack.c.h.b16 %v1400
        %v1442 = vunpack.c.l.b16 %v1401
        %v1443 = vunpack.c.h.b16 %v1401
        %v1444 = vunpack.c.l.b16 %v1402
        %v1445 = vunpack.c.h.b16 %v1402
        %v1446 = vunpack.c.l.b16 %v1403
        %v1447 = vunpack.c.h.b16 %v1403
        %v1448 = vunpack.c.l.b16 %v1404
        %v1449 = vunpack.c.h.b16 %v1404
        %v1450 = vunpack.c.l.b16 %v1405
        %v1451 = vunpack.c.h.b16 %v1405
        %v1452 = vunpack.c.l.b16 %v1406
        %v1453 = vunpack.c.h.b16 %v1406
        %v1454 = vunpack.c.l.b16 %v1407
        %v1455 = vunpack.c.h.b16 %v1407
        %v1456 = vunpack.c.l.b16 %v1408
        %v1457 = vunpack.c.h.b16 %v1408
        %v1458 = vunpack.c.l.b16 %v1409
        %v1459 = vunpack.c.h.b16 %v1409
        %v1460 = vunpack.c.l.b16 %v1410
        %v1461 = vunpack.c.h.b16 %v1410
        %v1462 = vunpack.c.l.b16 %v1411
        %v1463 = vunpack.c.h.b16 %v1411
        %v1464 = vunpack.c.l.b16 %v1412
        %v1465 = vunpack.c.h.b16 %v1412
        %v1466 = vunpack.c.l.b16 %v1413
        %v1467 = vunpack.c.h.b16 %v1413
        %v1468 = vpack.c.b16 %v1438, %v1436
        %v1469 = vpack.c.b16 %v1439, %v1437
        %v1470 = vpack.c.b16 %v1442, %v1440
        %v1471 = vpack.c.b16 %v1443, %v1441
        %v1472 = vpack.c.b16 %v1446, %v1444
        %v1473 = vpack.c.b16 %v1447, %v1445
        %v1474 = vpack.c.b16 %v1450, %v1448
        %v1475 = vpack.c.b16 %v1451, %v1449
        %v1476 = vpack.c.b16 %v1454, %v1452
        %v1477 = vpack.c.b16 %v1455, %v1453
        %v1478 = vpack.c.b16 %v1458, %v1456
        %v1479 = vpack.c.b16 %v1459, %v1457
        %v1480 = vpack.c.b16 %v1462, %v1460
        %v1481 = vpack.c.b16 %v1463, %v1461
        %v1482 = vpack.c.b16 %v1466, %v1464
        %v1483 = vpack.c.b16 %v1467, %v1465
        %1500 = vmatpush.bf16.msra.mxu0 %v1482
        %1501 = vmatpush.bf16.msra.mxu0 %v1480
        %1502 = vmatpush.bf16.msra.mxu0 %v1478
        %1503 = vmatpush.bf16.msra.mxu0 %v1476
        %1504 = vmatpush.bf16.msra.mxu0 %v1474
        %1505 = vmatpush.bf16.msra.mxu0 %v1472
        %1506 = vmatpush.bf16.msra.mxu0 %v1470
        %1507 = vmatpush.bf16.msra.mxu0 %v1468
        %1508 = vmatmul.bf16.gmra.mxu0 %v1397
        %v1509 = vpop.f32.mrf.mxu0
        %v1510 = vadd.f32 %v1416, %v1509
        %v1511 = vpop.f32.mrf.mxu0
        %v1512 = vadd.f32 %v1416, %v1511
        %1513 = vdwg.mxu0
        %1514 = vmatpush.bf16.msra.mxu0 %v1483
        %1515 = vmatpush.bf16.msra.mxu0 %v1481
        %1516 = vmatpush.bf16.msra.mxu0 %v1479
        %1517 = vmatpush.bf16.msra.mxu0 %v1477
        %1518 = vmatpush.bf16.msra.mxu0 %v1475
        %1519 = vmatpush.bf16.msra.mxu0 %v1473
        %1520 = vmatpush.bf16.msra.mxu0 %v1471
        %1521 = vmatpush.bf16.msra.mxu0 %v1469
        %1522 = vmatmul.bf16.gmra.mxu0 %v1397
        %v1523 = vpop.f32.mrf.mxu0
        %v1524 = vadd.f32 %v1417, %v1523
        %v1525 = vpop.f32.mrf.mxu0
        %v1526 = vadd.f32 %v1417, %v1525
        %1527 = vdwg.mxu0
        %v1528 = vxor.u32 %v1393, 2147483648
        %v1529 = vxor.u32 %v1395, 2147483648
        %v1530 = vmul.f32 %v1528, 1.442695
        %v1531 = vpow.pop %v1530
        %v1532 = vmul.f32 %v1529, 1.442695
        %v1533 = vpow.pop %v1532
        %v1534 = vadd.f32 %v1531, 1.0
        %v1535 = vadd.f32 %v1533, 1.0
        %v1536 = vrcp.pop %v1534
        %v1537 = vmul.f32 %v1534, %v1536
        %v1538 = vsub.f32 1.0, %v1537
        %v1539 = vmul.f32 %v1536, %v1538
        %v1540 = vadd.f32 %v1536, %v1539
        %vm1541 = vweird.f32 %v1534
        %vm1542 = vweird.f32 %v1536
        %vm1543 = vmor %vm1541, %vm1542
        %v1544 = vsel %vm1543, %v1536, %v1540
        %v1545 = vand.u32 2147483647, %v1534
        %vm1546 = vcmp.eq.f32.partialorder %v1545, 8.507059e+37
        %v1547 = vand.u32 %v1534, 2147483648
        %v1548 = vor.u32 1.1754944e-38, %v1547
        %v1549 = vsel %vm1546, %v1548, %v1544
        %v1550 = vmul.f32 1.0, %v1549
        %v1551 = vrcp.pop %v1535
        %v1552 = vmul.f32 %v1535, %v1551
        %v1553 = vsub.f32 1.0, %v1552
        %v1554 = vmul.f32 %v1551, %v1553
        %v1555 = vadd.f32 %v1551, %v1554
        %vm1556 = vweird.f32 %v1535
        %vm1557 = vweird.f32 %v1551
        %vm1558 = vmor %vm1556, %vm1557
        %v1559 = vsel %vm1558, %v1551, %v1555
        %v1560 = vand.u32 2147483647, %v1535
        %vm1561 = vcmp.eq.f32.partialorder %v1560, 8.507059e+37
        %v1562 = vand.u32 %v1535, 2147483648
        %v1563 = vor.u32 1.1754944e-38, %v1562
        %v1564 = vsel %vm1561, %v1563, %v1559
        %v1565 = vmul.f32 1.0, %v1564
        %v1566 = vmul.f32 %v1379, %v1550
        %v1567 = vmul.f32 %v1381, %v1565
        %v1568 = vxor.u32 %v1524, 2147483648
        %v1569 = vxor.u32 %v1526, 2147483648
        %v1570 = vmul.f32 %v1568, 1.442695
        %v1571 = vpow.pop %v1570
        %v1572 = vmul.f32 %v1569, 1.442695
        %v1573 = vpow.pop %v1572
        %v1574 = vadd.f32 %v1571, 1.0
        %v1575 = vadd.f32 %v1573, 1.0
        %v1576 = vrcp.pop %v1574
        %v1577 = vmul.f32 %v1574, %v1576
        %v1578 = vsub.f32 1.0, %v1577
        %v1579 = vmul.f32 %v1576, %v1578
        %v1580 = vadd.f32 %v1576, %v1579
        %vm1581 = vweird.f32 %v1574
        %vm1582 = vweird.f32 %v1576
        %vm1583 = vmor %vm1581, %vm1582
        %v1584 = vsel %vm1583, %v1576, %v1580
        %v1585 = vand.u32 2147483647, %v1574
        %vm1586 = vcmp.eq.f32.partialorder %v1585, 8.507059e+37
        %v1587 = vand.u32 %v1574, 2147483648
        %v1588 = vor.u32 1.1754944e-38, %v1587
        %v1589 = vsel %vm1586, %v1588, %v1584
        %v1590 = vmul.f32 1.0, %v1589
        %v1591 = vrcp.pop %v1575
        %v1592 = vmul.f32 %v1575, %v1591
        %v1593 = vsub.f32 1.0, %v1592
        %v1594 = vmul.f32 %v1591, %v1593
        %v1595 = vadd.f32 %v1591, %v1594
        %vm1596 = vweird.f32 %v1575
        %vm1597 = vweird.f32 %v1591
        %vm1598 = vmor %vm1596, %vm1597
        %v1599 = vsel %vm1598, %v1591, %v1595
        %v1600 = vand.u32 2147483647, %v1575
        %vm1601 = vcmp.eq.f32.partialorder %v1600, 8.507059e+37
        %v1602 = vand.u32 %v1575, 2147483648
        %v1603 = vor.u32 1.1754944e-38, %v1602
        %v1604 = vsel %vm1601, %v1603, %v1599
        %v1605 = vmul.f32 1.0, %v1604
        %v1606 = vmul.f32 %v1510, %v1590
        %v1607 = vmul.f32 %v1512, %v1605
        %v1608 = vpack.c.bf16 %v1567, %v1566
        %s1609 = scalar_lea.vmem [#allocation7], 128
        %v1610 = vld [vmem:[%s1609] sm:$0xff]
        %v1611 = vld [vmem:[%s1609 + $0x8] sm:$0xff]
        %v1612 = vld [vmem:[%s1609 + $0x10] sm:$0xff]
        %v1613 = vld [vmem:[%s1609 + $0x18] sm:$0xff]
        %v1614 = vld [vmem:[%s1609 + $0x20] sm:$0xff]
        %v1615 = vld [vmem:[%s1609 + $0x28] sm:$0xff]
        %v1616 = vld [vmem:[%s1609 + $0x30] sm:$0xff]
        %v1617 = vld [vmem:[%s1609 + $0x38] sm:$0xff]
        %v1618 = vld [vmem:[%s1609 + $0x40] sm:$0xff]
        %v1619 = vld [vmem:[%s1609 + $0x48] sm:$0xff]
        %v1620 = vld [vmem:[%s1609 + $0x50] sm:$0xff]
        %v1621 = vld [vmem:[%s1609 + $0x58] sm:$0xff]
        %v1622 = vld [vmem:[%s1609 + $0x60] sm:$0xff]
        %v1623 = vld [vmem:[%s1609 + $0x68] sm:$0xff]
        %v1624 = vld [vmem:[%s1609 + $0x70] sm:$0xff]
        %v1625 = vld [vmem:[%s1609 + $0x78] sm:$0xff]
        %s1626 = scalar_lea.vmem %s6, 2
        %v1627 = vld [vmem:[%s1626] sm:$0x3]
        %v1629 = vperm.slane %v1627, 0
        %v1630 = vperm.slane %v1627, 1
        %v1649 = vunpack.c.l.b16 %v1610
        %v1650 = vunpack.c.h.b16 %v1610
        %v1651 = vunpack.c.l.b16 %v1611
        %v1652 = vunpack.c.h.b16 %v1611
        %v1653 = vunpack.c.l.b16 %v1612
        %v1654 = vunpack.c.h.b16 %v1612
        %v1655 = vunpack.c.l.b16 %v1613
        %v1656 = vunpack.c.h.b16 %v1613
        %v1657 = vunpack.c.l.b16 %v1614
        %v1658 = vunpack.c.h.b16 %v1614
        %v1659 = vunpack.c.l.b16 %v1615
        %v1660 = vunpack.c.h.b16 %v1615
        %v1661 = vunpack.c.l.b16 %v1616
        %v1662 = vunpack.c.h.b16 %v1616
        %v1663 = vunpack.c.l.b16 %v1617
        %v1664 = vunpack.c.h.b16 %v1617
        %v1665 = vunpack.c.l.b16 %v1618
        %v1666 = vunpack.c.h.b16 %v1618
        %v1667 = vunpack.c.l.b16 %v1619
        %v1668 = vunpack.c.h.b16 %v1619
        %v1669 = vunpack.c.l.b16 %v1620
        %v1670 = vunpack.c.h.b16 %v1620
        %v1671 = vunpack.c.l.b16 %v1621
        %v1672 = vunpack.c.h.b16 %v1621
        %v1673 = vunpack.c.l.b16 %v1622
        %v1674 = vunpack.c.h.b16 %v1622
        %v1675 = vunpack.c.l.b16 %v1623
        %v1676 = vunpack.c.h.b16 %v1623
        %v1677 = vunpack.c.l.b16 %v1624
        %v1678 = vunpack.c.h.b16 %v1624
        %v1679 = vunpack.c.l.b16 %v1625
        %v1680 = vunpack.c.h.b16 %v1625
        %v1681 = vpack.c.b16 %v1651, %v1649
        %v1682 = vpack.c.b16 %v1652, %v1650
        %v1683 = vpack.c.b16 %v1655, %v1653
        %v1684 = vpack.c.b16 %v1656, %v1654
        %v1685 = vpack.c.b16 %v1659, %v1657
        %v1686 = vpack.c.b16 %v1660, %v1658
        %v1687 = vpack.c.b16 %v1663, %v1661
        %v1688 = vpack.c.b16 %v1664, %v1662
        %v1689 = vpack.c.b16 %v1667, %v1665
        %v1690 = vpack.c.b16 %v1668, %v1666
        %v1691 = vpack.c.b16 %v1671, %v1669
        %v1692 = vpack.c.b16 %v1672, %v1670
        %v1693 = vpack.c.b16 %v1675, %v1673
        %v1694 = vpack.c.b16 %v1676, %v1674
        %v1695 = vpack.c.b16 %v1679, %v1677
        %v1696 = vpack.c.b16 %v1680, %v1678
        %1713 = vmatpush.bf16.msra.mxu0 %v1695
        %1714 = vmatpush.bf16.msra.mxu0 %v1693
        %1715 = vmatpush.bf16.msra.mxu0 %v1691
        %1716 = vmatpush.bf16.msra.mxu0 %v1689
        %1717 = vmatpush.bf16.msra.mxu0 %v1687
        %1718 = vmatpush.bf16.msra.mxu0 %v1685
        %1719 = vmatpush.bf16.msra.mxu0 %v1683
        %1720 = vmatpush.bf16.msra.mxu0 %v1681
        %1721 = vmatmul.bf16.gmra.mxu0 %v1608
        %v1722 = vpop.f32.mrf.mxu0
        %v1723 = vadd.f32 %v1629, %v1722
        %v1724 = vpop.f32.mrf.mxu0
        %v1725 = vadd.f32 %v1629, %v1724
        %1726 = vdwg.mxu0
        %1727 = vmatpush.bf16.msra.mxu0 %v1696
        %1728 = vmatpush.bf16.msra.mxu0 %v1694
        %1729 = vmatpush.bf16.msra.mxu0 %v1692
        %1730 = vmatpush.bf16.msra.mxu0 %v1690
        %1731 = vmatpush.bf16.msra.mxu0 %v1688
        %1732 = vmatpush.bf16.msra.mxu0 %v1686
        %1733 = vmatpush.bf16.msra.mxu0 %v1684
        %1734 = vmatpush.bf16.msra.mxu0 %v1682
        %1735 = vmatmul.bf16.gmra.mxu0 %v1608
        %v1736 = vpop.f32.mrf.mxu0
        %v1737 = vadd.f32 %v1630, %v1736
        %v1738 = vpop.f32.mrf.mxu0
        %v1739 = vadd.f32 %v1630, %v1738
        %1740 = vdwg.mxu0
        %v1741 = vpack.c.bf16 %v1607, %v1606
        %s1742 = scalar_lea.vmem [#allocation8], 128
        %v1743 = vld [vmem:[%s1742] sm:$0xff]
        %v1744 = vld [vmem:[%s1742 + $0x8] sm:$0xff]
        %v1745 = vld [vmem:[%s1742 + $0x10] sm:$0xff]
        %v1746 = vld [vmem:[%s1742 + $0x18] sm:$0xff]
        %v1747 = vld [vmem:[%s1742 + $0x20] sm:$0xff]
        %v1748 = vld [vmem:[%s1742 + $0x28] sm:$0xff]
        %v1749 = vld [vmem:[%s1742 + $0x30] sm:$0xff]
        %v1750 = vld [vmem:[%s1742 + $0x38] sm:$0xff]
        %v1751 = vld [vmem:[%s1742 + $0x40] sm:$0xff]
        %v1752 = vld [vmem:[%s1742 + $0x48] sm:$0xff]
        %v1753 = vld [vmem:[%s1742 + $0x50] sm:$0xff]
        %v1754 = vld [vmem:[%s1742 + $0x58] sm:$0xff]
        %v1755 = vld [vmem:[%s1742 + $0x60] sm:$0xff]
        %v1756 = vld [vmem:[%s1742 + $0x68] sm:$0xff]
        %v1757 = vld [vmem:[%s1742 + $0x70] sm:$0xff]
        %v1758 = vld [vmem:[%s1742 + $0x78] sm:$0xff]
        %s1759 = scalar_lea.vmem %s7, 2
        %v1760 = vld [vmem:[%s1759] sm:$0x3]
        %v1762 = vperm.slane %v1760, 0
        %v1763 = vperm.slane %v1760, 1
        %v1782 = vunpack.c.l.b16 %v1743
        %v1783 = vunpack.c.h.b16 %v1743
        %v1784 = vunpack.c.l.b16 %v1744
        %v1785 = vunpack.c.h.b16 %v1744
        %v1786 = vunpack.c.l.b16 %v1745
        %v1787 = vunpack.c.h.b16 %v1745
        %v1788 = vunpack.c.l.b16 %v1746
        %v1789 = vunpack.c.h.b16 %v1746
        %v1790 = vunpack.c.l.b16 %v1747
        %v1791 = vunpack.c.h.b16 %v1747
        %v1792 = vunpack.c.l.b16 %v1748
        %v1793 = vunpack.c.h.b16 %v1748
        %v1794 = vunpack.c.l.b16 %v1749
        %v1795 = vunpack.c.h.b16 %v1749
        %v1796 = vunpack.c.l.b16 %v1750
        %v1797 = vunpack.c.h.b16 %v1750
        %v1798 = vunpack.c.l.b16 %v1751
        %v1799 = vunpack.c.h.b16 %v1751
        %v1800 = vunpack.c.l.b16 %v1752
        %v1801 = vunpack.c.h.b16 %v1752
        %v1802 = vunpack.c.l.b16 %v1753
        %v1803 = vunpack.c.h.b16 %v1753
        %v1804 = vunpack.c.l.b16 %v1754
        %v1805 = vunpack.c.h.b16 %v1754
        %v1806 = vunpack.c.l.b16 %v1755
        %v1807 = vunpack.c.h.b16 %v1755
        %v1808 = vunpack.c.l.b16 %v1756
        %v1809 = vunpack.c.h.b16 %v1756
        %v1810 = vunpack.c.l.b16 %v1757
        %v1811 = vunpack.c.h.b16 %v1757
        %v1812 = vunpack.c.l.b16 %v1758
        %v1813 = vunpack.c.h.b16 %v1758
        %v1814 = vpack.c.b16 %v1784, %v1782
        %v1815 = vpack.c.b16 %v1785, %v1783
        %v1816 = vpack.c.b16 %v1788, %v1786
        %v1817 = vpack.c.b16 %v1789, %v1787
        %v1818 = vpack.c.b16 %v1792, %v1790
        %v1819 = vpack.c.b16 %v1793, %v1791
        %v1820 = vpack.c.b16 %v1796, %v1794
        %v1821 = vpack.c.b16 %v1797, %v1795
        %v1822 = vpack.c.b16 %v1800, %v1798
        %v1823 = vpack.c.b16 %v1801, %v1799
        %v1824 = vpack.c.b16 %v1804, %v1802
        %v1825 = vpack.c.b16 %v1805, %v1803
        %v1826 = vpack.c.b16 %v1808, %v1806
        %v1827 = vpack.c.b16 %v1809, %v1807
        %v1828 = vpack.c.b16 %v1812, %v1810
        %v1829 = vpack.c.b16 %v1813, %v1811
        %1846 = vmatpush.bf16.msra.mxu0 %v1828
        %1847 = vmatpush.bf16.msra.mxu0 %v1826
        %1848 = vmatpush.bf16.msra.mxu0 %v1824
        %1849 = vmatpush.bf16.msra.mxu0 %v1822
        %1850 = vmatpush.bf16.msra.mxu0 %v1820
        %1851 = vmatpush.bf16.msra.mxu0 %v1818
        %1852 = vmatpush.bf16.msra.mxu0 %v1816
        %1853 = vmatpush.bf16.msra.mxu0 %v1814
        %1854 = vmatmul.bf16.gmra.mxu0 %v1741
        %v1855 = vpop.f32.mrf.mxu0
        %v1856 = vadd.f32 %v1762, %v1855
        %v1857 = vpop.f32.mrf.mxu0
        %v1858 = vadd.f32 %v1762, %v1857
        %1859 = vdwg.mxu0
        %1860 = vmatpush.bf16.msra.mxu0 %v1829
        %1861 = vmatpush.bf16.msra.mxu0 %v1827
        %1862 = vmatpush.bf16.msra.mxu0 %v1825
        %1863 = vmatpush.bf16.msra.mxu0 %v1823
        %1864 = vmatpush.bf16.msra.mxu0 %v1821
        %1865 = vmatpush.bf16.msra.mxu0 %v1819
        %1866 = vmatpush.bf16.msra.mxu0 %v1817
        %1867 = vmatpush.bf16.msra.mxu0 %v1815
        %1868 = vmatmul.bf16.gmra.mxu0 %v1741
        %v1869 = vpop.f32.mrf.mxu0
        %v1870 = vadd.f32 %v1763, %v1869
        %v1871 = vpop.f32.mrf.mxu0
        %v1872 = vadd.f32 %v1763, %v1871
        %1873 = vdwg.mxu0
        %v1874 = vxor.u32 %v1737, 2147483648
        %v1875 = vxor.u32 %v1739, 2147483648
        %v1876 = vmul.f32 %v1874, 1.442695
        %v1877 = vpow.pop %v1876
        %v1878 = vmul.f32 %v1875, 1.442695
        %v1879 = vpow.pop %v1878
        %v1880 = vadd.f32 %v1877, 1.0
        %v1881 = vadd.f32 %v1879, 1.0
        %v1882 = vrcp.pop %v1880
        %v1883 = vmul.f32 %v1880, %v1882
        %v1884 = vsub.f32 1.0, %v1883
        %v1885 = vmul.f32 %v1882, %v1884
        %v1886 = vadd.f32 %v1882, %v1885
        %vm1887 = vweird.f32 %v1880
        %vm1888 = vweird.f32 %v1882
        %vm1889 = vmor %vm1887, %vm1888
        %v1890 = vsel %vm1889, %v1882, %v1886
        %v1891 = vand.u32 2147483647, %v1880
        %vm1892 = vcmp.eq.f32.partialorder %v1891, 8.507059e+37
        %v1893 = vand.u32 %v1880, 2147483648
        %v1894 = vor.u32 1.1754944e-38, %v1893
        %v1895 = vsel %vm1892, %v1894, %v1890
        %v1896 = vmul.f32 1.0, %v1895
        %v1897 = vrcp.pop %v1881
        %v1898 = vmul.f32 %v1881, %v1897
        %v1899 = vsub.f32 1.0, %v1898
        %v1900 = vmul.f32 %v1897, %v1899
        %v1901 = vadd.f32 %v1897, %v1900
        %vm1902 = vweird.f32 %v1881
        %vm1903 = vweird.f32 %v1897
        %vm1904 = vmor %vm1902, %vm1903
        %v1905 = vsel %vm1904, %v1897, %v1901
        %v1906 = vand.u32 2147483647, %v1881
        %vm1907 = vcmp.eq.f32.partialorder %v1906, 8.507059e+37
        %v1908 = vand.u32 %v1881, 2147483648
        %v1909 = vor.u32 1.1754944e-38, %v1908
        %v1910 = vsel %vm1907, %v1909, %v1905
        %v1911 = vmul.f32 1.0, %v1910
        %v1912 = vmul.f32 %v1723, %v1896
        %v1913 = vmul.f32 %v1725, %v1911
        %v1914 = vxor.u32 %v1870, 2147483648
        %v1915 = vxor.u32 %v1872, 2147483648
        %v1916 = vmul.f32 %v1914, 1.442695
        %v1917 = vpow.pop %v1916
        %v1918 = vmul.f32 %v1915, 1.442695
        %v1919 = vpow.pop %v1918
        %v1920 = vadd.f32 %v1917, 1.0
        %v1921 = vadd.f32 %v1919, 1.0
        %v1922 = vrcp.pop %v1920
        %v1923 = vmul.f32 %v1920, %v1922
        %v1924 = vsub.f32 1.0, %v1923
        %v1925 = vmul.f32 %v1922, %v1924
        %v1926 = vadd.f32 %v1922, %v1925
        %vm1927 = vweird.f32 %v1920
        %vm1928 = vweird.f32 %v1922
        %vm1929 = vmor %vm1927, %vm1928
        %v1930 = vsel %vm1929, %v1922, %v1926
        %v1931 = vand.u32 2147483647, %v1920
        %vm1932 = vcmp.eq.f32.partialorder %v1931, 8.507059e+37
        %v1933 = vand.u32 %v1920, 2147483648
        %v1934 = vor.u32 1.1754944e-38, %v1933
        %v1935 = vsel %vm1932, %v1934, %v1930
        %v1936 = vmul.f32 1.0, %v1935
        %v1937 = vrcp.pop %v1921
        %v1938 = vmul.f32 %v1921, %v1937
        %v1939 = vsub.f32 1.0, %v1938
        %v1940 = vmul.f32 %v1937, %v1939
        %v1941 = vadd.f32 %v1937, %v1940
        %vm1942 = vweird.f32 %v1921
        %vm1943 = vweird.f32 %v1937
        %vm1944 = vmor %vm1942, %vm1943
        %v1945 = vsel %vm1944, %v1937, %v1941
        %v1946 = vand.u32 2147483647, %v1921
        %vm1947 = vcmp.eq.f32.partialorder %v1946, 8.507059e+37
        %v1948 = vand.u32 %v1921, 2147483648
        %v1949 = vor.u32 1.1754944e-38, %v1948
        %v1950 = vsel %vm1947, %v1949, %v1945
        %v1951 = vmul.f32 1.0, %v1950
        %v1952 = vmul.f32 %v1856, %v1936
        %v1953 = vmul.f32 %v1858, %v1951
        %v1954 = vpack.c.bf16 %v1913, %v1912
        %v1955 = vld [vmem:[#allocation10] sm:$0xf]
        %v1956 = vld [vmem:[#allocation10 + $0x4] sm:$0xf]
        %v1957 = vld [vmem:[#allocation10 + $0x8] sm:$0xf]
        %v1958 = vld [vmem:[#allocation10 + $0xc] sm:$0xf]
        %v1959 = vld [vmem:[#allocation10 + $0x10] sm:$0xf]
        %v1960 = vld [vmem:[#allocation10 + $0x14] sm:$0xf]
        %v1961 = vld [vmem:[#allocation10 + $0x18] sm:$0xf]
        %v1962 = vld [vmem:[#allocation10 + $0x1c] sm:$0xf]
        %v1963 = vld [vmem:[#allocation10 + $0x20] sm:$0xf]
        %v1964 = vld [vmem:[#allocation10 + $0x24] sm:$0xf]
        %v1965 = vld [vmem:[#allocation10 + $0x28] sm:$0xf]
        %v1966 = vld [vmem:[#allocation10 + $0x2c] sm:$0xf]
        %v1967 = vld [vmem:[#allocation10 + $0x30] sm:$0xf]
        %v1968 = vld [vmem:[#allocation10 + $0x34] sm:$0xf]
        %v1969 = vld [vmem:[#allocation10 + $0x38] sm:$0xf]
        %v1970 = vld [vmem:[#allocation10 + $0x3c] sm:$0xf]
        %v1971 = vpack.c.bf16 %v1953, %v1952
        %s1972 = scalar_lea.vmem [#allocation10], 64
        %v1973 = vld [vmem:[%s1972] sm:$0xf]
        %v1974 = vld [vmem:[%s1972 + $0x4] sm:$0xf]
        %v1975 = vld [vmem:[%s1972 + $0x8] sm:$0xf]
        %v1976 = vld [vmem:[%s1972 + $0xc] sm:$0xf]
        %v1977 = vld [vmem:[%s1972 + $0x10] sm:$0xf]
        %v1978 = vld [vmem:[%s1972 + $0x14] sm:$0xf]
        %v1979 = vld [vmem:[%s1972 + $0x18] sm:$0xf]
        %v1980 = vld [vmem:[%s1972 + $0x1c] sm:$0xf]
        %v1981 = vld [vmem:[%s1972 + $0x20] sm:$0xf]
        %v1982 = vld [vmem:[%s1972 + $0x24] sm:$0xf]
        %v1983 = vld [vmem:[%s1972 + $0x28] sm:$0xf]
        %v1984 = vld [vmem:[%s1972 + $0x2c] sm:$0xf]
        %v1985 = vld [vmem:[%s1972 + $0x30] sm:$0xf]
        %v1986 = vld [vmem:[%s1972 + $0x34] sm:$0xf]
        %v1987 = vld [vmem:[%s1972 + $0x38] sm:$0xf]
        %v1988 = vld [vmem:[%s1972 + $0x3c] sm:$0xf]
        %v2005 = vunpack.c.l.b16 %v1973
        %v2006 = vunpack.c.l.b16 %v1974
        %v2007 = vunpack.c.l.b16 %v1975
        %v2008 = vunpack.c.l.b16 %v1976
        %v2009 = vunpack.c.l.b16 %v1977
        %v2010 = vunpack.c.l.b16 %v1978
        %v2011 = vunpack.c.l.b16 %v1979
        %v2012 = vunpack.c.l.b16 %v1980
        %v2013 = vunpack.c.l.b16 %v1981
        %v2014 = vunpack.c.l.b16 %v1982
        %v2015 = vunpack.c.l.b16 %v1983
        %v2016 = vunpack.c.l.b16 %v1984
        %v2017 = vunpack.c.l.b16 %v1985
        %v2018 = vunpack.c.l.b16 %v1986
        %v2019 = vunpack.c.l.b16 %v1987
        %v2020 = vunpack.c.l.b16 %v1988
        %v2021 = vpack.c.b16 %v2006, %v2005
        %v2022 = vpack.c.b16 %v2008, %v2007
        %v2023 = vpack.c.b16 %v2010, %v2009
        %v2024 = vpack.c.b16 %v2012, %v2011
        %v2025 = vpack.c.b16 %v2014, %v2013
        %v2026 = vpack.c.b16 %v2016, %v2015
        %v2027 = vpack.c.b16 %v2018, %v2017
        %v2028 = vpack.c.b16 %v2020, %v2019
        %2037 = vmatpush.bf16.msra.mxu0 %v2028
        %2038 = vmatpush.bf16.msra.mxu0 %v2027
        %2039 = vmatpush.bf16.msra.mxu0 %v2026
        %2040 = vmatpush.bf16.msra.mxu0 %v2025
        %2041 = vmatpush.bf16.msra.mxu0 %v2024
        %2042 = vmatpush.bf16.msra.mxu0 %v2023
        %2043 = vmatpush.bf16.msra.mxu0 %v2022
        %2044 = vmatpush.bf16.msra.mxu0 %v2021
        %2045 = vmatmul.bf16.gmra.mxu0 %v1971
        %v2046 = vpop.f32.mrf.mxu0
        %v2047 = vadd.f32 0.0, %v2046
        %v2048 = vpop.f32.mrf.mxu0
        %v2049 = vadd.f32 0.0, %v2048
        %2050 = vdwg.mxu0
        %v2067 = vunpack.c.l.b16 %v1955
        %v2068 = vunpack.c.l.b16 %v1956
        %v2069 = vunpack.c.l.b16 %v1957
        %v2070 = vunpack.c.l.b16 %v1958
        %v2071 = vunpack.c.l.b16 %v1959
        %v2072 = vunpack.c.l.b16 %v1960
        %v2073 = vunpack.c.l.b16 %v1961
        %v2074 = vunpack.c.l.b16 %v1962
        %v2075 = vunpack.c.l.b16 %v1963
        %v2076 = vunpack.c.l.b16 %v1964
        %v2077 = vunpack.c.l.b16 %v1965
        %v2078 = vunpack.c.l.b16 %v1966
        %v2079 = vunpack.c.l.b16 %v1967
        %v2080 = vunpack.c.l.b16 %v1968
        %v2081 = vunpack.c.l.b16 %v1969
        %v2082 = vunpack.c.l.b16 %v1970
        %v2083 = vpack.c.b16 %v2068, %v2067
        %v2084 = vpack.c.b16 %v2070, %v2069
        %v2085 = vpack.c.b16 %v2072, %v2071
        %v2086 = vpack.c.b16 %v2074, %v2073
        %v2087 = vpack.c.b16 %v2076, %v2075
        %v2088 = vpack.c.b16 %v2078, %v2077
        %v2089 = vpack.c.b16 %v2080, %v2079
        %v2090 = vpack.c.b16 %v2082, %v2081
        %2099 = vmatpush.bf16.msra.mxu0 %v2090
        %2100 = vmatpush.bf16.msra.mxu0 %v2089
        %2101 = vmatpush.bf16.msra.mxu0 %v2088
        %2102 = vmatpush.bf16.msra.mxu0 %v2087
        %2103 = vmatpush.bf16.msra.mxu0 %v2086
        %2104 = vmatpush.bf16.msra.mxu0 %v2085
        %2105 = vmatpush.bf16.msra.mxu0 %v2084
        %2106 = vmatpush.bf16.msra.mxu0 %v2083
        %2107 = vmatmul.bf16.gmra.mxu0 %v1954
        %v2108 = vpop.f32.mrf.mxu0
        %v2109 = vadd.f32 %v2047, %v2108
        %v2110 = vpop.f32.mrf.mxu0
        %v2111 = vadd.f32 %v2049, %v2110
        %2112 = vdwg.mxu0
        %v2113 = vpack.c.bf16 %v2111, %v2109
        %v2114 = vld [vmem:[#allocation11] sm:$0xff]
        %v2115 = vld [vmem:[#allocation11 + $0x8] sm:$0xff]
        %v2116 = vld [vmem:[#allocation11 + $0x10] sm:$0xff]
        %v2117 = vld [vmem:[#allocation11 + $0x18] sm:$0xff]
        %v2118 = vld [vmem:[#allocation11 + $0x20] sm:$0xff]
        %v2119 = vld [vmem:[#allocation11 + $0x28] sm:$0xff]
        %v2120 = vld [vmem:[#allocation11 + $0x30] sm:$0xff]
        %v2121 = vld [vmem:[#allocation11 + $0x38] sm:$0xff]
        %v2122 = vld [vmem:[#allocation11 + $0x40] sm:$0xff]
        %v2123 = vld [vmem:[#allocation11 + $0x48] sm:$0xff]
        %v2124 = vld [vmem:[#allocation11 + $0x50] sm:$0xff]
        %v2125 = vld [vmem:[#allocation11 + $0x58] sm:$0xff]
        %v2126 = vld [vmem:[#allocation11 + $0x60] sm:$0xff]
        %v2127 = vld [vmem:[#allocation11 + $0x68] sm:$0xff]
        %v2128 = vld [vmem:[#allocation11 + $0x70] sm:$0xff]
        %v2129 = vld [vmem:[#allocation11 + $0x78] sm:$0xff]
        %v2130 = vld [vmem:[%s10] sm:$0x3]
        %v2132 = vperm.slane %v2130, 0
        %v2133 = vperm.slane %v2130, 1
        %v2152 = vunpack.c.l.b16 %v2114
        %v2153 = vunpack.c.h.b16 %v2114
        %v2154 = vunpack.c.l.b16 %v2115
        %v2155 = vunpack.c.h.b16 %v2115
        %v2156 = vunpack.c.l.b16 %v2116
        %v2157 = vunpack.c.h.b16 %v2116
        %v2158 = vunpack.c.l.b16 %v2117
        %v2159 = vunpack.c.h.b16 %v2117
        %v2160 = vunpack.c.l.b16 %v2118
        %v2161 = vunpack.c.h.b16 %v2118
        %v2162 = vunpack.c.l.b16 %v2119
        %v2163 = vunpack.c.h.b16 %v2119
        %v2164 = vunpack.c.l.b16 %v2120
        %v2165 = vunpack.c.h.b16 %v2120
        %v2166 = vunpack.c.l.b16 %v2121
        %v2167 = vunpack.c.h.b16 %v2121
        %v2168 = vunpack.c.l.b16 %v2122
        %v2169 = vunpack.c.h.b16 %v2122
        %v2170 = vunpack.c.l.b16 %v2123
        %v2171 = vunpack.c.h.b16 %v2123
        %v2172 = vunpack.c.l.b16 %v2124
        %v2173 = vunpack.c.h.b16 %v2124
        %v2174 = vunpack.c.l.b16 %v2125
        %v2175 = vunpack.c.h.b16 %v2125
        %v2176 = vunpack.c.l.b16 %v2126
        %v2177 = vunpack.c.h.b16 %v2126
        %v2178 = vunpack.c.l.b16 %v2127
        %v2179 = vunpack.c.h.b16 %v2127
        %v2180 = vunpack.c.l.b16 %v2128
        %v2181 = vunpack.c.h.b16 %v2128
        %v2182 = vunpack.c.l.b16 %v2129
        %v2183 = vunpack.c.h.b16 %v2129
        %v2184 = vpack.c.b16 %v2154, %v2152
        %v2185 = vpack.c.b16 %v2155, %v2153
        %v2186 = vpack.c.b16 %v2158, %v2156
        %v2187 = vpack.c.b16 %v2159, %v2157
        %v2188 = vpack.c.b16 %v2162, %v2160
        %v2189 = vpack.c.b16 %v2163, %v2161
        %v2190 = vpack.c.b16 %v2166, %v2164
        %v2191 = vpack.c.b16 %v2167, %v2165
        %v2192 = vpack.c.b16 %v2170, %v2168
        %v2193 = vpack.c.b16 %v2171, %v2169
        %v2194 = vpack.c.b16 %v2174, %v2172
        %v2195 = vpack.c.b16 %v2175, %v2173
        %v2196 = vpack.c.b16 %v2178, %v2176
        %v2197 = vpack.c.b16 %v2179, %v2177
        %v2198 = vpack.c.b16 %v2182, %v2180
        %v2199 = vpack.c.b16 %v2183, %v2181
        %2216 = vmatpush.bf16.msra.mxu0 %v2198
        %2217 = vmatpush.bf16.msra.mxu0 %v2196
        %2218 = vmatpush.bf16.msra.mxu0 %v2194
        %2219 = vmatpush.bf16.msra.mxu0 %v2192
        %2220 = vmatpush.bf16.msra.mxu0 %v2190
        %2221 = vmatpush.bf16.msra.mxu0 %v2188
        %2222 = vmatpush.bf16.msra.mxu0 %v2186
        %2223 = vmatpush.bf16.msra.mxu0 %v2184
        %2224 = vmatmul.bf16.gmra.mxu0 %v2113
        %v2225 = vpop.f32.mrf.mxu0
        %v2226 = vadd.f32 %v2132, %v2225
        %v2227 = vpop.f32.mrf.mxu0
        %v2228 = vadd.f32 %v2132, %v2227
        %2229 = vdwg.mxu0
        %2230 = vmatpush.bf16.msra.mxu0 %v2199
        %2231 = vmatpush.bf16.msra.mxu0 %v2197
        %2232 = vmatpush.bf16.msra.mxu0 %v2195
        %2233 = vmatpush.bf16.msra.mxu0 %v2193
        %2234 = vmatpush.bf16.msra.mxu0 %v2191
        %2235 = vmatpush.bf16.msra.mxu0 %v2189
        %2236 = vmatpush.bf16.msra.mxu0 %v2187
        %2237 = vmatpush.bf16.msra.mxu0 %v2185
        %2238 = vmatmul.bf16.gmra.mxu0 %v2113
        %v2239 = vpop.f32.mrf.mxu0
        %v2240 = vadd.f32 %v2133, %v2239
        %v2241 = vpop.f32.mrf.mxu0
        %v2242 = vadd.f32 %v2133, %v2241
        %2243 = vdwg.mxu0
        %v2244 = vxor.u32 %v2226, 2147483648
        %v2245 = vxor.u32 %v2228, 2147483648
        %v2246 = vmul.f32 %v2244, 1.442695
        %v2247 = vpow.pop %v2246
        %v2248 = vmul.f32 %v2245, 1.442695
        %v2249 = vpow.pop %v2248
        %v2250 = vadd.f32 %v2247, 1.0
        %v2251 = vadd.f32 %v2249, 1.0
        %v2252 = vrcp.pop %v2250
        %v2253 = vmul.f32 %v2250, %v2252
        %v2254 = vsub.f32 1.0, %v2253
        %v2255 = vmul.f32 %v2252, %v2254
        %v2256 = vadd.f32 %v2252, %v2255
        %vm2257 = vweird.f32 %v2250
        %vm2258 = vweird.f32 %v2252
        %vm2259 = vmor %vm2257, %vm2258
        %v2260 = vsel %vm2259, %v2252, %v2256
        %v2261 = vand.u32 2147483647, %v2250
        %vm2262 = vcmp.eq.f32.partialorder %v2261, 8.507059e+37
        %v2263 = vand.u32 %v2250, 2147483648
        %v2264 = vor.u32 1.1754944e-38, %v2263
        %v2265 = vsel %vm2262, %v2264, %v2260
        %v2266 = vmul.f32 1.0, %v2265
        %v2267 = vrcp.pop %v2251
        %v2268 = vmul.f32 %v2251, %v2267
        %v2269 = vsub.f32 1.0, %v2268
        %v2270 = vmul.f32 %v2267, %v2269
        %v2271 = vadd.f32 %v2267, %v2270
        %vm2272 = vweird.f32 %v2251
        %vm2273 = vweird.f32 %v2267
        %vm2274 = vmor %vm2272, %vm2273
        %v2275 = vsel %vm2274, %v2267, %v2271
        %v2276 = vand.u32 2147483647, %v2251
        %vm2277 = vcmp.eq.f32.partialorder %v2276, 8.507059e+37
        %v2278 = vand.u32 %v2251, 2147483648
        %v2279 = vor.u32 1.1754944e-38, %v2278
        %v2280 = vsel %vm2277, %v2279, %v2275
        %v2281 = vmul.f32 1.0, %v2280
        %v2282 = vpack.c.bf16 %v2281, %v2266
        %v2283 = vld [vmem:[#allocation13] sm:$0xf]
        %v2284 = vld [vmem:[#allocation13 + $0x4] sm:$0xf]
        %v2285 = vld [vmem:[#allocation13 + $0x8] sm:$0xf]
        %v2286 = vld [vmem:[#allocation13 + $0xc] sm:$0xf]
        %v2287 = vld [vmem:[#allocation13 + $0x10] sm:$0xf]
        %v2288 = vld [vmem:[#allocation13 + $0x14] sm:$0xf]
        %v2289 = vld [vmem:[#allocation13 + $0x18] sm:$0xf]
        %v2290 = vld [vmem:[#allocation13 + $0x1c] sm:$0xf]
        %v2291 = vld [vmem:[#allocation13 + $0x20] sm:$0xf]
        %v2292 = vld [vmem:[#allocation13 + $0x24] sm:$0xf]
        %v2293 = vld [vmem:[#allocation13 + $0x28] sm:$0xf]
        %v2294 = vld [vmem:[#allocation13 + $0x2c] sm:$0xf]
        %v2295 = vld [vmem:[#allocation13 + $0x30] sm:$0xf]
        %v2296 = vld [vmem:[#allocation13 + $0x34] sm:$0xf]
        %v2297 = vld [vmem:[#allocation13 + $0x38] sm:$0xf]
        %v2298 = vld [vmem:[#allocation13 + $0x3c] sm:$0xf]
        %v2299 = vld [vmem:[%s12] sm:$0x1]
        %v2301 = vperm.slane %v2299, 0
        %v2319 = vunpack.c.l.b16 %v2283
        %v2320 = vunpack.c.l.b16 %v2284
        %v2321 = vunpack.c.l.b16 %v2285
        %v2322 = vunpack.c.l.b16 %v2286
        %v2323 = vunpack.c.l.b16 %v2287
        %v2324 = vunpack.c.l.b16 %v2288
        %v2325 = vunpack.c.l.b16 %v2289
        %v2326 = vunpack.c.l.b16 %v2290
        %v2327 = vunpack.c.l.b16 %v2291
        %v2328 = vunpack.c.l.b16 %v2292
        %v2329 = vunpack.c.l.b16 %v2293
        %v2330 = vunpack.c.l.b16 %v2294
        %v2331 = vunpack.c.l.b16 %v2295
        %v2332 = vunpack.c.l.b16 %v2296
        %v2333 = vunpack.c.l.b16 %v2297
        %v2334 = vunpack.c.l.b16 %v2298
        %v2335 = vpack.c.b16 %v2320, %v2319
        %v2336 = vpack.c.b16 %v2322, %v2321
        %v2337 = vpack.c.b16 %v2324, %v2323
        %v2338 = vpack.c.b16 %v2326, %v2325
        %v2339 = vpack.c.b16 %v2328, %v2327
        %v2340 = vpack.c.b16 %v2330, %v2329
        %v2341 = vpack.c.b16 %v2332, %v2331
        %v2342 = vpack.c.b16 %v2334, %v2333
        %2351 = vmatpush.bf16.msra.mxu0 %v2342
        %2352 = vmatpush.bf16.msra.mxu0 %v2341
        %2353 = vmatpush.bf16.msra.mxu0 %v2340
        %2354 = vmatpush.bf16.msra.mxu0 %v2339
        %2355 = vmatpush.bf16.msra.mxu0 %v2338
        %2356 = vmatpush.bf16.msra.mxu0 %v2337
        %2357 = vmatpush.bf16.msra.mxu0 %v2336
        %2358 = vmatpush.bf16.msra.mxu0 %v2335
        %2359 = vmatmul.bf16.gmra.mxu0 %v2282
        %v2360 = vpop.f32.mrf.mxu0
        %v2361 = vadd.f32 %v2301, %v2360
        %v2362 = vpop.f32.mrf.mxu0
        %v2363 = vadd.f32 %v2301, %v2362
        %2364 = vdwg.mxu0
        %v2365 = vunpack.c.l.bf16 %v664
        %v2366 = vunpack.c.l.bf16 %v665
        %v2367 = vld [vmem:[%s13] sm:$0xff]
        %v2368 = vld [vmem:[%s14] sm:$0x1]
        %v2370 = vperm.slane %v2368, 0
        %v2373 = vsel %vm668, %v2365, 0
        %v2376 = vsel %vm668, %v2366, 0
        %2378 = vmatpush.msra.mxu0 0.0
        %2379 = vmatpush.msra.mxu0 0.0
        %2380 = vmatpush.msra.mxu0 0.0
        %2381 = vmatpush.msra.mxu0 0.0
        %2382 = vmatpush.msra.mxu0 0.0
        %2383 = vmatpush.msra.mxu0 0.0
        %2384 = vmatpush.msra.mxu0 0.0
        %2385 = vmatpush.msra.mxu0 0.0
        %2386 = vmatpush.msra.mxu0 0.0
        %2387 = vmatpush.msra.mxu0 0.0
        %2388 = vmatpush.msra.mxu0 0.0
        %2389 = vmatpush.msra.mxu0 0.0
        %2390 = vmatpush.msra.mxu0 0.0
        %2391 = vmatpush.msra.mxu0 0.0
        %2392 = vmatpush.msra.mxu0 0.0
        %2393 = vmatpush.msra.mxu0 %v2367
        %2394 = vmatmul.f32.gmra.mxu0 %v2373
        %v2395 = vpop.f32.mrf.mxu0
        %v2396 = vadd.f32 %v2370, %v2395
        %2397 = vmatmul.f32.gmra.mxu0 %v2376
        %v2398 = vpop.f32.mrf.mxu0
        %v2399 = vadd.f32 %v2370, %v2398
        %2400 = vdwg.mxu0
        %v2401 = vsub.f32 %v2240, %v2396
        %v2402 = vsub.f32 %v2242, %v2399
        %v2403 = vxor.u32 %v2401, 2147483648
        %v2404 = vxor.u32 %v2402, 2147483648
        %v2405 = vmul.f32 %v2403, 1.442695
        %v2406 = vpow.pop %v2405
        %v2407 = vmul.f32 %v2404, 1.442695
        %v2408 = vpow.pop %v2407
        %v2409 = vadd.f32 %v2406, 1.0
        %v2410 = vadd.f32 %v2408, 1.0
        %v2411 = vrcp.pop %v2409
        %v2412 = vmul.f32 %v2409, %v2411
        %v2413 = vsub.f32 1.0, %v2412
        %v2414 = vmul.f32 %v2411, %v2413
        %v2415 = vadd.f32 %v2411, %v2414
        %vm2416 = vweird.f32 %v2409
        %vm2417 = vweird.f32 %v2411
        %vm2418 = vmor %vm2416, %vm2417
        %v2419 = vsel %vm2418, %v2411, %v2415
        %v2420 = vand.u32 2147483647, %v2409
        %vm2421 = vcmp.eq.f32.partialorder %v2420, 8.507059e+37
        %v2422 = vand.u32 %v2409, 2147483648
        %v2423 = vor.u32 1.1754944e-38, %v2422
        %v2424 = vsel %vm2421, %v2423, %v2419
        %v2425 = vmul.f32 1.0, %v2424
        %v2426 = vrcp.pop %v2410
        %v2427 = vmul.f32 %v2410, %v2426
        %v2428 = vsub.f32 1.0, %v2427
        %v2429 = vmul.f32 %v2426, %v2428
        %v2430 = vadd.f32 %v2426, %v2429
        %vm2431 = vweird.f32 %v2410
        %vm2432 = vweird.f32 %v2426
        %vm2433 = vmor %vm2431, %vm2432
        %v2434 = vsel %vm2433, %v2426, %v2430
        %v2435 = vand.u32 2147483647, %v2410
        %vm2436 = vcmp.eq.f32.partialorder %v2435, 8.507059e+37
        %v2437 = vand.u32 %v2410, 2147483648
        %v2438 = vor.u32 1.1754944e-38, %v2437
        %v2439 = vsel %vm2436, %v2438, %v2434
        %v2440 = vmul.f32 1.0, %v2439
        %v2441 = vpack.c.bf16 %v2361, %v2361
        %v2442 = vpack.c.bf16 %v2363, %v2363
        %2443 = vst [vmem:[%s654] sm:$0xf] %v2441
        %2444 = vst [vmem:[%s654 + $0x8] sm:$0xf] %v2442
        %v2445 = vpack.c.bf16 %v2425, %v2425
        %v2446 = vpack.c.bf16 %v2440, %v2440
        %2447 = vst [vmem:[%s654 + $0x4] sm:$0xf] %v2445
        %2448 = vst [vmem:[%s654 + $0xc] sm:$0xf] %v2446
        %s2449 = sand.u32 %s368, 1
        %s2450 = scalar_lea.sflag [#allocation4], %s2449
        %s2451 = sand.u32 %s368, 1
        %s2452 = smul.addr %s2451, 16
        %s2453 = scalar_lea.vmem [#allocation14], %s2452
        // Predicated region
        $region109: #{tpu_custom_call.1} parent=79 // pred_check
          %p2454 = pneg %p378
        $region110: #{tpu_custom_call.1} parent=79 // pred_check_branch
          %2456 = sbr.rel (%p2454) target = $region112
        $region111: #{tpu_custom_call.1} parent=79 // pred_region
          %s2457 = smul.u32 2, %s35
          %2459 = vsyncadd %s2450, 0
          %s2460 = smul.addr %s2457, 2
          %s2461 = smul.addr %s2460, 4
          %s2462 = scalar_lea.hbm %s15, %s2461
          %s2463 = sshll.u32 %s2453, 4
          %s2464 = int_to_ptr.vmem [resolvable:$true] %s2463
          %s2465 = sshll.u32 %s2462, 4
          %s2466 = int_to_ptr.hbm [resolvable:$true] %s2465
          %2471 = dma.vmem_to_hbm [thread:$0]  %s2464, 256, %s2466, %s2450, 128, 128, 8
        $region112: #{tpu_custom_call.1} parent=79 // pred_fallthru
          _
      $region80: #{tpu_custom_call.1} parent=5 // pred_fallthru
        _
      %p2472 = scmp.le.s32.totalorder 2, %s30
      // Predicated region
      $region113: #{tpu_custom_call.1} parent=5 // pred_check
        %p2473 = pneg %p2472
      $region114: #{tpu_custom_call.1} parent=5 // pred_check_branch
        %2475 = sbr.rel (%p2473) target = $region116
      $region115: #{tpu_custom_call.1} parent=5 // pred_region
        %s2476 = ssub.s32 %s30, 2
        // Predicated region
        $region117: #{tpu_custom_call.1} parent=115 // pred_check
          %p2477 = pneg %p384
        $region118: #{tpu_custom_call.1} parent=115 // pred_check_branch
          %2479 = sbr.rel (%p2477) target = $region120
        $region119: #{tpu_custom_call.1} parent=115 // pred_region
          %s2480 = sand.u32 %s369, 1
          %s2481 = scalar_lea.sflag [#allocation4], %s2480
          %s2482 = sand.u32 %s369, 1
          %s2483 = smul.addr %s2482, 16
          %s2484 = scalar_lea.vmem [#allocation14], %s2483
          %2486 = dma.done %s2481, 256
        $region120: #{tpu_custom_call.1} parent=115 // pred_fallthru
          _
      $region116: #{tpu_custom_call.1} parent=5 // pred_fallthru
        _
    $region6: #{tpu_custom_call.1} parent=1 // loop_footer
      %s34 = sadd.s32 1, %s30
    $region7: #{tpu_custom_call.1} parent=1 // loop_footer_branch
      %29 = sbr.rel target = $region3
    $region8: #{tpu_custom_call.1} parent=1 // loop_exit
      _
    %2487 = vsyncpa [#allocation3], 1
    %s2488 = scalar_lea.sflag [#allocation3], 1
    %2489 = vsyncpa %s2488, 1
    %2490 = vsyncpa [#allocation6], 1
    %2491 = vsyncpa [#allocation9], 1
    %2492 = vsyncpa [#allocation12], 1
    %2493 = vsyncpa [#allocation4], 1
    %s2494 = scalar_lea.sflag [#allocation4], 1
    %2495 = vsyncpa %s2494, 1

// kernel: tpu_custom_call.1
$region0: #{tpu_custom_call.1}
  #allocation0 [shape = 'u32[]', space=smem, size = 0x4, offset = 0x4, fixed_abs, tag = 'smem constant byte address 0x4 - core index']
  #allocation1 [shape = 'u32[72,128]{1,0:T(1,128)}', space=vmem, size = 0x9000, scoped, tag = 'internal scratch']
  #allocation15 [shape = 's32[]', space=sflag, size = 0x4, offset = 0, fixed_abs, tag = 'sflag constant byte address 0x0 - dummy sync flag']
  %s0 = inlined_call_operand.vmem [shape: bf16[32,8], index: 0, kind: input, shape index: {}]
  %s1 = inlined_call_operand.hbm [shape: bf16[4,4,8,8], index: 1, kind: input, shape index: {}]
  %s2 = inlined_call_operand.hbm [shape: bf16[4,8,512], index: 2, kind: input, shape index: {}]
  %s3 = inlined_call_operand.vmem [shape: f32[1,512], index: 3, kind: input, shape index: {}]
  %s4 = inlined_call_operand.hbm [shape: bf16[2,128,256], index: 4, kind: input, shape index: {}]
  %s5 = inlined_call_operand.hbm [shape: bf16[2,128,256], index: 5, kind: input, shape index: {}]
  %s6 = inlined_call_operand.vmem [shape: f32[2,1,256], index: 6, kind: input, shape index: {}]
  %s7 = inlined_call_operand.vmem [shape: f32[2,1,256], index: 7, kind: input, shape index: {}]
  %s8 = inlined_call_operand.hbm [shape: bf16[2,128,128], index: 8, kind: input, shape index: {}]
  %s9 = inlined_call_operand.hbm [shape: bf16[128,256], index: 9, kind: input, shape index: {}]
  %s10 = inlined_call_operand.vmem [shape: f32[1,256], index: 10, kind: input, shape index: {}]
  %s11 = inlined_call_operand.hbm [shape: bf16[128,128], index: 11, kind: input, shape index: {}]
  %s12 = inlined_call_operand.vmem [shape: f32[1,128], index: 12, kind: input, shape index: {}]
  %s13 = inlined_call_operand.vmem [shape: f32[8,128], index: 13, kind: input, shape index: {}]
  %s14 = inlined_call_operand.vmem [shape: f32[1,128], index: 14, kind: input, shape index: {}]
  %s15 = inlined_call_operand.hbm [shape: bf16[32,256], index: 15, kind: output, shape index: {}]
  %s16 = sld [smem:[#allocation0]]
  $region121: #{tpu_custom_call.1} parent=0
    _
  %s18 = ssub.s32 1, %s16
  %s19 = scalar_select 0, %s18, %s16
  $region1: #{tpu_custom_call.1} parent=0
    #allocation2 [shape = 'u8[32768]{0}', space=vmem, size = 0x8000, scoped, tag = 'input window, operand 1']
    #allocation3 [shape = 's32[2]{0}', space=sflag, size = 0x8, scoped, tag = 'scoped memory for tpu_custom_call.1']
    #allocation4 [shape = 's32[2]{0}', space=sflag, size = 0x8, scoped, tag = 'scoped memory for tpu_custom_call.1']
    #allocation5 [shape = 'u8[32768]{0}', space=vmem, size = 0x8000, scoped, tag = 'input window, operand 2, single buffered']
    #allocation6 [shape = 's32[1]{0}', space=sflag, size = 0x4, scoped, tag = 'scoped memory for tpu_custom_call.1']
    #allocation7 [shape = 'u8[131072]{0}', space=vmem, size = 0x20000, scoped, tag = 'input window, operand 4, single buffered']
    #allocation8 [shape = 'u8[131072]{0}', space=vmem, size = 0x20000, scoped, tag = 'input window, operand 5, single buffered']
    #allocation9 [shape = 's32[1]{0}', space=sflag, size = 0x4, scoped, tag = 'scoped memory for tpu_custom_call.1']
    #allocation10 [shape = 'u8[65536]{0}', space=vmem, size = 0x10000, scoped, tag = 'input window, operand 8, single buffered']
    #allocation11 [shape = 'u8[65536]{0}', space=vmem, size = 0x10000, scoped, tag = 'input window, operand 9, single buffered']
    #allocation12 [shape = 's32[1]{0}', space=sflag, size = 0x4, scoped, tag = 'scoped memory for tpu_custom_call.1']
    #allocation13 [shape = 'u8[32768]{0}', space=vmem, size = 0x8000, scoped, tag = 'input window, operand 11, single buffered']
    #allocation14 [shape = 'u8[16384]{0}', space=vmem, size = 0x4000, scoped, tag = 'output window, operand 0']
    %20 = vsyncpa [#allocation3], 0
    %s21 = scalar_lea.sflag [#allocation3], 1
    %22 = vsyncpa %s21, 0
    %23 = vsyncpa [#allocation6], 0
    %24 = vsyncpa [#allocation9], 0
    %25 = vsyncpa [#allocation12], 0
    %26 = vsyncpa [#allocation4], 0
    %s27 = scalar_lea.sflag [#allocation4], 1
    %28 = vsyncpa %s27, 0
    loop: start=0, step=1, limit=4
    $region2: #{tpu_custom_call.1} parent=1 // loop_pre_header
      _
    $region3: #{tpu_custom_call.1} parent=1 // loop_header
      %s30 = sphi 0, %s34
      %p31 = scmp.ge.s32.totalorder %s30, 4
      %s40 = sphi 0, %s42
      %s43 = sphi 0, %s40
      %s44 = sphi 0, %s43
      %s60 = sphi 0, %s44
      %s66 = sphi 0, %s68
      %s69 = sphi 0, %s66
      %s70 = sphi 0, %s69
      %s86 = sphi 0, %s70
      %s90 = sphi 0, %s90
      %s92 = sphi 0, %s90
      %s93 = sphi 0, %s92
      %s107 = sphi 0, %s93
      %s111 = sphi 0, %s111
      %s113 = sphi 0, %s111
      %s114 = sphi 0, %s113
      %s128 = sphi 0, %s114
      %s132 = sphi 0, %s132
      %s134 = sphi 0, %s132
      %s135 = sphi 0, %s134
      %s149 = sphi 0, %s135
      %s153 = sphi 0, %s153
      %s155 = sphi 0, %s153
      %s156 = sphi 0, %s155
      %s170 = sphi 0, %s156
      %s174 = sphi 0, %s174
      %s176 = sphi 0, %s174
      %s177 = sphi 0, %s176
      %s191 = sphi 0, %s177
      %s195 = sphi 0, %s195
      %s197 = sphi 0, %s195
      %s198 = sphi 0, %s197
      %s212 = sphi 0, %s198
      %s216 = sphi 0, %s216
      %s218 = sphi 0, %s216
      %s219 = sphi 0, %s218
      %s233 = sphi 0, %s219
      %s237 = sphi 0, %s237
      %s239 = sphi 0, %s237
      %s240 = sphi 0, %s239
      %s254 = sphi 0, %s240
      %s258 = sphi 0, %s258
      %s260 = sphi 0, %s258
      %s261 = sphi 0, %s260
      %s275 = sphi 0, %s261
      %s279 = sphi 0, %s279
      %s281 = sphi 0, %s279
      %s282 = sphi 0, %s281
      %s296 = sphi 0, %s282
      %s300 = sphi 0, %s300
      %s302 = sphi 0, %s300
      %s303 = sphi 0, %s302
      %s317 = sphi 0, %s303
      %s321 = sphi 0, %s321
      %s323 = sphi 0, %s321
      %s324 = sphi 0, %s323
      %s338 = sphi 0, %s324
      %s342 = sphi 0, %s342
      %s344 = sphi 0, %s342
      %s345 = sphi 0, %s344
      %s359 = sphi 0, %s345
      %s365 = sphi 0, %s367
      %s368 = sphi 0, %s365
      %s369 = sphi 0, %s368
      %s385 = sphi 0, %s369
    $region4: #{tpu_custom_call.1} parent=1 // loop_header_branch
      %33 = sbr.rel (%p31) target = $region8
    $region5: #{tpu_custom_call.1} parent=1 // loop_body
      %s35 = ssub.s32 %s30, 1
      %s36 = ssub.s32 %s30, 2
      %s37 = sadd.s32 %s30, 1
      %s38 = ssub.s32 %s30, %s37
      %p39 = scmp.eq.s32.totalorder %s38, 0
      %s41 = sadd.s32 %s40, 1
      %s42 = scalar_select %p39, %s40, %s41
      %p45 = pneg %p39
      %p46 = scmp.eq.s32.totalorder %s30, 1
      %p47 = por %p45, %p46
      %p48 = scmp.ne.s32.totalorder %s40, %s43
      %p49 = scmp.eq.s32.totalorder %s30, 0
      %p50 = por %p48, %p49
      %p51 = scmp.ne.s32.totalorder %s40, %s43
      %p52 = scmp.eq.s32.totalorder %s35, 1
      %p53 = por %p51, %p52
      %p54 = scmp.ne.s32.totalorder %s43, %s44
      %p55 = scmp.eq.s32.totalorder %s35, 0
      %p56 = por %p54, %p55
      %p57 = scmp.ne.s32.totalorder %s43, %s44
      %p58 = scmp.eq.s32.totalorder %s36, 1
      %p59 = por %p57, %p58
      %p61 = scmp.ne.s32.totalorder %s44, %s60
      %p62 = scmp.eq.s32.totalorder %s36, 0
      %p63 = por %p61, %p62
      %s64 = ssub.s32 %s30, %s37
      %p65 = scmp.eq.s32.totalorder %s64, 0
      %s67 = sadd.s32 %s66, 1
      %s68 = scalar_select %p65, %s66, %s67
      %p71 = pneg %p65
      %p72 = scmp.eq.s32.totalorder %s30, 1
      %p73 = por %p71, %p72
      %p74 = scmp.ne.s32.totalorder %s66, %s69
      %p75 = scmp.eq.s32.totalorder %s30, 0
      %p76 = por %p74, %p75
      %p77 = scmp.ne.s32.totalorder %s66, %s69
      %p78 = scmp.eq.s32.totalorder %s35, 1
      %p79 = por %p77, %p78
      %p80 = scmp.ne.s32.totalorder %s69, %s70
      %p81 = scmp.eq.s32.totalorder %s35, 0
      %p82 = por %p80, %p81
      %p83 = scmp.ne.s32.totalorder %s69, %s70
      %p84 = scmp.eq.s32.totalorder %s36, 1
      %p85 = por %p83, %p84
      %p87 = scmp.ne.s32.totalorder %s70, %s86
      %p88 = scmp.eq.s32.totalorder %s36, 0
      %p89 = por %p87, %p88
      %s91 = sadd.s32 %s90, 1
      %p94 = scmp.eq.s32.totalorder %s30, 1
      %p95 = scmp.ne.s32.totalorder %s90, %s92
      %p96 = scmp.eq.s32.totalorder %s30, 0
      %p97 = por %p95, %p96
      %p98 = scmp.ne.s32.totalorder %s90, %s92
      %p99 = scmp.eq.s32.totalorder %s35, 1
      %p100 = por %p98, %p99
      %p101 = scmp.ne.s32.totalorder %s92, %s93
      %p102 = scmp.eq.s32.totalorder %s35, 0
      %p103 = por %p101, %p102
      %p104 = scmp.ne.s32.totalorder %s92, %s93
      %p105 = scmp.eq.s32.totalorder %s36, 1
      %p106 = por %p104, %p105
      %p108 = scmp.ne.s32.totalorder %s93, %s107
      %p109 = scmp.eq.s32.totalorder %s36, 0
      %p110 = por %p108, %p109
      %s112 = sadd.s32 %s111, 1
      %p115 = scmp.eq.s32.totalorder %s30, 1
      %p116 = scmp.ne.s32.totalorder %s111, %s113
      %p117 = scmp.eq.s32.totalorder %s30, 0
      %p118 = por %p116, %p117
      %p119 = scmp.ne.s32.totalorder %s111, %s113
      %p120 = scmp.eq.s32.totalorder %s35, 1
      %p121 = por %p119, %p120
      %p122 = scmp.ne.s32.totalorder %s113, %s114
      %p123 = scmp.eq.s32.totalorder %s35, 0
      %p124 = por %p122, %p123
      %p125 = scmp.ne.s32.totalorder %s113, %s114
      %p126 = scmp.eq.s32.totalorder %s36, 1
      %p127 = por %p125, %p126
      %p129 = scmp.ne.s32.totalorder %s114, %s128
      %p130 = scmp.eq.s32.totalorder %s36, 0
      %p131 = por %p129, %p130
      %s133 = sadd.s32 %s132, 1
      %p136 = scmp.eq.s32.totalorder %s30, 1
      %p137 = scmp.ne.s32.totalorder %s132, %s134
      %p138 = scmp.eq.s32.totalorder %s30, 0
      %p139 = por %p137, %p138
      %p140 = scmp.ne.s32.totalorder %s132, %s134
      %p141 = scmp.eq.s32.totalorder %s35, 1
      %p142 = por %p140, %p141
      %p143 = scmp.ne.s32.totalorder %s134, %s135
      %p144 = scmp.eq.s32.totalorder %s35, 0
      %p145 = por %p143, %p144
      %p146 = scmp.ne.s32.totalorder %s134, %s135
      %p147 = scmp.eq.s32.totalorder %s36, 1
      %p148 = por %p146, %p147
      %p150 = scmp.ne.s32.totalorder %s135, %s149
      %p151 = scmp.eq.s32.totalorder %s36, 0
      %p152 = por %p150, %p151
      %s154 = sadd.s32 %s153, 1
      %p157 = scmp.eq.s32.totalorder %s30, 1
      %p158 = scmp.ne.s32.totalorder %s153, %s155
      %p159 = scmp.eq.s32.totalorder %s30, 0
      %p160 = por %p158, %p159
      %p161 = scmp.ne.s32.totalorder %s153, %s155
      %p162 = scmp.eq.s32.totalorder %s35, 1
      %p163 = por %p161, %p162
      %p164 = scmp.ne.s32.totalorder %s155, %s156
      %p165 = scmp.eq.s32.totalorder %s35, 0
      %p166 = por %p164, %p165
      %p167 = scmp.ne.s32.totalorder %s155, %s156
      %p168 = scmp.eq.s32.totalorder %s36, 1
      %p169 = por %p167, %p168
      %p171 = scmp.ne.s32.totalorder %s156, %s170
      %p172 = scmp.eq.s32.totalorder %s36, 0
      %p173 = por %p171, %p172
      %s175 = sadd.s32 %s174, 1
      %p178 = scmp.eq.s32.totalorder %s30, 1
      %p179 = scmp.ne.s32.totalorder %s174, %s176
      %p180 = scmp.eq.s32.totalorder %s30, 0
      %p181 = por %p179, %p180
      %p182 = scmp.ne.s32.totalorder %s174, %s176
      %p183 = scmp.eq.s32.totalorder %s35, 1
      %p184 = por %p182, %p183
      %p185 = scmp.ne.s32.totalorder %s176, %s177
      %p186 = scmp.eq.s32.totalorder %s35, 0
      %p187 = por %p185, %p186
      %p188 = scmp.ne.s32.totalorder %s176, %s177
      %p189 = scmp.eq.s32.totalorder %s36, 1
      %p190 = por %p188, %p189
      %p192 = scmp.ne.s32.totalorder %s177, %s191
      %p193 = scmp.eq.s32.totalorder %s36, 0
      %p194 = por %p192, %p193
      %s196 = sadd.s32 %s195, 1
      %p199 = scmp.eq.s32.totalorder %s30, 1
      %p200 = scmp.ne.s32.totalorder %s195, %s197
      %p201 = scmp.eq.s32.totalorder %s30, 0
      %p202 = por %p200, %p201
      %p203 = scmp.ne.s32.totalorder %s195, %s197
      %p204 = scmp.eq.s32.totalorder %s35, 1
      %p205 = por %p203, %p204
      %p206 = scmp.ne.s32.totalorder %s197, %s198
      %p207 = scmp.eq.s32.totalorder %s35, 0
      %p208 = por %p206, %p207
      %p209 = scmp.ne.s32.totalorder %s197, %s198
      %p210 = scmp.eq.s32.totalorder %s36, 1
      %p211 = por %p209, %p210
      %p213 = scmp.ne.s32.totalorder %s198, %s212
      %p214 = scmp.eq.s32.totalorder %s36, 0
      %p215 = por %p213, %p214
      %s217 = sadd.s32 %s216, 1
      %p220 = scmp.eq.s32.totalorder %s30, 1
      %p221 = scmp.ne.s32.totalorder %s216, %s218
      %p222 = scmp.eq.s32.totalorder %s30, 0
      %p223 = por %p221, %p222
      %p224 = scmp.ne.s32.totalorder %s216, %s218
      %p225 = scmp.eq.s32.totalorder %s35, 1
      %p226 = por %p224, %p225
      %p227 = scmp.ne.s32.totalorder %s218, %s219
      %p228 = scmp.eq.s32.totalorder %s35, 0
      %p229 = por %p227, %p228
      %p230 = scmp.ne.s32.totalorder %s218, %s219
      %p231 = scmp.eq.s32.totalorder %s36, 1
      %p232 = por %p230, %p231
      %p234 = scmp.ne.s32.totalorder %s219, %s233
      %p235 = scmp.eq.s32.totalorder %s36, 0
      %p236 = por %p234, %p235
      %s238 = sadd.s32 %s237, 1
      %p241 = scmp.eq.s32.totalorder %s30, 1
      %p242 = scmp.ne.s32.totalorder %s237, %s239
      %p243 = scmp.eq.s32.totalorder %s30, 0
      %p244 = por %p242, %p243
      %p245 = scmp.ne.s32.totalorder %s237, %s239
      %p246 = scmp.eq.s32.totalorder %s35, 1
      %p247 = por %p245, %p246
      %p248 = scmp.ne.s32.totalorder %s239, %s240
      %p249 = scmp.eq.s32.totalorder %s35, 0
      %p250 = por %p248, %p249
      %p251 = scmp.ne.s32.totalorder %s239, %s240
      %p252 = scmp.eq.s32.totalorder %s36, 1
      %p253 = por %p251, %p252
      %p255 = scmp.ne.s32.totalorder %s240, %s254
      %p256 = scmp.eq.s32.totalorder %s36, 0
      %p257 = por %p255, %p256
      %s259 = sadd.s32 %s258, 1
      %p262 = scmp.eq.s32.totalorder %s30, 1
      %p263 = scmp.ne.s32.totalorder %s258, %s260
      %p264 = scmp.eq.s32.totalorder %s30, 0
      %p265 = por %p263, %p264
      %p266 = scmp.ne.s32.totalorder %s258, %s260
      %p267 = scmp.eq.s32.totalorder %s35, 1
      %p268 = por %p266, %p267
      %p269 = scmp.ne.s32.totalorder %s260, %s261
      %p270 = scmp.eq.s32.totalorder %s35, 0
      %p271 = por %p269, %p270
      %p272 = scmp.ne.s32.totalorder %s260, %s261
      %p273 = scmp.eq.s32.totalorder %s36, 1
      %p274 = por %p272, %p273
      %p276 = scmp.ne.s32.totalorder %s261, %s275
      %p277 = scmp.eq.s32.totalorder %s36, 0
      %p278 = por %p276, %p277
      %s280 = sadd.s32 %s279, 1
      %p283 = scmp.eq.s32.totalorder %s30, 1
      %p284 = scmp.ne.s32.totalorder %s279, %s281
      %p285 = scmp.eq.s32.totalorder %s30, 0
      %p286 = por %p284, %p285
      %p287 = scmp.ne.s32.totalorder %s279, %s281
      %p288 = scmp.eq.s32.totalorder %s35, 1
      %p289 = por %p287, %p288
      %p290 = scmp.ne.s32.totalorder %s281, %s282
      %p291 = scmp.eq.s32.totalorder %s35, 0
      %p292 = por %p290, %p291
      %p293 = scmp.ne.s32.totalorder %s281, %s282
      %p294 = scmp.eq.s32.totalorder %s36, 1
      %p295 = por %p293, %p294
      %p297 = scmp.ne.s32.totalorder %s282, %s296
      %p298 = scmp.eq.s32.totalorder %s36, 0
      %p299 = por %p297, %p298
      %s301 = sadd.s32 %s300, 1
      %p304 = scmp.eq.s32.totalorder %s30, 1
      %p305 = scmp.ne.s32.totalorder %s300, %s302
      %p306 = scmp.eq.s32.totalorder %s30, 0
      %p307 = por %p305, %p306
      %p308 = scmp.ne.s32.totalorder %s300, %s302
      %p309 = scmp.eq.s32.totalorder %s35, 1
      %p310 = por %p308, %p309
      %p311 = scmp.ne.s32.totalorder %s302, %s303
      %p312 = scmp.eq.s32.totalorder %s35, 0
      %p313 = por %p311, %p312
      %p314 = scmp.ne.s32.totalorder %s302, %s303
      %p315 = scmp.eq.s32.totalorder %s36, 1
      %p316 = por %p314, %p315
      %p318 = scmp.ne.s32.totalorder %s303, %s317
      %p319 = scmp.eq.s32.totalorder %s36, 0
      %p320 = por %p318, %p319
      %s322 = sadd.s32 %s321, 1
      %p325 = scmp.eq.s32.totalorder %s30, 1
      %p326 = scmp.ne.s32.totalorder %s321, %s323
      %p327 = scmp.eq.s32.totalorder %s30, 0
      %p328 = por %p326, %p327
      %p329 = scmp.ne.s32.totalorder %s321, %s323
      %p330 = scmp.eq.s32.totalorder %s35, 1
      %p331 = por %p329, %p330
      %p332 = scmp.ne.s32.totalorder %s323, %s324
      %p333 = scmp.eq.s32.totalorder %s35, 0
      %p334 = por %p332, %p333
      %p335 = scmp.ne.s32.totalorder %s323, %s324
      %p336 = scmp.eq.s32.totalorder %s36, 1
      %p337 = por %p335, %p336
      %p339 = scmp.ne.s32.totalorder %s324, %s338
      %p340 = scmp.eq.s32.totalorder %s36, 0
      %p341 = por %p339, %p340
      %s343 = sadd.s32 %s342, 1
      %p346 = scmp.eq.s32.totalorder %s30, 1
      %p347 = scmp.ne.s32.totalorder %s342, %s344
      %p348 = scmp.eq.s32.totalorder %s30, 0
      %p349 = por %p347, %p348
      %p350 = scmp.ne.s32.totalorder %s342, %s344
      %p351 = scmp.eq.s32.totalorder %s35, 1
      %p352 = por %p350, %p351
      %p353 = scmp.ne.s32.totalorder %s344, %s345
      %p354 = scmp.eq.s32.totalorder %s35, 0
      %p355 = por %p353, %p354
      %p356 = scmp.ne.s32.totalorder %s344, %s345
      %p357 = scmp.eq.s32.totalorder %s36, 1
      %p358 = por %p356, %p357
      %p360 = scmp.ne.s32.totalorder %s345, %s359
      %p361 = scmp.eq.s32.totalorder %s36, 0
      %p362 = por %p360, %p361
      %s363 = ssub.s32 %s30, %s37
      %p364 = scmp.eq.s32.totalorder %s363, 0
      %s366 = sadd.s32 %s365, 1
      %s367 = scalar_select %p364, %s365, %s366
      %p370 = pneg %p364
      %p371 = scmp.eq.s32.totalorder %s30, 1
      %p372 = por %p370, %p371
      %p373 = scmp.ne.s32.totalorder %s365, %s368
      %p374 = scmp.eq.s32.totalorder %s30, 0
      %p375 = por %p373, %p374
      %p376 = scmp.ne.s32.totalorder %s365, %s368
      %p377 = scmp.eq.s32.totalorder %s35, 1
      %p378 = por %p376, %p377
      %p379 = scmp.ne.s32.totalorder %s368, %s369
      %p380 = scmp.eq.s32.totalorder %s35, 0
      %p381 = por %p379, %p380
      %p382 = scmp.ne.s32.totalorder %s368, %s369
      %p383 = scmp.eq.s32.totalorder %s36, 1
      %p384 = por %p382, %p383
      %p386 = scmp.ne.s32.totalorder %s369, %s385
      %p387 = scmp.eq.s32.totalorder %s36, 0
      %p388 = por %p386, %p387
      %p389 = scmp.le.s32.totalorder 1, %s30
      %p390 = scmp.lt.s32.totalorder %s30, 3
      %p391 = pnand %p389, %p390
      %p392 = pneg %p391
      // Predicated region
      $region9: #{tpu_custom_call.1} parent=5 // pred_check
        _
      $region10: #{tpu_custom_call.1} parent=5 // pred_check_branch
        %394 = sbr.rel (%p391) target = $region12
      $region11: #{tpu_custom_call.1} parent=5 // pred_region
        %s395 = ssub.s32 %s30, 1
        // Predicated region
        $region13: #{tpu_custom_call.1} parent=11 // pred_check
          %p396 = pneg %p103
        $region14: #{tpu_custom_call.1} parent=11 // pred_check_branch
          %398 = sbr.rel (%p396) target = $region16
        $region15: #{tpu_custom_call.1} parent=11 // pred_region
          %400 = vsyncadd [#allocation6], 0
          %s401 = sshll.u32 %s2, 4
          %s402 = int_to_ptr.hbm [resolvable:$true] %s401
          %s403 = sshll.u32 [#allocation5], 4
          %s404 = int_to_ptr.vmem [resolvable:$true] %s403
          %409 = dma.hbm_to_vmem [thread:$0]  %s402, 1024, %s404, [#allocation6], 256, 256, 16
        $region16: #{tpu_custom_call.1} parent=11 // pred_fallthru
          _
        // Predicated region
        $region17: #{tpu_custom_call.1} parent=11 // pred_check
          %p410 = pneg %p124
        $region18: #{tpu_custom_call.1} parent=11 // pred_check_branch
          %412 = sbr.rel (%p410) target = $region20
        $region19: #{tpu_custom_call.1} parent=11 // pred_region
          _
        $region20: #{tpu_custom_call.1} parent=11 // pred_fallthru
          _
        // Predicated region
        $region21: #{tpu_custom_call.1} parent=11 // pred_check
          %p413 = pneg %p145
        $region22: #{tpu_custom_call.1} parent=11 // pred_check_branch
          %415 = sbr.rel (%p413) target = $region24
        $region23: #{tpu_custom_call.1} parent=11 // pred_region
          %417 = vsyncadd [#allocation6], 0
          %s418 = sshll.u32 %s4, 4
          %s419 = int_to_ptr.hbm [resolvable:$true] %s418
          %s420 = sshll.u32 [#allocation7], 4
          %s421 = int_to_ptr.vmem [resolvable:$true] %s420
          %426 = dma.hbm_to_vmem [thread:$0]  %s419, 4096, %s421, [#allocation6], 128, 128, 8
        $region24: #{tpu_custom_call.1} parent=11 // pred_fallthru
          _
        // Predicated region
        $region25: #{tpu_custom_call.1} parent=11 // pred_check
          %p427 = pneg %p166
        $region26: #{tpu_custom_call.1} parent=11 // pred_check_branch
          %429 = sbr.rel (%p427) target = $region28
        $region27: #{tpu_custom_call.1} parent=11 // pred_region
          %431 = vsyncadd [#allocation9], 0
          %s432 = sshll.u32 %s5, 4
          %s433 = int_to_ptr.hbm [resolvable:$true] %s432
          %s434 = sshll.u32 [#allocation8], 4
          %s435 = int_to_ptr.vmem [resolvable:$true] %s434
          %440 = dma.hbm_to_vmem [thread:$0]  %s433, 4096, %s435, [#allocation9], 128, 128, 8
        $region28: #{tpu_custom_call.1} parent=11 // pred_fallthru
          _
        // Predicated region
        $region29: #{tpu_custom_call.1} parent=11 // pred_check
          %p441 = pneg %p187
        $region30: #{tpu_custom_call.1} parent=11 // pred_check_branch
          %443 = sbr.rel (%p441) target = $region32
        $region31: #{tpu_custom_call.1} parent=11 // pred_region
          _
        $region32: #{tpu_custom_call.1} parent=11 // pred_fallthru
          _
        // Predicated region
        $region33: #{tpu_custom_call.1} parent=11 // pred_check
          %p444 = pneg %p208
        $region34: #{tpu_custom_call.1} parent=11 // pred_check_branch
          %446 = sbr.rel (%p444) target = $region36
        $region35: #{tpu_custom_call.1} parent=11 // pred_region
          _
        $region36: #{tpu_custom_call.1} parent=11 // pred_fallthru
          _
        // Predicated region
        $region37: #{tpu_custom_call.1} parent=11 // pred_check
          %p447 = pneg %p229
        $region38: #{tpu_custom_call.1} parent=11 // pred_check_branch
          %449 = sbr.rel (%p447) target = $region40
        $region39: #{tpu_custom_call.1} parent=11 // pred_region
          %451 = vsyncadd [#allocation9], 0
          %s452 = sshll.u32 %s8, 4
          %s453 = int_to_ptr.hbm [resolvable:$true] %s452
          %s454 = sshll.u32 [#allocation10], 4
          %s455 = int_to_ptr.vmem [resolvable:$true] %s454
          %460 = dma.hbm_to_vmem [thread:$0]  %s453, 2048, %s455, [#allocation9], 64, 64, 4
        $region40: #{tpu_custom_call.1} parent=11 // pred_fallthru
          _
        // Predicated region
        $region41: #{tpu_custom_call.1} parent=11 // pred_check
          %p461 = pneg %p250
        $region42: #{tpu_custom_call.1} parent=11 // pred_check_branch
          %463 = sbr.rel (%p461) target = $region44
        $region43: #{tpu_custom_call.1} parent=11 // pred_region
          %465 = vsyncadd [#allocation12], 0
          %s466 = sshll.u32 %s9, 4
          %s467 = int_to_ptr.hbm [resolvable:$true] %s466
          %s468 = sshll.u32 [#allocation11], 4
          %s469 = int_to_ptr.vmem [resolvable:$true] %s468
          %474 = dma.hbm_to_vmem [thread:$0]  %s467, 2048, %s469, [#allocation12], 128, 128, 8
        $region44: #{tpu_custom_call.1} parent=11 // pred_fallthru
          _
        // Predicated region
        $region45: #{tpu_custom_call.1} parent=11 // pred_check
          %p475 = pneg %p271
        $region46: #{tpu_custom_call.1} parent=11 // pred_check_branch
          %477 = sbr.rel (%p475) target = $region48
        $region47: #{tpu_custom_call.1} parent=11 // pred_region
          _
        $region48: #{tpu_custom_call.1} parent=11 // pred_fallthru
          _
        // Predicated region
        $region49: #{tpu_custom_call.1} parent=11 // pred_check
          %p478 = pneg %p292
        $region50: #{tpu_custom_call.1} parent=11 // pred_check_branch
          %480 = sbr.rel (%p478) target = $region52
        $region51: #{tpu_custom_call.1} parent=11 // pred_region
          %482 = vsyncadd [#allocation12], 0
          %s483 = sshll.u32 %s11, 4
          %s484 = int_to_ptr.hbm [resolvable:$true] %s483
          %s485 = sshll.u32 [#allocation13], 4
          %s486 = int_to_ptr.vmem [resolvable:$true] %s485
          %491 = dma.hbm_to_vmem [thread:$0]  %s484, 1024, %s486, [#allocation12], 64, 64, 4
        $region52: #{tpu_custom_call.1} parent=11 // pred_fallthru
          _
        // Predicated region
        $region53: #{tpu_custom_call.1} parent=11 // pred_check
          %p492 = pneg %p313
        $region54: #{tpu_custom_call.1} parent=11 // pred_check_branch
          %494 = sbr.rel (%p492) target = $region56
        $region55: #{tpu_custom_call.1} parent=11 // pred_region
          _
        $region56: #{tpu_custom_call.1} parent=11 // pred_fallthru
          _
        // Predicated region
        $region57: #{tpu_custom_call.1} parent=11 // pred_check
          %p495 = pneg %p334
        $region58: #{tpu_custom_call.1} parent=11 // pred_check_branch
          %497 = sbr.rel (%p495) target = $region60
        $region59: #{tpu_custom_call.1} parent=11 // pred_region
          _
        $region60: #{tpu_custom_call.1} parent=11 // pred_fallthru
          _
        // Predicated region
        $region61: #{tpu_custom_call.1} parent=11 // pred_check
          %p498 = pneg %p355
        $region62: #{tpu_custom_call.1} parent=11 // pred_check_branch
          %500 = sbr.rel (%p498) target = $region64
        $region63: #{tpu_custom_call.1} parent=11 // pred_region
          _
        $region64: #{tpu_custom_call.1} parent=11 // pred_fallthru
          _
      $region12: #{tpu_custom_call.1} parent=5 // pred_fallthru
        _
      %p501 = scmp.lt.s32.totalorder %s30, 2
      // Predicated region
      $region65: #{tpu_custom_call.1} parent=5 // pred_check
        %p502 = pneg %p501
      $region66: #{tpu_custom_call.1} parent=5 // pred_check_branch
        %504 = sbr.rel (%p502) target = $region68
      $region67: #{tpu_custom_call.1} parent=5 // pred_region
        // Predicated region
        $region69: #{tpu_custom_call.1} parent=67 // pred_check
          %p505 = pneg %p50
        $region70: #{tpu_custom_call.1} parent=67 // pred_check_branch
          %507 = sbr.rel (%p505) target = $region72
        $region71: #{tpu_custom_call.1} parent=67 // pred_region
          %s508 = smul.u32 2, %s30
          %p509 = scmp.lt.s32.totalorder %s508, 3
          %s510 = scalar_select %p509, %s508, 3
          %s511 = smul.addr %s510, 4
          %s512 = scalar_lea.vmem %s0, %s511
          %s513 = smul.u32 2, %s30
        $region72: #{tpu_custom_call.1} parent=67 // pred_fallthru
          _
        // Predicated region
        $region73: #{tpu_custom_call.1} parent=67 // pred_check
          %p514 = pneg %p76
        $region74: #{tpu_custom_call.1} parent=67 // pred_check_branch
          %516 = sbr.rel (%p514) target = $region76
        $region75: #{tpu_custom_call.1} parent=67 // pred_region
          #allocation16 [shape = 'u32[6]{0}', space=smem, size = 0x18, scoped, tag = 'DMA stride descriptor']
          %s517 = sand.u32 %s66, 1
          %s518 = scalar_lea.sflag [#allocation3], %s517
          %s519 = sand.u32 %s66, 1
          %s520 = smul.addr %s519, 32
          %s521 = scalar_lea.vmem [#allocation2], %s520
          %s522 = smul.u32 2, %s30
          %524 = vsyncadd %s518, 0
          %s525 = smul.addr %s522, 4
          %s526 = scalar_lea.hbm %s1, %s525
          %s528 = sshll.u32 1, 14
          %s529 = sxor.u32 4294967295, %s528
          %s531 = sld [smem:[#allocation0]]
          %s532 = sadd.s32 2, %s531
          %s534 = sshll.u32 7, 26
          %s535 = sxor.u32 4294967295, %s534
          %s536 = sand.u32 0, %s535
          %s537 = sshll.u32 %s532, 26
          %s538 = sor.u32 %s536, %s537
          %s539 = sshll.u32 %s526, 4
          %s540 = int_to_ptr.hbm [resolvable:$true] %s539
          %s541 = sshll.u32 %s521, 4
          %s542 = int_to_ptr.vmem [resolvable:$true] %s541
          %548 = sst [smem:[#allocation16]] 256
          %s549 = scalar_lea.smem [#allocation16], 1
          %550 = sst [smem:[%s549]] 128
          %s551 = scalar_lea.smem [#allocation16], 2
          %552 = sst [smem:[%s551]] 2
          %s553 = scalar_lea.smem [#allocation16], 3
          %554 = sst [smem:[%s553]] 64
          %s555 = scalar_lea.smem [#allocation16], 4
          %556 = sst [smem:[%s555]] 64
          %s557 = scalar_lea.smem [#allocation16], 5
          %558 = sst [smem:[%s557]] 4
          %560 = dma.general %s540, 512, %s542, %s518, [#allocation15], [#allocation16], %s538, 0
        $region76: #{tpu_custom_call.1} parent=67 // pred_fallthru
          _
      $region68: #{tpu_custom_call.1} parent=5 // pred_fallthru
        _
      %p561 = scmp.le.s32.totalorder 1, %s30
      %p562 = scmp.lt.s32.totalorder %s30, 3
      %p563 = pnand %p561, %p562
      %p564 = pneg %p563
      // Predicated region
      $region77: #{tpu_custom_call.1} parent=5 // pred_check
        _
      $region78: #{tpu_custom_call.1} parent=5 // pred_check_branch
        %566 = sbr.rel (%p563) target = $region80
      $region79: #{tpu_custom_call.1} parent=5 // pred_region
        %s567 = ssub.s32 %s30, 1
        %s568 = sand.u32 %s69, 1
        %s569 = scalar_lea.sflag [#allocation3], %s568
        %s570 = sand.u32 %s69, 1
        %s571 = smul.addr %s570, 32
        %s572 = scalar_lea.vmem [#allocation2], %s571
        // Predicated region
        $region81: #{tpu_custom_call.1} parent=79 // pred_check
          %p573 = pneg %p82
        $region82: #{tpu_custom_call.1} parent=79 // pred_check_branch
          %575 = sbr.rel (%p573) target = $region84
        $region83: #{tpu_custom_call.1} parent=79 // pred_region
          %577 = dma.done %s569, 512
        $region84: #{tpu_custom_call.1} parent=79 // pred_fallthru
          _
        // Predicated region
        $region85: #{tpu_custom_call.1} parent=79 // pred_check
          %p578 = pneg %p103
        $region86: #{tpu_custom_call.1} parent=79 // pred_check_branch
          %580 = sbr.rel (%p578) target = $region88
        $region87: #{tpu_custom_call.1} parent=79 // pred_region
          %582 = dma.done [#allocation6], 1024
        $region88: #{tpu_custom_call.1} parent=79 // pred_fallthru
          _
        // Predicated region
        $region89: #{tpu_custom_call.1} parent=79 // pred_check
          %p583 = pneg %p145
        $region90: #{tpu_custom_call.1} parent=79 // pred_check_branch
          %585 = sbr.rel (%p583) target = $region92
        $region91: #{tpu_custom_call.1} parent=79 // pred_region
          %587 = dma.done [#allocation6], 4096
        $region92: #{tpu_custom_call.1} parent=79 // pred_fallthru
          _
        // Predicated region
        $region93: #{tpu_custom_call.1} parent=79 // pred_check
          %p588 = pneg %p166
        $region94: #{tpu_custom_call.1} parent=79 // pred_check_branch
          %590 = sbr.rel (%p588) target = $region96
        $region95: #{tpu_custom_call.1} parent=79 // pred_region
          %592 = dma.done [#allocation9], 4096
        $region96: #{tpu_custom_call.1} parent=79 // pred_fallthru
          _
        // Predicated region
        $region97: #{tpu_custom_call.1} parent=79 // pred_check
          %p593 = pneg %p229
        $region98: #{tpu_custom_call.1} parent=79 // pred_check_branch
          %595 = sbr.rel (%p593) target = $region100
        $region99: #{tpu_custom_call.1} parent=79 // pred_region
          %597 = dma.done [#allocation9], 2048
        $region100: #{tpu_custom_call.1} parent=79 // pred_fallthru
          _
        // Predicated region
        $region101: #{tpu_custom_call.1} parent=79 // pred_check
          %p598 = pneg %p250
        $region102: #{tpu_custom_call.1} parent=79 // pred_check_branch
          %600 = sbr.rel (%p598) target = $region104
        $region103: #{tpu_custom_call.1} parent=79 // pred_region
          %602 = dma.done [#allocation12], 2048
        $region104: #{tpu_custom_call.1} parent=79 // pred_fallthru
          _
        // Predicated region
        $region105: #{tpu_custom_call.1} parent=79 // pred_check
          %p603 = pneg %p292
        $region106: #{tpu_custom_call.1} parent=79 // pred_check_branch
          %605 = sbr.rel (%p603) target = $region108
        $region107: #{tpu_custom_call.1} parent=79 // pred_region
          %607 = dma.done [#allocation12], 1024
        $region108: #{tpu_custom_call.1} parent=79 // pred_fallthru
          _
        %s608 = smul.u32 2, %s35
        %p609 = scmp.lt.s32.totalorder %s608, 3
        %s610 = scalar_select %p609, %s608, 3
        %s611 = smul.addr %s610, 4
        %s612 = scalar_lea.vmem %s0, %s611
        %p613 = pneg %p56
        %p614 = pneg %p53
        %s615 = sand.u32 %s69, 1
        %s616 = scalar_lea.sflag [#allocation3], %s615
        %s617 = sand.u32 %s69, 1
        %s618 = smul.addr %s617, 32
        %s619 = scalar_lea.vmem [#allocation2], %s618
        %p620 = pneg %p82
        %p621 = pneg %p79
        %p622 = pneg %p103
        %p623 = pneg %p100
        %p624 = pneg %p124
        %p625 = pneg %p121
        %p626 = pneg %p145
        %p627 = pneg %p142
        %p628 = pneg %p166
        %p629 = pneg %p163
        %p630 = pneg %p187
        %p631 = pneg %p184
        %p632 = pneg %p208
        %p633 = pneg %p205
        %p634 = pneg %p229
        %p635 = pneg %p226
        %p636 = pneg %p250
        %p637 = pneg %p247
        %p638 = pneg %p271
        %p639 = pneg %p268
        %p640 = pneg %p292
        %p641 = pneg %p289
        %p642 = pneg %p313
        %p643 = pneg %p310
        %p644 = pneg %p334
        %p645 = pneg %p331
        %p646 = pneg %p355
        %p647 = pneg %p352
        %p648 = pneg %p381
        %p649 = pneg %p378
        %s650 = sand.u32 %s368, 1
        %s651 = scalar_lea.sflag [#allocation4], %s650
        %s652 = sand.u32 %s368, 1
        %s653 = smul.addr %s652, 16
        %s654 = scalar_lea.vmem [#allocation14], %s653
        %s655 = smul.u32 2, %s35
        %p656 = scmp.lt.s32.totalorder %s655, 3
        %s657 = scalar_select %p656, %s655, 3
        %s658 = smul.addr %s657, 4
        %s659 = scalar_lea.vmem %s0, %s658
        %s660 = smul.u32 2, %s35
        %s661 = smul.u32 2, %s35
        %s662 = smul.u32 2, %s35
        %v664 = vld [vmem:[%s659] sm:$0xf]
        %v665 = vld [vmem:[%s659 + $0x4] sm:$0xf]
        %v666 = vld [vmem:[%s572] sm:$0xf]
        %v667 = vld [vmem:[%s572 + $0x4] sm:$0xf]
        %vm668 = vcmask 64512
        %v670 = vsel %vm668, %v666, 0
        %vm672 = vcmask 1043456
        %v674 = vsel %vm672, %v664, 0
        %676 = vmatpush.bf16.msra.mxu0 0
        %677 = vmatpush.bf16.msra.mxu0 0
        %678 = vmatpush.bf16.msra.mxu0 0
        %679 = vmatpush.bf16.msra.mxu0 0
        %680 = vmatpush.bf16.msra.mxu0 0
        %681 = vmatpush.bf16.msra.mxu0 0
        %682 = vmatpush.bf16.msra.mxu0 0
        %683 = vmatpush.bf16.msra.mxu0 %v674
        %684 = vmatmul.bf16.gmra.mxu0 %v670
        %v685 = vpop.f32.mrf.mxu0
        %v686 = vadd.f32 0.0, %v685
        %v687 = vpop.f32.mrf.mxu0
        %688 = vdwg.mxu0
        %v690 = vsel %vm668, %v667, 0
        %v693 = vsel %vm672, %v665, 0
        %695 = vmatpush.bf16.msra.mxu0 0
        %696 = vmatpush.bf16.msra.mxu0 0
        %697 = vmatpush.bf16.msra.mxu0 0
        %698 = vmatpush.bf16.msra.mxu0 0
        %699 = vmatpush.bf16.msra.mxu0 0
        %700 = vmatpush.bf16.msra.mxu0 0
        %701 = vmatpush.bf16.msra.mxu0 0
        %702 = vmatpush.bf16.msra.mxu0 %v693
        %703 = vmatmul.bf16.gmra.mxu0 %v690
        %v704 = vpop.f32.mrf.mxu0
        %v705 = vadd.f32 0.0, %v704
        %v706 = vpop.f32.mrf.mxu0
        %707 = vdwg.mxu0
        %v708 = vpack.c.bf16 %v705, %v686
        %v709 = vld [vmem:[#allocation5] sm:$0xff]
        %v710 = vld [vmem:[#allocation5 + $0x8] sm:$0xff]
        %s711 = scalar_lea.vmem %s572, 8 [#allocation2]
        %v712 = vld [vmem:[%s711] sm:$0xf]
        %v713 = vld [vmem:[%s711 + $0x4] sm:$0xf]
        %v715 = vsel %vm668, %v712, 0
        %717 = vmatpush.bf16.msra.mxu0 0
        %718 = vmatpush.bf16.msra.mxu0 0
        %719 = vmatpush.bf16.msra.mxu0 0
        %720 = vmatpush.bf16.msra.mxu0 0
        %721 = vmatpush.bf16.msra.mxu0 0
        %722 = vmatpush.bf16.msra.mxu0 0
        %723 = vmatpush.bf16.msra.mxu0 0
        %724 = vmatpush.bf16.msra.mxu0 %v674
        %725 = vmatmul.bf16.gmra.mxu0 %v715
        %v726 = vpop.f32.mrf.mxu0
        %v727 = vadd.f32 0.0, %v726
        %v728 = vpop.f32.mrf.mxu0
        %729 = vdwg.mxu0
        %v731 = vsel %vm668, %v713, 0
        %733 = vmatpush.bf16.msra.mxu0 0
        %734 = vmatpush.bf16.msra.mxu0 0
        %735 = vmatpush.bf16.msra.mxu0 0
        %736 = vmatpush.bf16.msra.mxu0 0
        %737 = vmatpush.bf16.msra.mxu0 0
        %738 = vmatpush.bf16.msra.mxu0 0
        %739 = vmatpush.bf16.msra.mxu0 0
        %740 = vmatpush.bf16.msra.mxu0 %v693
        %741 = vmatmul.bf16.gmra.mxu0 %v731
        %v742 = vpop.f32.mrf.mxu0
        %v743 = vadd.f32 0.0, %v742
        %v744 = vpop.f32.mrf.mxu0
        %745 = vdwg.mxu0
        %v746 = vpack.c.bf16 %v743, %v727
        %s747 = scalar_lea.vmem [#allocation5], 16
        %v748 = vld [vmem:[%s747] sm:$0xff]
        %v749 = vld [vmem:[%s747 + $0x8] sm:$0xff]
        %v752 = vunpack.c.l.b16 %v748
        %v753 = vunpack.c.h.b16 %v748
        %v754 = vunpack.c.l.b16 %v749
        %v755 = vunpack.c.h.b16 %v749
        %v756 = vpack.c.b16 %v752, %v752
        %v757 = vpack.c.b16 %v753, %v753
        %v758 = vpack.c.b16 %v754, %v754
        %v759 = vpack.c.b16 %v755, %v755
        %v761 = vsel %vm668, %v746, 0
        %v764 = vsel %vm672, %v756, 0
        %v767 = vsel %vm672, %v757, 0
        %v770 = vsel %vm672, %v758, 0
        %v773 = vsel %vm672, %v759, 0
        %775 = vmatpush.bf16.msra.mxu0 0
        %776 = vmatpush.bf16.msra.mxu0 0
        %777 = vmatpush.bf16.msra.mxu0 0
        %778 = vmatpush.bf16.msra.mxu0 0
        %779 = vmatpush.bf16.msra.mxu0 0
        %780 = vmatpush.bf16.msra.mxu0 0
        %781 = vmatpush.bf16.msra.mxu0 0
        %782 = vmatpush.bf16.msra.mxu0 %v764
        %783 = vmatmul.bf16.gmra.mxu0 %v761
        %v784 = vpop.f32.mrf.mxu0
        %v785 = vadd.f32 0.0, %v784
        %v786 = vpop.f32.mrf.mxu0
        %v787 = vadd.f32 0.0, %v786
        %788 = vdwg.mxu0
        %789 = vmatpush.bf16.msra.mxu0 0
        %790 = vmatpush.bf16.msra.mxu0 0
        %791 = vmatpush.bf16.msra.mxu0 0
        %792 = vmatpush.bf16.msra.mxu0 0
        %793 = vmatpush.bf16.msra.mxu0 0
        %794 = vmatpush.bf16.msra.mxu0 0
        %795 = vmatpush.bf16.msra.mxu0 0
        %796 = vmatpush.bf16.msra.mxu0 %v767
        %797 = vmatmul.bf16.gmra.mxu0 %v761
        %v798 = vpop.f32.mrf.mxu0
        %v799 = vadd.f32 0.0, %v798
        %v800 = vpop.f32.mrf.mxu0
        %v801 = vadd.f32 0.0, %v800
        %802 = vdwg.mxu0
        %803 = vmatpush.bf16.msra.mxu0 0
        %804 = vmatpush.bf16.msra.mxu0 0
        %805 = vmatpush.bf16.msra.mxu0 0
        %806 = vmatpush.bf16.msra.mxu0 0
        %807 = vmatpush.bf16.msra.mxu0 0
        %808 = vmatpush.bf16.msra.mxu0 0
        %809 = vmatpush.bf16.msra.mxu0 0
        %810 = vmatpush.bf16.msra.mxu0 %v770
        %811 = vmatmul.bf16.gmra.mxu0 %v761
        %v812 = vpop.f32.mrf.mxu0
        %v813 = vadd.f32 0.0, %v812
        %v814 = vpop.f32.mrf.mxu0
        %v815 = vadd.f32 0.0, %v814
        %816 = vdwg.mxu0
        %817 = vmatpush.bf16.msra.mxu0 0
        %818 = vmatpush.bf16.msra.mxu0 0
        %819 = vmatpush.bf16.msra.mxu0 0
        %820 = vmatpush.bf16.msra.mxu0 0
        %821 = vmatpush.bf16.msra.mxu0 0
        %822 = vmatpush.bf16.msra.mxu0 0
        %823 = vmatpush.bf16.msra.mxu0 0
        %824 = vmatpush.bf16.msra.mxu0 %v773
        %825 = vmatmul.bf16.gmra.mxu0 %v761
        %v826 = vpop.f32.mrf.mxu0
        %v827 = vadd.f32 0.0, %v826
        %v828 = vpop.f32.mrf.mxu0
        %v829 = vadd.f32 0.0, %v828
        %830 = vdwg.mxu0
        %v833 = vunpack.c.l.b16 %v709
        %v834 = vunpack.c.h.b16 %v709
        %v835 = vunpack.c.l.b16 %v710
        %v836 = vunpack.c.h.b16 %v710
        %v837 = vpack.c.b16 %v833, %v833
        %v838 = vpack.c.b16 %v834, %v834
        %v839 = vpack.c.b16 %v835, %v835
        %v840 = vpack.c.b16 %v836, %v836
        %v842 = vsel %vm668, %v708, 0
        %v845 = vsel %vm672, %v837, 0
        %v848 = vsel %vm672, %v838, 0
        %v851 = vsel %vm672, %v839, 0
        %v854 = vsel %vm672, %v840, 0
        %856 = vmatpush.bf16.msra.mxu0 0
        %857 = vmatpush.bf16.msra.mxu0 0
        %858 = vmatpush.bf16.msra.mxu0 0
        %859 = vmatpush.bf16.msra.mxu0 0
        %860 = vmatpush.bf16.msra.mxu0 0
        %861 = vmatpush.bf16.msra.mxu0 0
        %862 = vmatpush.bf16.msra.mxu0 0
        %863 = vmatpush.bf16.msra.mxu0 %v845
        %864 = vmatmul.bf16.gmra.mxu0 %v842
        %v865 = vpop.f32.mrf.mxu0
        %v866 = vadd.f32 %v785, %v865
        %v867 = vpop.f32.mrf.mxu0
        %v868 = vadd.f32 %v787, %v867
        %869 = vdwg.mxu0
        %870 = vmatpush.bf16.msra.mxu0 0
        %871 = vmatpush.bf16.msra.mxu0 0
        %872 = vmatpush.bf16.msra.mxu0 0
        %873 = vmatpush.bf16.msra.mxu0 0
        %874 = vmatpush.bf16.msra.mxu0 0
        %875 = vmatpush.bf16.msra.mxu0 0
        %876 = vmatpush.bf16.msra.mxu0 0
        %877 = vmatpush.bf16.msra.mxu0 %v848
        %878 = vmatmul.bf16.gmra.mxu0 %v842
        %v879 = vpop.f32.mrf.mxu0
        %v880 = vadd.f32 %v799, %v879
        %v881 = vpop.f32.mrf.mxu0
        %v882 = vadd.f32 %v801, %v881
        %883 = vdwg.mxu0
        %884 = vmatpush.bf16.msra.mxu0 0
        %885 = vmatpush.bf16.msra.mxu0 0
        %886 = vmatpush.bf16.msra.mxu0 0
        %887 = vmatpush.bf16.msra.mxu0 0
        %888 = vmatpush.bf16.msra.mxu0 0
        %889 = vmatpush.bf16.msra.mxu0 0
        %890 = vmatpush.bf16.msra.mxu0 0
        %891 = vmatpush.bf16.msra.mxu0 %v851
        %892 = vmatmul.bf16.gmra.mxu0 %v842
        %v893 = vpop.f32.mrf.mxu0
        %v894 = vadd.f32 %v813, %v893
        %v895 = vpop.f32.mrf.mxu0
        %v896 = vadd.f32 %v815, %v895
        %897 = vdwg.mxu0
        %898 = vmatpush.bf16.msra.mxu0 0
        %899 = vmatpush.bf16.msra.mxu0 0
        %900 = vmatpush.bf16.msra.mxu0 0
        %901 = vmatpush.bf16.msra.mxu0 0
        %902 = vmatpush.bf16.msra.mxu0 0
        %903 = vmatpush.bf16.msra.mxu0 0
        %904 = vmatpush.bf16.msra.mxu0 0
        %905 = vmatpush.bf16.msra.mxu0 %v854
        %906 = vmatmul.bf16.gmra.mxu0 %v842
        %v907 = vpop.f32.mrf.mxu0
        %v908 = vadd.f32 %v827, %v907
        %v909 = vpop.f32.mrf.mxu0
        %v910 = vadd.f32 %v829, %v909
        %911 = vdwg.mxu0
        %s912 = scalar_lea.vmem %s572, 16 [#allocation2]
        %v913 = vld [vmem:[%s912] sm:$0xf]
        %v914 = vld [vmem:[%s912 + $0x4] sm:$0xf]
        %v916 = vsel %vm668, %v913, 0
        %918 = vmatpush.bf16.msra.mxu0 0
        %919 = vmatpush.bf16.msra.mxu0 0
        %920 = vmatpush.bf16.msra.mxu0 0
        %921 = vmatpush.bf16.msra.mxu0 0
        %922 = vmatpush.bf16.msra.mxu0 0
        %923 = vmatpush.bf16.msra.mxu0 0
        %924 = vmatpush.bf16.msra.mxu0 0
        %925 = vmatpush.bf16.msra.mxu0 %v674
        %926 = vmatmul.bf16.gmra.mxu0 %v916
        %v927 = vpop.f32.mrf.mxu0
        %v928 = vadd.f32 0.0, %v927
        %v929 = vpop.f32.mrf.mxu0
        %930 = vdwg.mxu0
        %v932 = vsel %vm668, %v914, 0
        %934 = vmatpush.bf16.msra.mxu0 0
        %935 = vmatpush.bf16.msra.mxu0 0
        %936 = vmatpush.bf16.msra.mxu0 0
        %937 = vmatpush.bf16.msra.mxu0 0
        %938 = vmatpush.bf16.msra.mxu0 0
        %939 = vmatpush.bf16.msra.mxu0 0
        %940 = vmatpush.bf16.msra.mxu0 0
        %941 = vmatpush.bf16.msra.mxu0 %v693
        %942 = vmatmul.bf16.gmra.mxu0 %v932
        %v943 = vpop.f32.mrf.mxu0
        %v944 = vadd.f32 0.0, %v943
        %v945 = vpop.f32.mrf.mxu0
        %946 = vdwg.mxu0
        %v947 = vpack.c.bf16 %v944, %v928
        %s948 = scalar_lea.vmem [#allocation5], 32
        %v949 = vld [vmem:[%s948] sm:$0xff]
        %v950 = vld [vmem:[%s948 + $0x8] sm:$0xff]
        %v953 = vunpack.c.l.b16 %v949
        %v954 = vunpack.c.h.b16 %v949
        %v955 = vunpack.c.l.b16 %v950
        %v956 = vunpack.c.h.b16 %v950
        %v957 = vpack.c.b16 %v953, %v953
        %v958 = vpack.c.b16 %v954, %v954
        %v959 = vpack.c.b16 %v955, %v955
        %v960 = vpack.c.b16 %v956, %v956
        %v962 = vsel %vm668, %v947, 0
        %v965 = vsel %vm672, %v957, 0
        %v968 = vsel %vm672, %v958, 0
        %v971 = vsel %vm672, %v959, 0
        %v974 = vsel %vm672, %v960, 0
        %976 = vmatpush.bf16.msra.mxu0 0
        %977 = vmatpush.bf16.msra.mxu0 0
        %978 = vmatpush.bf16.msra.mxu0 0
        %979 = vmatpush.bf16.msra.mxu0 0
        %980 = vmatpush.bf16.msra.mxu0 0
        %981 = vmatpush.bf16.msra.mxu0 0
        %982 = vmatpush.bf16.msra.mxu0 0
        %983 = vmatpush.bf16.msra.mxu0 %v965
        %984 = vmatmul.bf16.gmra.mxu0 %v962
        %v985 = vpop.f32.mrf.mxu0
        %v986 = vadd.f32 0.0, %v985
        %v987 = vpop.f32.mrf.mxu0
        %v988 = vadd.f32 0.0, %v987
        %989 = vdwg.mxu0
        %990 = vmatpush.bf16.msra.mxu0 0
        %991 = vmatpush.bf16.msra.mxu0 0
        %992 = vmatpush.bf16.msra.mxu0 0
        %993 = vmatpush.bf16.msra.mxu0 0
        %994 = vmatpush.bf16.msra.mxu0 0
        %995 = vmatpush.bf16.msra.mxu0 0
        %996 = vmatpush.bf16.msra.mxu0 0
        %997 = vmatpush.bf16.msra.mxu0 %v968
        %998 = vmatmul.bf16.gmra.mxu0 %v962
        %v999 = vpop.f32.mrf.mxu0
        %v1000 = vadd.f32 0.0, %v999
        %v1001 = vpop.f32.mrf.mxu0
        %v1002 = vadd.f32 0.0, %v1001
        %1003 = vdwg.mxu0
        %1004 = vmatpush.bf16.msra.mxu0 0
        %1005 = vmatpush.bf16.msra.mxu0 0
        %1006 = vmatpush.bf16.msra.mxu0 0
        %1007 = vmatpush.bf16.msra.mxu0 0
        %1008 = vmatpush.bf16.msra.mxu0 0
        %1009 = vmatpush.bf16.msra.mxu0 0
        %1010 = vmatpush.bf16.msra.mxu0 0
        %1011 = vmatpush.bf16.msra.mxu0 %v971
        %1012 = vmatmul.bf16.gmra.mxu0 %v962
        %v1013 = vpop.f32.mrf.mxu0
        %v1014 = vadd.f32 0.0, %v1013
        %v1015 = vpop.f32.mrf.mxu0
        %v1016 = vadd.f32 0.0, %v1015
        %1017 = vdwg.mxu0
        %1018 = vmatpush.bf16.msra.mxu0 0
        %1019 = vmatpush.bf16.msra.mxu0 0
        %1020 = vmatpush.bf16.msra.mxu0 0
        %1021 = vmatpush.bf16.msra.mxu0 0
        %1022 = vmatpush.bf16.msra.mxu0 0
        %1023 = vmatpush.bf16.msra.mxu0 0
        %1024 = vmatpush.bf16.msra.mxu0 0
        %1025 = vmatpush.bf16.msra.mxu0 %v974
        %1026 = vmatmul.bf16.gmra.mxu0 %v962
        %v1027 = vpop.f32.mrf.mxu0
        %v1028 = vadd.f32 0.0, %v1027
        %v1029 = vpop.f32.mrf.mxu0
        %v1030 = vadd.f32 0.0, %v1029
        %1031 = vdwg.mxu0
        %v1032 = vadd.f32 %v866, %v986
        %v1033 = vadd.f32 %v880, %v1000
        %v1034 = vadd.f32 %v894, %v1014
        %v1035 = vadd.f32 %v908, %v1028
        %v1036 = vadd.f32 %v868, %v988
        %v1037 = vadd.f32 %v882, %v1002
        %v1038 = vadd.f32 %v896, %v1016
        %v1039 = vadd.f32 %v910, %v1030
        %s1040 = scalar_lea.vmem %s572, 24 [#allocation2]
        %v1041 = vld [vmem:[%s1040] sm:$0xf]
        %v1042 = vld [vmem:[%s1040 + $0x4] sm:$0xf]
        %v1044 = vsel %vm668, %v1041, 0
        %1046 = vmatpush.bf16.msra.mxu0 0
        %1047 = vmatpush.bf16.msra.mxu0 0
        %1048 = vmatpush.bf16.msra.mxu0 0
        %1049 = vmatpush.bf16.msra.mxu0 0
        %1050 = vmatpush.bf16.msra.mxu0 0
        %1051 = vmatpush.bf16.msra.mxu0 0
        %1052 = vmatpush.bf16.msra.mxu0 0
        %1053 = vmatpush.bf16.msra.mxu0 %v674
        %1054 = vmatmul.bf16.gmra.mxu0 %v1044
        %v1055 = vpop.f32.mrf.mxu0
        %v1056 = vadd.f32 0.0, %v1055
        %v1057 = vpop.f32.mrf.mxu0
        %1058 = vdwg.mxu0
        %v1060 = vsel %vm668, %v1042, 0
        %1062 = vmatpush.bf16.msra.mxu0 0
        %1063 = vmatpush.bf16.msra.mxu0 0
        %1064 = vmatpush.bf16.msra.mxu0 0
        %1065 = vmatpush.bf16.msra.mxu0 0
        %1066 = vmatpush.bf16.msra.mxu0 0
        %1067 = vmatpush.bf16.msra.mxu0 0
        %1068 = vmatpush.bf16.msra.mxu0 0
        %1069 = vmatpush.bf16.msra.mxu0 %v693
        %1070 = vmatmul.bf16.gmra.mxu0 %v1060
        %v1071 = vpop.f32.mrf.mxu0
        %v1072 = vadd.f32 0.0, %v1071
        %v1073 = vpop.f32.mrf.mxu0
        %1074 = vdwg.mxu0
        %v1075 = vpack.c.bf16 %v1072, %v1056
        %s1076 = scalar_lea.vmem [#allocation5], 48
        %v1077 = vld [vmem:[%s1076] sm:$0xff]
        %v1078 = vld [vmem:[%s1076 + $0x8] sm:$0xff]
        %v1081 = vunpack.c.l.b16 %v1077
        %v1082 = vunpack.c.h.b16 %v1077
        %v1083 = vunpack.c.l.b16 %v1078
        %v1084 = vunpack.c.h.b16 %v1078
        %v1085 = vpack.c.b16 %v1081, %v1081
        %v1086 = vpack.c.b16 %v1082, %v1082
        %v1087 = vpack.c.b16 %v1083, %v1083
        %v1088 = vpack.c.b16 %v1084, %v1084
        %v1090 = vsel %vm668, %v1075, 0
        %v1093 = vsel %vm672, %v1085, 0
        %v1096 = vsel %vm672, %v1086, 0
        %v1099 = vsel %vm672, %v1087, 0
        %v1102 = vsel %vm672, %v1088, 0
        %1104 = vmatpush.bf16.msra.mxu0 0
        %1105 = vmatpush.bf16.msra.mxu0 0
        %1106 = vmatpush.bf16.msra.mxu0 0
        %1107 = vmatpush.bf16.msra.mxu0 0
        %1108 = vmatpush.bf16.msra.mxu0 0
        %1109 = vmatpush.bf16.msra.mxu0 0
        %1110 = vmatpush.bf16.msra.mxu0 0
        %1111 = vmatpush.bf16.msra.mxu0 %v1093
        %1112 = vmatmul.bf16.gmra.mxu0 %v1090
        %v1113 = vpop.f32.mrf.mxu0
        %v1114 = vadd.f32 0.0, %v1113
        %v1115 = vpop.f32.mrf.mxu0
        %v1116 = vadd.f32 0.0, %v1115
        %1117 = vdwg.mxu0
        %1118 = vmatpush.bf16.msra.mxu0 0
        %1119 = vmatpush.bf16.msra.mxu0 0
        %1120 = vmatpush.bf16.msra.mxu0 0
        %1121 = vmatpush.bf16.msra.mxu0 0
        %1122 = vmatpush.bf16.msra.mxu0 0
        %1123 = vmatpush.bf16.msra.mxu0 0
        %1124 = vmatpush.bf16.msra.mxu0 0
        %1125 = vmatpush.bf16.msra.mxu0 %v1096
        %1126 = vmatmul.bf16.gmra.mxu0 %v1090
        %v1127 = vpop.f32.mrf.mxu0
        %v1128 = vadd.f32 0.0, %v1127
        %v1129 = vpop.f32.mrf.mxu0
        %v1130 = vadd.f32 0.0, %v1129
        %1131 = vdwg.mxu0
        %1132 = vmatpush.bf16.msra.mxu0 0
        %1133 = vmatpush.bf16.msra.mxu0 0
        %1134 = vmatpush.bf16.msra.mxu0 0
        %1135 = vmatpush.bf16.msra.mxu0 0
        %1136 = vmatpush.bf16.msra.mxu0 0
        %1137 = vmatpush.bf16.msra.mxu0 0
        %1138 = vmatpush.bf16.msra.mxu0 0
        %1139 = vmatpush.bf16.msra.mxu0 %v1099
        %1140 = vmatmul.bf16.gmra.mxu0 %v1090
        %v1141 = vpop.f32.mrf.mxu0
        %v1142 = vadd.f32 0.0, %v1141
        %v1143 = vpop.f32.mrf.mxu0
        %v1144 = vadd.f32 0.0, %v1143
        %1145 = vdwg.mxu0
        %1146 = vmatpush.bf16.msra.mxu0 0
        %1147 = vmatpush.bf16.msra.mxu0 0
        %1148 = vmatpush.bf16.msra.mxu0 0
        %1149 = vmatpush.bf16.msra.mxu0 0
        %1150 = vmatpush.bf16.msra.mxu0 0
        %1151 = vmatpush.bf16.msra.mxu0 0
        %1152 = vmatpush.bf16.msra.mxu0 0
        %1153 = vmatpush.bf16.msra.mxu0 %v1102
        %1154 = vmatmul.bf16.gmra.mxu0 %v1090
        %v1155 = vpop.f32.mrf.mxu0
        %v1156 = vadd.f32 0.0, %v1155
        %v1157 = vpop.f32.mrf.mxu0
        %v1158 = vadd.f32 0.0, %v1157
        %1159 = vdwg.mxu0
        %v1160 = vadd.f32 %v1032, %v1114
        %v1161 = vadd.f32 %v1033, %v1128
        %v1162 = vadd.f32 %v1034, %v1142
        %v1163 = vadd.f32 %v1035, %v1156
        %v1164 = vadd.f32 %v1036, %v1116
        %v1165 = vadd.f32 %v1037, %v1130
        %v1166 = vadd.f32 %v1038, %v1144
        %v1167 = vadd.f32 %v1039, %v1158
        %v1168 = vld [vmem:[%s3] sm:$0xf]
        %v1170 = vperm.slane %v1168, 0
        %v1171 = vperm.slane %v1168, 1
        %v1172 = vperm.slane %v1168, 2
        %v1173 = vperm.slane %v1168, 3
        %v1178 = vadd.f32 %v1160, %v1170
        %v1179 = vadd.f32 %v1161, %v1171
        %v1180 = vadd.f32 %v1162, %v1172
        %v1181 = vadd.f32 %v1163, %v1173
        %v1182 = vadd.f32 %v1164, %v1170
        %v1183 = vadd.f32 %v1165, %v1171
        %v1184 = vadd.f32 %v1166, %v1172
        %v1185 = vadd.f32 %v1167, %v1173
        %v1186 = vxor.u32 %v1179, 2147483648
        %v1187 = vxor.u32 %v1183, 2147483648
        %v1188 = vmul.f32 %v1186, 1.442695
        %v1189 = vpow.pop %v1188
        %v1190 = vmul.f32 %v1187, 1.442695
        %v1191 = vpow.pop %v1190
        %v1192 = vadd.f32 %v1189, 1.0
        %v1193 = vadd.f32 %v1191, 1.0
        %v1194 = vrcp.pop %v1192
        %v1195 = vmul.f32 %v1192, %v1194
        %v1196 = vsub.f32 1.0, %v1195
        %v1197 = vmul.f32 %v1194, %v1196
        %v1198 = vadd.f32 %v1194, %v1197
        %vm1199 = vweird.f32 %v1192
        %vm1200 = vweird.f32 %v1194
        %vm1201 = vmor %vm1199, %vm1200
        %v1202 = vsel %vm1201, %v1194, %v1198
        %v1203 = vand.u32 2147483647, %v1192
        %vm1204 = vcmp.eq.f32.partialorder %v1203, 8.507059e+37
        %v1205 = vand.u32 %v1192, 2147483648
        %v1206 = vor.u32 1.1754944e-38, %v1205
        %v1207 = vsel %vm1204, %v1206, %v1202
        %v1208 = vmul.f32 1.0, %v1207
        %v1209 = vrcp.pop %v1193
        %v1210 = vmul.f32 %v1193, %v1209
        %v1211 = vsub.f32 1.0, %v1210
        %v1212 = vmul.f32 %v1209, %v1211
        %v1213 = vadd.f32 %v1209, %v1212
        %vm1214 = vweird.f32 %v1193
        %vm1215 = vweird.f32 %v1209
        %vm1216 = vmor %vm1214, %vm1215
        %v1217 = vsel %vm1216, %v1209, %v1213
        %v1218 = vand.u32 2147483647, %v1193
        %vm1219 = vcmp.eq.f32.partialorder %v1218, 8.507059e+37
        %v1220 = vand.u32 %v1193, 2147483648
        %v1221 = vor.u32 1.1754944e-38, %v1220
        %v1222 = vsel %vm1219, %v1221, %v1217
        %v1223 = vmul.f32 1.0, %v1222
        %v1224 = vmul.f32 %v1178, %v1208
        %v1225 = vmul.f32 %v1182, %v1223
        %v1226 = vxor.u32 %v1181, 2147483648
        %v1227 = vxor.u32 %v1185, 2147483648
        %v1228 = vmul.f32 %v1226, 1.442695
        %v1229 = vpow.pop %v1228
        %v1230 = vmul.f32 %v1227, 1.442695
        %v1231 = vpow.pop %v1230
        %v1232 = vadd.f32 %v1229, 1.0
        %v1233 = vadd.f32 %v1231, 1.0
        %v1234 = vrcp.pop %v1232
        %v1235 = vmul.f32 %v1232, %v1234
        %v1236 = vsub.f32 1.0, %v1235
        %v1237 = vmul.f32 %v1234, %v1236
        %v1238 = vadd.f32 %v1234, %v1237
        %vm1239 = vweird.f32 %v1232
        %vm1240 = vweird.f32 %v1234
        %vm1241 = vmor %vm1239, %vm1240
        %v1242 = vsel %vm1241, %v1234, %v1238
        %v1243 = vand.u32 2147483647, %v1232
        %vm1244 = vcmp.eq.f32.partialorder %v1243, 8.507059e+37
        %v1245 = vand.u32 %v1232, 2147483648
        %v1246 = vor.u32 1.1754944e-38, %v1245
        %v1247 = vsel %vm1244, %v1246, %v1242
        %v1248 = vmul.f32 1.0, %v1247
        %v1249 = vrcp.pop %v1233
        %v1250 = vmul.f32 %v1233, %v1249
        %v1251 = vsub.f32 1.0, %v1250
        %v1252 = vmul.f32 %v1249, %v1251
        %v1253 = vadd.f32 %v1249, %v1252
        %vm1254 = vweird.f32 %v1233
        %vm1255 = vweird.f32 %v1249
        %vm1256 = vmor %vm1254, %vm1255
        %v1257 = vsel %vm1256, %v1249, %v1253
        %v1258 = vand.u32 2147483647, %v1233
        %vm1259 = vcmp.eq.f32.partialorder %v1258, 8.507059e+37
        %v1260 = vand.u32 %v1233, 2147483648
        %v1261 = vor.u32 1.1754944e-38, %v1260
        %v1262 = vsel %vm1259, %v1261, %v1257
        %v1263 = vmul.f32 1.0, %v1262
        %v1264 = vmul.f32 %v1180, %v1248
        %v1265 = vmul.f32 %v1184, %v1263
        %v1266 = vpack.c.bf16 %v1225, %v1224
        %v1267 = vld [vmem:[#allocation7] sm:$0xff]
        %v1268 = vld [vmem:[#allocation7 + $0x8] sm:$0xff]
        %v1269 = vld [vmem:[#allocation7 + $0x10] sm:$0xff]
        %v1270 = vld [vmem:[#allocation7 + $0x18] sm:$0xff]
        %v1271 = vld [vmem:[#allocation7 + $0x20] sm:$0xff]
        %v1272 = vld [vmem:[#allocation7 + $0x28] sm:$0xff]
        %v1273 = vld [vmem:[#allocation7 + $0x30] sm:$0xff]
        %v1274 = vld [vmem:[#allocation7 + $0x38] sm:$0xff]
        %v1275 = vld [vmem:[#allocation7 + $0x40] sm:$0xff]
        %v1276 = vld [vmem:[#allocation7 + $0x48] sm:$0xff]
        %v1277 = vld [vmem:[#allocation7 + $0x50] sm:$0xff]
        %v1278 = vld [vmem:[#allocation7 + $0x58] sm:$0xff]
        %v1279 = vld [vmem:[#allocation7 + $0x60] sm:$0xff]
        %v1280 = vld [vmem:[#allocation7 + $0x68] sm:$0xff]
        %v1281 = vld [vmem:[#allocation7 + $0x70] sm:$0xff]
        %v1282 = vld [vmem:[#allocation7 + $0x78] sm:$0xff]
        %v1283 = vld [vmem:[%s6] sm:$0x3]
        %v1285 = vperm.slane %v1283, 0
        %v1286 = vperm.slane %v1283, 1
        %v1305 = vunpack.c.l.b16 %v1267
        %v1306 = vunpack.c.h.b16 %v1267
        %v1307 = vunpack.c.l.b16 %v1268
        %v1308 = vunpack.c.h.b16 %v1268
        %v1309 = vunpack.c.l.b16 %v1269
        %v1310 = vunpack.c.h.b16 %v1269
        %v1311 = vunpack.c.l.b16 %v1270
        %v1312 = vunpack.c.h.b16 %v1270
        %v1313 = vunpack.c.l.b16 %v1271
        %v1314 = vunpack.c.h.b16 %v1271
        %v1315 = vunpack.c.l.b16 %v1272
        %v1316 = vunpack.c.h.b16 %v1272
        %v1317 = vunpack.c.l.b16 %v1273
        %v1318 = vunpack.c.h.b16 %v1273
        %v1319 = vunpack.c.l.b16 %v1274
        %v1320 = vunpack.c.h.b16 %v1274
        %v1321 = vunpack.c.l.b16 %v1275
        %v1322 = vunpack.c.h.b16 %v1275
        %v1323 = vunpack.c.l.b16 %v1276
        %v1324 = vunpack.c.h.b16 %v1276
        %v1325 = vunpack.c.l.b16 %v1277
        %v1326 = vunpack.c.h.b16 %v1277
        %v1327 = vunpack.c.l.b16 %v1278
        %v1328 = vunpack.c.h.b16 %v1278
        %v1329 = vunpack.c.l.b16 %v1279
        %v1330 = vunpack.c.h.b16 %v1279
        %v1331 = vunpack.c.l.b16 %v1280
        %v1332 = vunpack.c.h.b16 %v1280
        %v1333 = vunpack.c.l.b16 %v1281
        %v1334 = vunpack.c.h.b16 %v1281
        %v1335 = vunpack.c.l.b16 %v1282
        %v1336 = vunpack.c.h.b16 %v1282
        %v1337 = vpack.c.b16 %v1307, %v1305
        %v1338 = vpack.c.b16 %v1308, %v1306
        %v1339 = vpack.c.b16 %v1311, %v1309
        %v1340 = vpack.c.b16 %v1312, %v1310
        %v1341 = vpack.c.b16 %v1315, %v1313
        %v1342 = vpack.c.b16 %v1316, %v1314
        %v1343 = vpack.c.b16 %v1319, %v1317
        %v1344 = vpack.c.b16 %v1320, %v1318
        %v1345 = vpack.c.b16 %v1323, %v1321
        %v1346 = vpack.c.b16 %v1324, %v1322
        %v1347 = vpack.c.b16 %v1327, %v1325
        %v1348 = vpack.c.b16 %v1328, %v1326
        %v1349 = vpack.c.b16 %v1331, %v1329
        %v1350 = vpack.c.b16 %v1332, %v1330
        %v1351 = vpack.c.b16 %v1335, %v1333
        %v1352 = vpack.c.b16 %v1336, %v1334
        %1369 = vmatpush.bf16.msra.mxu0 %v1351
        %1370 = vmatpush.bf16.msra.mxu0 %v1349
        %1371 = vmatpush.bf16.msra.mxu0 %v1347
        %1372 = vmatpush.bf16.msra.mxu0 %v1345
        %1373 = vmatpush.bf16.msra.mxu0 %v1343
        %1374 = vmatpush.bf16.msra.mxu0 %v1341
        %1375 = vmatpush.bf16.msra.mxu0 %v1339
        %1376 = vmatpush.bf16.msra.mxu0 %v1337
        %1377 = vmatmul.bf16.gmra.mxu0 %v1266
        %v1378 = vpop.f32.mrf.mxu0
        %v1379 = vadd.f32 %v1285, %v1378
        %v1380 = vpop.f32.mrf.mxu0
        %v1381 = vadd.f32 %v1285, %v1380
        %1382 = vdwg.mxu0
        %1383 = vmatpush.bf16.msra.mxu0 %v1352
        %1384 = vmatpush.bf16.msra.mxu0 %v1350
        %1385 = vmatpush.bf16.msra.mxu0 %v1348
        %1386 = vmatpush.bf16.msra.mxu0 %v1346
        %1387 = vmatpush.bf16.msra.mxu0 %v1344
        %1388 = vmatpush.bf16.msra.mxu0 %v1342
        %1389 = vmatpush.bf16.msra.mxu0 %v1340
        %1390 = vmatpush.bf16.msra.mxu0 %v1338
        %1391 = vmatmul.bf16.gmra.mxu0 %v1266
        %v1392 = vpop.f32.mrf.mxu0
        %v1393 = vadd.f32 %v1286, %v1392
        %v1394 = vpop.f32.mrf.mxu0
        %v1395 = vadd.f32 %v1286, %v1394
        %1396 = vdwg.mxu0
        %v1397 = vpack.c.bf16 %v1265, %v1264
        %v1398 = vld [vmem:[#allocation8] sm:$0xff]
        %v1399 = vld [vmem:[#allocation8 + $0x8] sm:$0xff]
        %v1400 = vld [vmem:[#allocation8 + $0x10] sm:$0xff]
        %v1401 = vld [vmem:[#allocation8 + $0x18] sm:$0xff]
        %v1402 = vld [vmem:[#allocation8 + $0x20] sm:$0xff]
        %v1403 = vld [vmem:[#allocation8 + $0x28] sm:$0xff]
        %v1404 = vld [vmem:[#allocation8 + $0x30] sm:$0xff]
        %v1405 = vld [vmem:[#allocation8 + $0x38] sm:$0xff]
        %v1406 = vld [vmem:[#allocation8 + $0x40] sm:$0xff]
        %v1407 = vld [vmem:[#allocation8 + $0x48] sm:$0xff]
        %v1408 = vld [vmem:[#allocation8 + $0x50] sm:$0xff]
        %v1409 = vld [vmem:[#allocation8 + $0x58] sm:$0xff]
        %v1410 = vld [vmem:[#allocation8 + $0x60] sm:$0xff]
        %v1411 = vld [vmem:[#allocation8 + $0x68] sm:$0xff]
        %v1412 = vld [vmem:[#allocation8 + $0x70] sm:$0xff]
        %v1413 = vld [vmem:[#allocation8 + $0x78] sm:$0xff]
        %v1414 = vld [vmem:[%s7] sm:$0x3]
        %v1416 = vperm.slane %v1414, 0
        %v1417 = vperm.slane %v1414, 1
        %v1436 = vunpack.c.l.b16 %v1398
        %v1437 = vunpack.c.h.b16 %v1398
        %v1438 = vunpack.c.l.b16 %v1399
        %v1439 = vunpack.c.h.b16 %v1399
        %v1440 = vunpack.c.l.b16 %v1400
        %v1441 = vunpack.c.h.b16 %v1400
        %v1442 = vunpack.c.l.b16 %v1401
        %v1443 = vunpack.c.h.b16 %v1401
        %v1444 = vunpack.c.l.b16 %v1402
        %v1445 = vunpack.c.h.b16 %v1402
        %v1446 = vunpack.c.l.b16 %v1403
        %v1447 = vunpack.c.h.b16 %v1403
        %v1448 = vunpack.c.l.b16 %v1404
        %v1449 = vunpack.c.h.b16 %v1404
        %v1450 = vunpack.c.l.b16 %v1405
        %v1451 = vunpack.c.h.b16 %v1405
        %v1452 = vunpack.c.l.b16 %v1406
        %v1453 = vunpack.c.h.b16 %v1406
        %v1454 = vunpack.c.l.b16 %v1407
        %v1455 = vunpack.c.h.b16 %v1407
        %v1456 = vunpack.c.l.b16 %v1408
        %v1457 = vunpack.c.h.b16 %v1408
        %v1458 = vunpack.c.l.b16 %v1409
        %v1459 = vunpack.c.h.b16 %v1409
        %v1460 = vunpack.c.l.b16 %v1410
        %v1461 = vunpack.c.h.b16 %v1410
        %v1462 = vunpack.c.l.b16 %v1411
        %v1463 = vunpack.c.h.b16 %v1411
        %v1464 = vunpack.c.l.b16 %v1412
        %v1465 = vunpack.c.h.b16 %v1412
        %v1466 = vunpack.c.l.b16 %v1413
        %v1467 = vunpack.c.h.b16 %v1413
        %v1468 = vpack.c.b16 %v1438, %v1436
        %v1469 = vpack.c.b16 %v1439, %v1437
        %v1470 = vpack.c.b16 %v1442, %v1440
        %v1471 = vpack.c.b16 %v1443, %v1441
        %v1472 = vpack.c.b16 %v1446, %v1444
        %v1473 = vpack.c.b16 %v1447, %v1445
        %v1474 = vpack.c.b16 %v1450, %v1448
        %v1475 = vpack.c.b16 %v1451, %v1449
        %v1476 = vpack.c.b16 %v1454, %v1452
        %v1477 = vpack.c.b16 %v1455, %v1453
        %v1478 = vpack.c.b16 %v1458, %v1456
        %v1479 = vpack.c.b16 %v1459, %v1457
        %v1480 = vpack.c.b16 %v1462, %v1460
        %v1481 = vpack.c.b16 %v1463, %v1461
        %v1482 = vpack.c.b16 %v1466, %v1464
        %v1483 = vpack.c.b16 %v1467, %v1465
        %1500 = vmatpush.bf16.msra.mxu0 %v1482
        %1501 = vmatpush.bf16.msra.mxu0 %v1480
        %1502 = vmatpush.bf16.msra.mxu0 %v1478
        %1503 = vmatpush.bf16.msra.mxu0 %v1476
        %1504 = vmatpush.bf16.msra.mxu0 %v1474
        %1505 = vmatpush.bf16.msra.mxu0 %v1472
        %1506 = vmatpush.bf16.msra.mxu0 %v1470
        %1507 = vmatpush.bf16.msra.mxu0 %v1468
        %1508 = vmatmul.bf16.gmra.mxu0 %v1397
        %v1509 = vpop.f32.mrf.mxu0
        %v1510 = vadd.f32 %v1416, %v1509
        %v1511 = vpop.f32.mrf.mxu0
        %v1512 = vadd.f32 %v1416, %v1511
        %1513 = vdwg.mxu0
        %1514 = vmatpush.bf16.msra.mxu0 %v1483
        %1515 = vmatpush.bf16.msra.mxu0 %v1481
        %1516 = vmatpush.bf16.msra.mxu0 %v1479
        %1517 = vmatpush.bf16.msra.mxu0 %v1477
        %1518 = vmatpush.bf16.msra.mxu0 %v1475
        %1519 = vmatpush.bf16.msra.mxu0 %v1473
        %1520 = vmatpush.bf16.msra.mxu0 %v1471
        %1521 = vmatpush.bf16.msra.mxu0 %v1469
        %1522 = vmatmul.bf16.gmra.mxu0 %v1397
        %v1523 = vpop.f32.mrf.mxu0
        %v1524 = vadd.f32 %v1417, %v1523
        %v1525 = vpop.f32.mrf.mxu0
        %v1526 = vadd.f32 %v1417, %v1525
        %1527 = vdwg.mxu0
        %v1528 = vxor.u32 %v1393, 2147483648
        %v1529 = vxor.u32 %v1395, 2147483648
        %v1530 = vmul.f32 %v1528, 1.442695
        %v1531 = vpow.pop %v1530
        %v1532 = vmul.f32 %v1529, 1.442695
        %v1533 = vpow.pop %v1532
        %v1534 = vadd.f32 %v1531, 1.0
        %v1535 = vadd.f32 %v1533, 1.0
        %v1536 = vrcp.pop %v1534
        %v1537 = vmul.f32 %v1534, %v1536
        %v1538 = vsub.f32 1.0, %v1537
        %v1539 = vmul.f32 %v1536, %v1538
        %v1540 = vadd.f32 %v1536, %v1539
        %vm1541 = vweird.f32 %v1534
        %vm1542 = vweird.f32 %v1536
        %vm1543 = vmor %vm1541, %vm1542
        %v1544 = vsel %vm1543, %v1536, %v1540
        %v1545 = vand.u32 2147483647, %v1534
        %vm1546 = vcmp.eq.f32.partialorder %v1545, 8.507059e+37
        %v1547 = vand.u32 %v1534, 2147483648
        %v1548 = vor.u32 1.1754944e-38, %v1547
        %v1549 = vsel %vm1546, %v1548, %v1544
        %v1550 = vmul.f32 1.0, %v1549
        %v1551 = vrcp.pop %v1535
        %v1552 = vmul.f32 %v1535, %v1551
        %v1553 = vsub.f32 1.0, %v1552
        %v1554 = vmul.f32 %v1551, %v1553
        %v1555 = vadd.f32 %v1551, %v1554
        %vm1556 = vweird.f32 %v1535
        %vm1557 = vweird.f32 %v1551
        %vm1558 = vmor %vm1556, %vm1557
        %v1559 = vsel %vm1558, %v1551, %v1555
        %v1560 = vand.u32 2147483647, %v1535
        %vm1561 = vcmp.eq.f32.partialorder %v1560, 8.507059e+37
        %v1562 = vand.u32 %v1535, 2147483648
        %v1563 = vor.u32 1.1754944e-38, %v1562
        %v1564 = vsel %vm1561, %v1563, %v1559
        %v1565 = vmul.f32 1.0, %v1564
        %v1566 = vmul.f32 %v1379, %v1550
        %v1567 = vmul.f32 %v1381, %v1565
        %v1568 = vxor.u32 %v1524, 2147483648
        %v1569 = vxor.u32 %v1526, 2147483648
        %v1570 = vmul.f32 %v1568, 1.442695
        %v1571 = vpow.pop %v1570
        %v1572 = vmul.f32 %v1569, 1.442695
        %v1573 = vpow.pop %v1572
        %v1574 = vadd.f32 %v1571, 1.0
        %v1575 = vadd.f32 %v1573, 1.0
        %v1576 = vrcp.pop %v1574
        %v1577 = vmul.f32 %v1574, %v1576
        %v1578 = vsub.f32 1.0, %v1577
        %v1579 = vmul.f32 %v1576, %v1578
        %v1580 = vadd.f32 %v1576, %v1579
        %vm1581 = vweird.f32 %v1574
        %vm1582 = vweird.f32 %v1576
        %vm1583 = vmor %vm1581, %vm1582
        %v1584 = vsel %vm1583, %v1576, %v1580
        %v1585 = vand.u32 2147483647, %v1574
        %vm1586 = vcmp.eq.f32.partialorder %v1585, 8.507059e+37
        %v1587 = vand.u32 %v1574, 2147483648
        %v1588 = vor.u32 1.1754944e-38, %v1587
        %v1589 = vsel %vm1586, %v1588, %v1584
        %v1590 = vmul.f32 1.0, %v1589
        %v1591 = vrcp.pop %v1575
        %v1592 = vmul.f32 %v1575, %v1591
        %v1593 = vsub.f32 1.0, %v1592
        %v1594 = vmul.f32 %v1591, %v1593
        %v1595 = vadd.f32 %v1591, %v1594
        %vm1596 = vweird.f32 %v1575
        %vm1597 = vweird.f32 %v1591
        %vm1598 = vmor %vm1596, %vm1597
        %v1599 = vsel %vm1598, %v1591, %v1595
        %v1600 = vand.u32 2147483647, %v1575
        %vm1601 = vcmp.eq.f32.partialorder %v1600, 8.507059e+37
        %v1602 = vand.u32 %v1575, 2147483648
        %v1603 = vor.u32 1.1754944e-38, %v1602
        %v1604 = vsel %vm1601, %v1603, %v1599
        %v1605 = vmul.f32 1.0, %v1604
        %v1606 = vmul.f32 %v1510, %v1590
        %v1607 = vmul.f32 %v1512, %v1605
        %v1608 = vpack.c.bf16 %v1567, %v1566
        %s1609 = scalar_lea.vmem [#allocation7], 128
        %v1610 = vld [vmem:[%s1609] sm:$0xff]
        %v1611 = vld [vmem:[%s1609 + $0x8] sm:$0xff]
        %v1612 = vld [vmem:[%s1609 + $0x10] sm:$0xff]
        %v1613 = vld [vmem:[%s1609 + $0x18] sm:$0xff]
        %v1614 = vld [vmem:[%s1609 + $0x20] sm:$0xff]
        %v1615 = vld [vmem:[%s1609 + $0x28] sm:$0xff]
        %v1616 = vld [vmem:[%s1609 + $0x30] sm:$0xff]
        %v1617 = vld [vmem:[%s1609 + $0x38] sm:$0xff]
        %v1618 = vld [vmem:[%s1609 + $0x40] sm:$0xff]
        %v1619 = vld [vmem:[%s1609 + $0x48] sm:$0xff]
        %v1620 = vld [vmem:[%s1609 + $0x50] sm:$0xff]
        %v1621 = vld [vmem:[%s1609 + $0x58] sm:$0xff]
        %v1622 = vld [vmem:[%s1609 + $0x60] sm:$0xff]
        %v1623 = vld [vmem:[%s1609 + $0x68] sm:$0xff]
        %v1624 = vld [vmem:[%s1609 + $0x70] sm:$0xff]
        %v1625 = vld [vmem:[%s1609 + $0x78] sm:$0xff]
        %s1626 = scalar_lea.vmem %s6, 2
        %v1627 = vld [vmem:[%s1626] sm:$0x3]
        %v1629 = vperm.slane %v1627, 0
        %v1630 = vperm.slane %v1627, 1
        %v1649 = vunpack.c.l.b16 %v1610
        %v1650 = vunpack.c.h.b16 %v1610
        %v1651 = vunpack.c.l.b16 %v1611
        %v1652 = vunpack.c.h.b16 %v1611
        %v1653 = vunpack.c.l.b16 %v1612
        %v1654 = vunpack.c.h.b16 %v1612
        %v1655 = vunpack.c.l.b16 %v1613
        %v1656 = vunpack.c.h.b16 %v1613
        %v1657 = vunpack.c.l.b16 %v1614
        %v1658 = vunpack.c.h.b16 %v1614
        %v1659 = vunpack.c.l.b16 %v1615
        %v1660 = vunpack.c.h.b16 %v1615
        %v1661 = vunpack.c.l.b16 %v1616
        %v1662 = vunpack.c.h.b16 %v1616
        %v1663 = vunpack.c.l.b16 %v1617
        %v1664 = vunpack.c.h.b16 %v1617
        %v1665 = vunpack.c.l.b16 %v1618
        %v1666 = vunpack.c.h.b16 %v1618
        %v1667 = vunpack.c.l.b16 %v1619
        %v1668 = vunpack.c.h.b16 %v1619
        %v1669 = vunpack.c.l.b16 %v1620
        %v1670 = vunpack.c.h.b16 %v1620
        %v1671 = vunpack.c.l.b16 %v1621
        %v1672 = vunpack.c.h.b16 %v1621
        %v1673 = vunpack.c.l.b16 %v1622
        %v1674 = vunpack.c.h.b16 %v1622
        %v1675 = vunpack.c.l.b16 %v1623
        %v1676 = vunpack.c.h.b16 %v1623
        %v1677 = vunpack.c.l.b16 %v1624
        %v1678 = vunpack.c.h.b16 %v1624
        %v1679 = vunpack.c.l.b16 %v1625
        %v1680 = vunpack.c.h.b16 %v1625
        %v1681 = vpack.c.b16 %v1651, %v1649
        %v1682 = vpack.c.b16 %v1652, %v1650
        %v1683 = vpack.c.b16 %v1655, %v1653
        %v1684 = vpack.c.b16 %v1656, %v1654
        %v1685 = vpack.c.b16 %v1659, %v1657
        %v1686 = vpack.c.b16 %v1660, %v1658
        %v1687 = vpack.c.b16 %v1663, %v1661
        %v1688 = vpack.c.b16 %v1664, %v1662
        %v1689 = vpack.c.b16 %v1667, %v1665
        %v1690 = vpack.c.b16 %v1668, %v1666
        %v1691 = vpack.c.b16 %v1671, %v1669
        %v1692 = vpack.c.b16 %v1672, %v1670
        %v1693 = vpack.c.b16 %v1675, %v1673
        %v1694 = vpack.c.b16 %v1676, %v1674
        %v1695 = vpack.c.b16 %v1679, %v1677
        %v1696 = vpack.c.b16 %v1680, %v1678
        %1713 = vmatpush.bf16.msra.mxu0 %v1695
        %1714 = vmatpush.bf16.msra.mxu0 %v1693
        %1715 = vmatpush.bf16.msra.mxu0 %v1691
        %1716 = vmatpush.bf16.msra.mxu0 %v1689
        %1717 = vmatpush.bf16.msra.mxu0 %v1687
        %1718 = vmatpush.bf16.msra.mxu0 %v1685
        %1719 = vmatpush.bf16.msra.mxu0 %v1683
        %1720 = vmatpush.bf16.msra.mxu0 %v1681
        %1721 = vmatmul.bf16.gmra.mxu0 %v1608
        %v1722 = vpop.f32.mrf.mxu0
        %v1723 = vadd.f32 %v1629, %v1722
        %v1724 = vpop.f32.mrf.mxu0
        %v1725 = vadd.f32 %v1629, %v1724
        %1726 = vdwg.mxu0
        %1727 = vmatpush.bf16.msra.mxu0 %v1696
        %1728 = vmatpush.bf16.msra.mxu0 %v1694
        %1729 = vmatpush.bf16.msra.mxu0 %v1692
        %1730 = vmatpush.bf16.msra.mxu0 %v1690
        %1731 = vmatpush.bf16.msra.mxu0 %v1688
        %1732 = vmatpush.bf16.msra.mxu0 %v1686
        %1733 = vmatpush.bf16.msra.mxu0 %v1684
        %1734 = vmatpush.bf16.msra.mxu0 %v1682
        %1735 = vmatmul.bf16.gmra.mxu0 %v1608
        %v1736 = vpop.f32.mrf.mxu0
        %v1737 = vadd.f32 %v1630, %v1736
        %v1738 = vpop.f32.mrf.mxu0
        %v1739 = vadd.f32 %v1630, %v1738
        %1740 = vdwg.mxu0
        %v1741 = vpack.c.bf16 %v1607, %v1606
        %s1742 = scalar_lea.vmem [#allocation8], 128
        %v1743 = vld [vmem:[%s1742] sm:$0xff]
        %v1744 = vld [vmem:[%s1742 + $0x8] sm:$0xff]
        %v1745 = vld [vmem:[%s1742 + $0x10] sm:$0xff]
        %v1746 = vld [vmem:[%s1742 + $0x18] sm:$0xff]
        %v1747 = vld [vmem:[%s1742 + $0x20] sm:$0xff]
        %v1748 = vld [vmem:[%s1742 + $0x28] sm:$0xff]
        %v1749 = vld [vmem:[%s1742 + $0x30] sm:$0xff]
        %v1750 = vld [vmem:[%s1742 + $0x38] sm:$0xff]
        %v1751 = vld [vmem:[%s1742 + $0x40] sm:$0xff]
        %v1752 = vld [vmem:[%s1742 + $0x48] sm:$0xff]
        %v1753 = vld [vmem:[%s1742 + $0x50] sm:$0xff]
        %v1754 = vld [vmem:[%s1742 + $0x58] sm:$0xff]
        %v1755 = vld [vmem:[%s1742 + $0x60] sm:$0xff]
        %v1756 = vld [vmem:[%s1742 + $0x68] sm:$0xff]
        %v1757 = vld [vmem:[%s1742 + $0x70] sm:$0xff]
        %v1758 = vld [vmem:[%s1742 + $0x78] sm:$0xff]
        %s1759 = scalar_lea.vmem %s7, 2
        %v1760 = vld [vmem:[%s1759] sm:$0x3]
        %v1762 = vperm.slane %v1760, 0
        %v1763 = vperm.slane %v1760, 1
        %v1782 = vunpack.c.l.b16 %v1743
        %v1783 = vunpack.c.h.b16 %v1743
        %v1784 = vunpack.c.l.b16 %v1744
        %v1785 = vunpack.c.h.b16 %v1744
        %v1786 = vunpack.c.l.b16 %v1745
        %v1787 = vunpack.c.h.b16 %v1745
        %v1788 = vunpack.c.l.b16 %v1746
        %v1789 = vunpack.c.h.b16 %v1746
        %v1790 = vunpack.c.l.b16 %v1747
        %v1791 = vunpack.c.h.b16 %v1747
        %v1792 = vunpack.c.l.b16 %v1748
        %v1793 = vunpack.c.h.b16 %v1748
        %v1794 = vunpack.c.l.b16 %v1749
        %v1795 = vunpack.c.h.b16 %v1749
        %v1796 = vunpack.c.l.b16 %v1750
        %v1797 = vunpack.c.h.b16 %v1750
        %v1798 = vunpack.c.l.b16 %v1751
        %v1799 = vunpack.c.h.b16 %v1751
        %v1800 = vunpack.c.l.b16 %v1752
        %v1801 = vunpack.c.h.b16 %v1752
        %v1802 = vunpack.c.l.b16 %v1753
        %v1803 = vunpack.c.h.b16 %v1753
        %v1804 = vunpack.c.l.b16 %v1754
        %v1805 = vunpack.c.h.b16 %v1754
        %v1806 = vunpack.c.l.b16 %v1755
        %v1807 = vunpack.c.h.b16 %v1755
        %v1808 = vunpack.c.l.b16 %v1756
        %v1809 = vunpack.c.h.b16 %v1756
        %v1810 = vunpack.c.l.b16 %v1757
        %v1811 = vunpack.c.h.b16 %v1757
        %v1812 = vunpack.c.l.b16 %v1758
        %v1813 = vunpack.c.h.b16 %v1758
        %v1814 = vpack.c.b16 %v1784, %v1782
        %v1815 = vpack.c.b16 %v1785, %v1783
        %v1816 = vpack.c.b16 %v1788, %v1786
        %v1817 = vpack.c.b16 %v1789, %v1787
        %v1818 = vpack.c.b16 %v1792, %v1790
        %v1819 = vpack.c.b16 %v1793, %v1791
        %v1820 = vpack.c.b16 %v1796, %v1794
        %v1821 = vpack.c.b16 %v1797, %v1795
        %v1822 = vpack.c.b16 %v1800, %v1798
        %v1823 = vpack.c.b16 %v1801, %v1799
        %v1824 = vpack.c.b16 %v1804, %v1802
        %v1825 = vpack.c.b16 %v1805, %v1803
        %v1826 = vpack.c.b16 %v1808, %v1806
        %v1827 = vpack.c.b16 %v1809, %v1807
        %v1828 = vpack.c.b16 %v1812, %v1810
        %v1829 = vpack.c.b16 %v1813, %v1811
        %1846 = vmatpush.bf16.msra.mxu0 %v1828
        %1847 = vmatpush.bf16.msra.mxu0 %v1826
        %1848 = vmatpush.bf16.msra.mxu0 %v1824
        %1849 = vmatpush.bf16.msra.mxu0 %v1822
        %1850 = vmatpush.bf16.msra.mxu0 %v1820
        %1851 = vmatpush.bf16.msra.mxu0 %v1818
        %1852 = vmatpush.bf16.msra.mxu0 %v1816
        %1853 = vmatpush.bf16.msra.mxu0 %v1814
        %1854 = vmatmul.bf16.gmra.mxu0 %v1741
        %v1855 = vpop.f32.mrf.mxu0
        %v1856 = vadd.f32 %v1762, %v1855
        %v1857 = vpop.f32.mrf.mxu0
        %v1858 = vadd.f32 %v1762, %v1857
        %1859 = vdwg.mxu0
        %1860 = vmatpush.bf16.msra.mxu0 %v1829
        %1861 = vmatpush.bf16.msra.mxu0 %v1827
        %1862 = vmatpush.bf16.msra.mxu0 %v1825
        %1863 = vmatpush.bf16.msra.mxu0 %v1823
        %1864 = vmatpush.bf16.msra.mxu0 %v1821
        %1865 = vmatpush.bf16.msra.mxu0 %v1819
        %1866 = vmatpush.bf16.msra.mxu0 %v1817
        %1867 = vmatpush.bf16.msra.mxu0 %v1815
        %1868 = vmatmul.bf16.gmra.mxu0 %v1741
        %v1869 = vpop.f32.mrf.mxu0
        %v1870 = vadd.f32 %v1763, %v1869
        %v1871 = vpop.f32.mrf.mxu0
        %v1872 = vadd.f32 %v1763, %v1871
        %1873 = vdwg.mxu0
        %v1874 = vxor.u32 %v1737, 2147483648
        %v1875 = vxor.u32 %v1739, 2147483648
        %v1876 = vmul.f32 %v1874, 1.442695
        %v1877 = vpow.pop %v1876
        %v1878 = vmul.f32 %v1875, 1.442695
        %v1879 = vpow.pop %v1878
        %v1880 = vadd.f32 %v1877, 1.0
        %v1881 = vadd.f32 %v1879, 1.0
        %v1882 = vrcp.pop %v1880
        %v1883 = vmul.f32 %v1880, %v1882
        %v1884 = vsub.f32 1.0, %v1883
        %v1885 = vmul.f32 %v1882, %v1884
        %v1886 = vadd.f32 %v1882, %v1885
        %vm1887 = vweird.f32 %v1880
        %vm1888 = vweird.f32 %v1882
        %vm1889 = vmor %vm1887, %vm1888
        %v1890 = vsel %vm1889, %v1882, %v1886
        %v1891 = vand.u32 2147483647, %v1880
        %vm1892 = vcmp.eq.f32.partialorder %v1891, 8.507059e+37
        %v1893 = vand.u32 %v1880, 2147483648
        %v1894 = vor.u32 1.1754944e-38, %v1893
        %v1895 = vsel %vm1892, %v1894, %v1890
        %v1896 = vmul.f32 1.0, %v1895
        %v1897 = vrcp.pop %v1881
        %v1898 = vmul.f32 %v1881, %v1897
        %v1899 = vsub.f32 1.0, %v1898
        %v1900 = vmul.f32 %v1897, %v1899
        %v1901 = vadd.f32 %v1897, %v1900
        %vm1902 = vweird.f32 %v1881
        %vm1903 = vweird.f32 %v1897
        %vm1904 = vmor %vm1902, %vm1903
        %v1905 = vsel %vm1904, %v1897, %v1901
        %v1906 = vand.u32 2147483647, %v1881
        %vm1907 = vcmp.eq.f32.partialorder %v1906, 8.507059e+37
        %v1908 = vand.u32 %v1881, 2147483648
        %v1909 = vor.u32 1.1754944e-38, %v1908
        %v1910 = vsel %vm1907, %v1909, %v1905
        %v1911 = vmul.f32 1.0, %v1910
        %v1912 = vmul.f32 %v1723, %v1896
        %v1913 = vmul.f32 %v1725, %v1911
        %v1914 = vxor.u32 %v1870, 2147483648
        %v1915 = vxor.u32 %v1872, 2147483648
        %v1916 = vmul.f32 %v1914, 1.442695
        %v1917 = vpow.pop %v1916
        %v1918 = vmul.f32 %v1915, 1.442695
        %v1919 = vpow.pop %v1918
        %v1920 = vadd.f32 %v1917, 1.0
        %v1921 = vadd.f32 %v1919, 1.0
        %v1922 = vrcp.pop %v1920
        %v1923 = vmul.f32 %v1920, %v1922
        %v1924 = vsub.f32 1.0, %v1923
        %v1925 = vmul.f32 %v1922, %v1924
        %v1926 = vadd.f32 %v1922, %v1925
        %vm1927 = vweird.f32 %v1920
        %vm1928 = vweird.f32 %v1922
        %vm1929 = vmor %vm1927, %vm1928
        %v1930 = vsel %vm1929, %v1922, %v1926
        %v1931 = vand.u32 2147483647, %v1920
        %vm1932 = vcmp.eq.f32.partialorder %v1931, 8.507059e+37
        %v1933 = vand.u32 %v1920, 2147483648
        %v1934 = vor.u32 1.1754944e-38, %v1933
        %v1935 = vsel %vm1932, %v1934, %v1930
        %v1936 = vmul.f32 1.0, %v1935
        %v1937 = vrcp.pop %v1921
        %v1938 = vmul.f32 %v1921, %v1937
        %v1939 = vsub.f32 1.0, %v1938
        %v1940 = vmul.f32 %v1937, %v1939
        %v1941 = vadd.f32 %v1937, %v1940
        %vm1942 = vweird.f32 %v1921
        %vm1943 = vweird.f32 %v1937
        %vm1944 = vmor %vm1942, %vm1943
        %v1945 = vsel %vm1944, %v1937, %v1941
        %v1946 = vand.u32 2147483647, %v1921
        %vm1947 = vcmp.eq.f32.partialorder %v1946, 8.507059e+37
        %v1948 = vand.u32 %v1921, 2147483648
        %v1949 = vor.u32 1.1754944e-38, %v1948
        %v1950 = vsel %vm1947, %v1949, %v1945
        %v1951 = vmul.f32 1.0, %v1950
        %v1952 = vmul.f32 %v1856, %v1936
        %v1953 = vmul.f32 %v1858, %v1951
        %v1954 = vpack.c.bf16 %v1913, %v1912
        %v1955 = vld [vmem:[#allocation10] sm:$0xf]
        %v1956 = vld [vmem:[#allocation10 + $0x4] sm:$0xf]
        %v1957 = vld [vmem:[#allocation10 + $0x8] sm:$0xf]
        %v1958 = vld [vmem:[#allocation10 + $0xc] sm:$0xf]
        %v1959 = vld [vmem:[#allocation10 + $0x10] sm:$0xf]
        %v1960 = vld [vmem:[#allocation10 + $0x14] sm:$0xf]
        %v1961 = vld [vmem:[#allocation10 + $0x18] sm:$0xf]
        %v1962 = vld [vmem:[#allocation10 + $0x1c] sm:$0xf]
        %v1963 = vld [vmem:[#allocation10 + $0x20] sm:$0xf]
        %v1964 = vld [vmem:[#allocation10 + $0x24] sm:$0xf]
        %v1965 = vld [vmem:[#allocation10 + $0x28] sm:$0xf]
        %v1966 = vld [vmem:[#allocation10 + $0x2c] sm:$0xf]
        %v1967 = vld [vmem:[#allocation10 + $0x30] sm:$0xf]
        %v1968 = vld [vmem:[#allocation10 + $0x34] sm:$0xf]
        %v1969 = vld [vmem:[#allocation10 + $0x38] sm:$0xf]
        %v1970 = vld [vmem:[#allocation10 + $0x3c] sm:$0xf]
        %v1971 = vpack.c.bf16 %v1953, %v1952
        %s1972 = scalar_lea.vmem [#allocation10], 64
        %v1973 = vld [vmem:[%s1972] sm:$0xf]
        %v1974 = vld [vmem:[%s1972 + $0x4] sm:$0xf]
        %v1975 = vld [vmem:[%s1972 + $0x8] sm:$0xf]
        %v1976 = vld [vmem:[%s1972 + $0xc] sm:$0xf]
        %v1977 = vld [vmem:[%s1972 + $0x10] sm:$0xf]
        %v1978 = vld [vmem:[%s1972 + $0x14] sm:$0xf]
        %v1979 = vld [vmem:[%s1972 + $0x18] sm:$0xf]
        %v1980 = vld [vmem:[%s1972 + $0x1c] sm:$0xf]
        %v1981 = vld [vmem:[%s1972 + $0x20] sm:$0xf]
        %v1982 = vld [vmem:[%s1972 + $0x24] sm:$0xf]
        %v1983 = vld [vmem:[%s1972 + $0x28] sm:$0xf]
        %v1984 = vld [vmem:[%s1972 + $0x2c] sm:$0xf]
        %v1985 = vld [vmem:[%s1972 + $0x30] sm:$0xf]
        %v1986 = vld [vmem:[%s1972 + $0x34] sm:$0xf]
        %v1987 = vld [vmem:[%s1972 + $0x38] sm:$0xf]
        %v1988 = vld [vmem:[%s1972 + $0x3c] sm:$0xf]
        %v2005 = vunpack.c.l.b16 %v1973
        %v2006 = vunpack.c.l.b16 %v1974
        %v2007 = vunpack.c.l.b16 %v1975
        %v2008 = vunpack.c.l.b16 %v1976
        %v2009 = vunpack.c.l.b16 %v1977
        %v2010 = vunpack.c.l.b16 %v1978
        %v2011 = vunpack.c.l.b16 %v1979
        %v2012 = vunpack.c.l.b16 %v1980
        %v2013 = vunpack.c.l.b16 %v1981
        %v2014 = vunpack.c.l.b16 %v1982
        %v2015 = vunpack.c.l.b16 %v1983
        %v2016 = vunpack.c.l.b16 %v1984
        %v2017 = vunpack.c.l.b16 %v1985
        %v2018 = vunpack.c.l.b16 %v1986
        %v2019 = vunpack.c.l.b16 %v1987
        %v2020 = vunpack.c.l.b16 %v1988
        %v2021 = vpack.c.b16 %v2006, %v2005
        %v2022 = vpack.c.b16 %v2008, %v2007
        %v2023 = vpack.c.b16 %v2010, %v2009
        %v2024 = vpack.c.b16 %v2012, %v2011
        %v2025 = vpack.c.b16 %v2014, %v2013
        %v2026 = vpack.c.b16 %v2016, %v2015
        %v2027 = vpack.c.b16 %v2018, %v2017
        %v2028 = vpack.c.b16 %v2020, %v2019
        %2037 = vmatpush.bf16.msra.mxu0 %v2028
        %2038 = vmatpush.bf16.msra.mxu0 %v2027
        %2039 = vmatpush.bf16.msra.mxu0 %v2026
        %2040 = vmatpush.bf16.msra.mxu0 %v2025
        %2041 = vmatpush.bf16.msra.mxu0 %v2024
        %2042 = vmatpush.bf16.msra.mxu0 %v2023
        %2043 = vmatpush.bf16.msra.mxu0 %v2022
        %2044 = vmatpush.bf16.msra.mxu0 %v2021
        %2045 = vmatmul.bf16.gmra.mxu0 %v1971
        %v2046 = vpop.f32.mrf.mxu0
        %v2047 = vadd.f32 0.0, %v2046
        %v2048 = vpop.f32.mrf.mxu0
        %v2049 = vadd.f32 0.0, %v2048
        %2050 = vdwg.mxu0
        %v2067 = vunpack.c.l.b16 %v1955
        %v2068 = vunpack.c.l.b16 %v1956
        %v2069 = vunpack.c.l.b16 %v1957
        %v2070 = vunpack.c.l.b16 %v1958
        %v2071 = vunpack.c.l.b16 %v1959
        %v2072 = vunpack.c.l.b16 %v1960
        %v2073 = vunpack.c.l.b16 %v1961
        %v2074 = vunpack.c.l.b16 %v1962
        %v2075 = vunpack.c.l.b16 %v1963
        %v2076 = vunpack.c.l.b16 %v1964
        %v2077 = vunpack.c.l.b16 %v1965
        %v2078 = vunpack.c.l.b16 %v1966
        %v2079 = vunpack.c.l.b16 %v1967
        %v2080 = vunpack.c.l.b16 %v1968
        %v2081 = vunpack.c.l.b16 %v1969
        %v2082 = vunpack.c.l.b16 %v1970
        %v2083 = vpack.c.b16 %v2068, %v2067
        %v2084 = vpack.c.b16 %v2070, %v2069
        %v2085 = vpack.c.b16 %v2072, %v2071
        %v2086 = vpack.c.b16 %v2074, %v2073
        %v2087 = vpack.c.b16 %v2076, %v2075
        %v2088 = vpack.c.b16 %v2078, %v2077
        %v2089 = vpack.c.b16 %v2080, %v2079
        %v2090 = vpack.c.b16 %v2082, %v2081
        %2099 = vmatpush.bf16.msra.mxu0 %v2090
        %2100 = vmatpush.bf16.msra.mxu0 %v2089
        %2101 = vmatpush.bf16.msra.mxu0 %v2088
        %2102 = vmatpush.bf16.msra.mxu0 %v2087
        %2103 = vmatpush.bf16.msra.mxu0 %v2086
        %2104 = vmatpush.bf16.msra.mxu0 %v2085
        %2105 = vmatpush.bf16.msra.mxu0 %v2084
        %2106 = vmatpush.bf16.msra.mxu0 %v2083
        %2107 = vmatmul.bf16.gmra.mxu0 %v1954
        %v2108 = vpop.f32.mrf.mxu0
        %v2109 = vadd.f32 %v2047, %v2108
        %v2110 = vpop.f32.mrf.mxu0
        %v2111 = vadd.f32 %v2049, %v2110
        %2112 = vdwg.mxu0
        %v2113 = vpack.c.bf16 %v2111, %v2109
        %v2114 = vld [vmem:[#allocation11] sm:$0xff]
        %v2115 = vld [vmem:[#allocation11 + $0x8] sm:$0xff]
        %v2116 = vld [vmem:[#allocation11 + $0x10] sm:$0xff]
        %v2117 = vld [vmem:[#allocation11 + $0x18] sm:$0xff]
        %v2118 = vld [vmem:[#allocation11 + $0x20] sm:$0xff]
        %v2119 = vld [vmem:[#allocation11 + $0x28] sm:$0xff]
        %v2120 = vld [vmem:[#allocation11 + $0x30] sm:$0xff]
        %v2121 = vld [vmem:[#allocation11 + $0x38] sm:$0xff]
        %v2122 = vld [vmem:[#allocation11 + $0x40] sm:$0xff]
        %v2123 = vld [vmem:[#allocation11 + $0x48] sm:$0xff]
        %v2124 = vld [vmem:[#allocation11 + $0x50] sm:$0xff]
        %v2125 = vld [vmem:[#allocation11 + $0x58] sm:$0xff]
        %v2126 = vld [vmem:[#allocation11 + $0x60] sm:$0xff]
        %v2127 = vld [vmem:[#allocation11 + $0x68] sm:$0xff]
        %v2128 = vld [vmem:[#allocation11 + $0x70] sm:$0xff]
        %v2129 = vld [vmem:[#allocation11 + $0x78] sm:$0xff]
        %v2130 = vld [vmem:[%s10] sm:$0x3]
        %v2132 = vperm.slane %v2130, 0
        %v2133 = vperm.slane %v2130, 1
        %v2152 = vunpack.c.l.b16 %v2114
        %v2153 = vunpack.c.h.b16 %v2114
        %v2154 = vunpack.c.l.b16 %v2115
        %v2155 = vunpack.c.h.b16 %v2115
        %v2156 = vunpack.c.l.b16 %v2116
        %v2157 = vunpack.c.h.b16 %v2116
        %v2158 = vunpack.c.l.b16 %v2117
        %v2159 = vunpack.c.h.b16 %v2117
        %v2160 = vunpack.c.l.b16 %v2118
        %v2161 = vunpack.c.h.b16 %v2118
        %v2162 = vunpack.c.l.b16 %v2119
        %v2163 = vunpack.c.h.b16 %v2119
        %v2164 = vunpack.c.l.b16 %v2120
        %v2165 = vunpack.c.h.b16 %v2120
        %v2166 = vunpack.c.l.b16 %v2121
        %v2167 = vunpack.c.h.b16 %v2121
        %v2168 = vunpack.c.l.b16 %v2122
        %v2169 = vunpack.c.h.b16 %v2122
        %v2170 = vunpack.c.l.b16 %v2123
        %v2171 = vunpack.c.h.b16 %v2123
        %v2172 = vunpack.c.l.b16 %v2124
        %v2173 = vunpack.c.h.b16 %v2124
        %v2174 = vunpack.c.l.b16 %v2125
        %v2175 = vunpack.c.h.b16 %v2125
        %v2176 = vunpack.c.l.b16 %v2126
        %v2177 = vunpack.c.h.b16 %v2126
        %v2178 = vunpack.c.l.b16 %v2127
        %v2179 = vunpack.c.h.b16 %v2127
        %v2180 = vunpack.c.l.b16 %v2128
        %v2181 = vunpack.c.h.b16 %v2128
        %v2182 = vunpack.c.l.b16 %v2129
        %v2183 = vunpack.c.h.b16 %v2129
        %v2184 = vpack.c.b16 %v2154, %v2152
        %v2185 = vpack.c.b16 %v2155, %v2153
        %v2186 = vpack.c.b16 %v2158, %v2156
        %v2187 = vpack.c.b16 %v2159, %v2157
        %v2188 = vpack.c.b16 %v2162, %v2160
        %v2189 = vpack.c.b16 %v2163, %v2161
        %v2190 = vpack.c.b16 %v2166, %v2164
        %v2191 = vpack.c.b16 %v2167, %v2165
        %v2192 = vpack.c.b16 %v2170, %v2168
        %v2193 = vpack.c.b16 %v2171, %v2169
        %v2194 = vpack.c.b16 %v2174, %v2172
        %v2195 = vpack.c.b16 %v2175, %v2173
        %v2196 = vpack.c.b16 %v2178, %v2176
        %v2197 = vpack.c.b16 %v2179, %v2177
        %v2198 = vpack.c.b16 %v2182, %v2180
        %v2199 = vpack.c.b16 %v2183, %v2181
        %2216 = vmatpush.bf16.msra.mxu0 %v2198
        %2217 = vmatpush.bf16.msra.mxu0 %v2196
        %2218 = vmatpush.bf16.msra.mxu0 %v2194
        %2219 = vmatpush.bf16.msra.mxu0 %v2192
        %2220 = vmatpush.bf16.msra.mxu0 %v2190
        %2221 = vmatpush.bf16.msra.mxu0 %v2188
        %2222 = vmatpush.bf16.msra.mxu0 %v2186
        %2223 = vmatpush.bf16.msra.mxu0 %v2184
        %2224 = vmatmul.bf16.gmra.mxu0 %v2113
        %v2225 = vpop.f32.mrf.mxu0
        %v2226 = vadd.f32 %v2132, %v2225
        %v2227 = vpop.f32.mrf.mxu0
        %v2228 = vadd.f32 %v2132, %v2227
        %2229 = vdwg.mxu0
        %2230 = vmatpush.bf16.msra.mxu0 %v2199
        %2231 = vmatpush.bf16.msra.mxu0 %v2197
        %2232 = vmatpush.bf16.msra.mxu0 %v2195
        %2233 = vmatpush.bf16.msra.mxu0 %v2193
        %2234 = vmatpush.bf16.msra.mxu0 %v2191
        %2235 = vmatpush.bf16.msra.mxu0 %v2189
        %2236 = vmatpush.bf16.msra.mxu0 %v2187
        %2237 = vmatpush.bf16.msra.mxu0 %v2185
        %2238 = vmatmul.bf16.gmra.mxu0 %v2113
        %v2239 = vpop.f32.mrf.mxu0
        %v2240 = vadd.f32 %v2133, %v2239
        %v2241 = vpop.f32.mrf.mxu0
        %v2242 = vadd.f32 %v2133, %v2241
        %2243 = vdwg.mxu0
        %v2244 = vxor.u32 %v2226, 2147483648
        %v2245 = vxor.u32 %v2228, 2147483648
        %v2246 = vmul.f32 %v2244, 1.442695
        %v2247 = vpow.pop %v2246
        %v2248 = vmul.f32 %v2245, 1.442695
        %v2249 = vpow.pop %v2248
        %v2250 = vadd.f32 %v2247, 1.0
        %v2251 = vadd.f32 %v2249, 1.0
        %v2252 = vrcp.pop %v2250
        %v2253 = vmul.f32 %v2250, %v2252
        %v2254 = vsub.f32 1.0, %v2253
        %v2255 = vmul.f32 %v2252, %v2254
        %v2256 = vadd.f32 %v2252, %v2255
        %vm2257 = vweird.f32 %v2250
        %vm2258 = vweird.f32 %v2252
        %vm2259 = vmor %vm2257, %vm2258
        %v2260 = vsel %vm2259, %v2252, %v2256
        %v2261 = vand.u32 2147483647, %v2250
        %vm2262 = vcmp.eq.f32.partialorder %v2261, 8.507059e+37
        %v2263 = vand.u32 %v2250, 2147483648
        %v2264 = vor.u32 1.1754944e-38, %v2263
        %v2265 = vsel %vm2262, %v2264, %v2260
        %v2266 = vmul.f32 1.0, %v2265
        %v2267 = vrcp.pop %v2251
        %v2268 = vmul.f32 %v2251, %v2267
        %v2269 = vsub.f32 1.0, %v2268
        %v2270 = vmul.f32 %v2267, %v2269
        %v2271 = vadd.f32 %v2267, %v2270
        %vm2272 = vweird.f32 %v2251
        %vm2273 = vweird.f32 %v2267
        %vm2274 = vmor %vm2272, %vm2273
        %v2275 = vsel %vm2274, %v2267, %v2271
        %v2276 = vand.u32 2147483647, %v2251
        %vm2277 = vcmp.eq.f32.partialorder %v2276, 8.507059e+37
        %v2278 = vand.u32 %v2251, 2147483648
        %v2279 = vor.u32 1.1754944e-38, %v2278
        %v2280 = vsel %vm2277, %v2279, %v2275
        %v2281 = vmul.f32 1.0, %v2280
        %v2282 = vpack.c.bf16 %v2281, %v2266
        %v2283 = vld [vmem:[#allocation13] sm:$0xf]
        %v2284 = vld [vmem:[#allocation13 + $0x4] sm:$0xf]
        %v2285 = vld [vmem:[#allocation13 + $0x8] sm:$0xf]
        %v2286 = vld [vmem:[#allocation13 + $0xc] sm:$0xf]
        %v2287 = vld [vmem:[#allocation13 + $0x10] sm:$0xf]
        %v2288 = vld [vmem:[#allocation13 + $0x14] sm:$0xf]
        %v2289 = vld [vmem:[#allocation13 + $0x18] sm:$0xf]
        %v2290 = vld [vmem:[#allocation13 + $0x1c] sm:$0xf]
        %v2291 = vld [vmem:[#allocation13 + $0x20] sm:$0xf]
        %v2292 = vld [vmem:[#allocation13 + $0x24] sm:$0xf]
        %v2293 = vld [vmem:[#allocation13 + $0x28] sm:$0xf]
        %v2294 = vld [vmem:[#allocation13 + $0x2c] sm:$0xf]
        %v2295 = vld [vmem:[#allocation13 + $0x30] sm:$0xf]
        %v2296 = vld [vmem:[#allocation13 + $0x34] sm:$0xf]
        %v2297 = vld [vmem:[#allocation13 + $0x38] sm:$0xf]
        %v2298 = vld [vmem:[#allocation13 + $0x3c] sm:$0xf]
        %v2299 = vld [vmem:[%s12] sm:$0x1]
        %v2301 = vperm.slane %v2299, 0
        %v2319 = vunpack.c.l.b16 %v2283
        %v2320 = vunpack.c.l.b16 %v2284
        %v2321 = vunpack.c.l.b16 %v2285
        %v2322 = vunpack.c.l.b16 %v2286
        %v2323 = vunpack.c.l.b16 %v2287
        %v2324 = vunpack.c.l.b16 %v2288
        %v2325 = vunpack.c.l.b16 %v2289
        %v2326 = vunpack.c.l.b16 %v2290
        %v2327 = vunpack.c.l.b16 %v2291
        %v2328 = vunpack.c.l.b16 %v2292
        %v2329 = vunpack.c.l.b16 %v2293
        %v2330 = vunpack.c.l.b16 %v2294
        %v2331 = vunpack.c.l.b16 %v2295
        %v2332 = vunpack.c.l.b16 %v2296
        %v2333 = vunpack.c.l.b16 %v2297
        %v2334 = vunpack.c.l.b16 %v2298
        %v2335 = vpack.c.b16 %v2320, %v2319
        %v2336 = vpack.c.b16 %v2322, %v2321
        %v2337 = vpack.c.b16 %v2324, %v2323
        %v2338 = vpack.c.b16 %v2326, %v2325
        %v2339 = vpack.c.b16 %v2328, %v2327
        %v2340 = vpack.c.b16 %v2330, %v2329
        %v2341 = vpack.c.b16 %v2332, %v2331
        %v2342 = vpack.c.b16 %v2334, %v2333
        %2351 = vmatpush.bf16.msra.mxu0 %v2342
        %2352 = vmatpush.bf16.msra.mxu0 %v2341
        %2353 = vmatpush.bf16.msra.mxu0 %v2340
        %2354 = vmatpush.bf16.msra.mxu0 %v2339
        %2355 = vmatpush.bf16.msra.mxu0 %v2338
        %2356 = vmatpush.bf16.msra.mxu0 %v2337
        %2357 = vmatpush.bf16.msra.mxu0 %v2336
        %2358 = vmatpush.bf16.msra.mxu0 %v2335
        %2359 = vmatmul.bf16.gmra.mxu0 %v2282
        %v2360 = vpop.f32.mrf.mxu0
        %v2361 = vadd.f32 %v2301, %v2360
        %v2362 = vpop.f32.mrf.mxu0
        %v2363 = vadd.f32 %v2301, %v2362
        %2364 = vdwg.mxu0
        %v2365 = vunpack.c.l.bf16 %v664
        %v2366 = vunpack.c.l.bf16 %v665
        %v2367 = vld [vmem:[%s13] sm:$0xff]
        %v2368 = vld [vmem:[%s14] sm:$0x1]
        %v2370 = vperm.slane %v2368, 0
        %v2373 = vsel %vm668, %v2365, 0
        %v2376 = vsel %vm668, %v2366, 0
        %2378 = vmatpush.msra.mxu0 0.0
        %2379 = vmatpush.msra.mxu0 0.0
        %2380 = vmatpush.msra.mxu0 0.0
        %2381 = vmatpush.msra.mxu0 0.0
        %2382 = vmatpush.msra.mxu0 0.0
        %2383 = vmatpush.msra.mxu0 0.0
        %2384 = vmatpush.msra.mxu0 0.0
        %2385 = vmatpush.msra.mxu0 0.0
        %2386 = vmatpush.msra.mxu0 0.0
        %2387 = vmatpush.msra.mxu0 0.0
        %2388 = vmatpush.msra.mxu0 0.0
        %2389 = vmatpush.msra.mxu0 0.0
        %2390 = vmatpush.msra.mxu0 0.0
        %2391 = vmatpush.msra.mxu0 0.0
        %2392 = vmatpush.msra.mxu0 0.0
        %2393 = vmatpush.msra.mxu0 %v2367
        %2394 = vmatmul.f32.gmra.mxu0 %v2373
        %v2395 = vpop.f32.mrf.mxu0
        %v2396 = vadd.f32 %v2370, %v2395
        %2397 = vmatmul.f32.gmra.mxu0 %v2376
        %v2398 = vpop.f32.mrf.mxu0
        %v2399 = vadd.f32 %v2370, %v2398
        %2400 = vdwg.mxu0
        %v2401 = vsub.f32 %v2240, %v2396
        %v2402 = vsub.f32 %v2242, %v2399
        %v2403 = vxor.u32 %v2401, 2147483648
        %v2404 = vxor.u32 %v2402, 2147483648
        %v2405 = vmul.f32 %v2403, 1.442695
        %v2406 = vpow.pop %v2405
        %v2407 = vmul.f32 %v2404, 1.442695
        %v2408 = vpow.pop %v2407
        %v2409 = vadd.f32 %v2406, 1.0
        %v2410 = vadd.f32 %v2408, 1.0
        %v2411 = vrcp.pop %v2409
        %v2412 = vmul.f32 %v2409, %v2411
        %v2413 = vsub.f32 1.0, %v2412
        %v2414 = vmul.f32 %v2411, %v2413
        %v2415 = vadd.f32 %v2411, %v2414
        %vm2416 = vweird.f32 %v2409
        %vm2417 = vweird.f32 %v2411
        %vm2418 = vmor %vm2416, %vm2417
        %v2419 = vsel %vm2418, %v2411, %v2415
        %v2420 = vand.u32 2147483647, %v2409
        %vm2421 = vcmp.eq.f32.partialorder %v2420, 8.507059e+37
        %v2422 = vand.u32 %v2409, 2147483648
        %v2423 = vor.u32 1.1754944e-38, %v2422
        %v2424 = vsel %vm2421, %v2423, %v2419
        %v2425 = vmul.f32 1.0, %v2424
        %v2426 = vrcp.pop %v2410
        %v2427 = vmul.f32 %v2410, %v2426
        %v2428 = vsub.f32 1.0, %v2427
        %v2429 = vmul.f32 %v2426, %v2428
        %v2430 = vadd.f32 %v2426, %v2429
        %vm2431 = vweird.f32 %v2410
        %vm2432 = vweird.f32 %v2426
        %vm2433 = vmor %vm2431, %vm2432
        %v2434 = vsel %vm2433, %v2426, %v2430
        %v2435 = vand.u32 2147483647, %v2410
        %vm2436 = vcmp.eq.f32.partialorder %v2435, 8.507059e+37
        %v2437 = vand.u32 %v2410, 2147483648
        %v2438 = vor.u32 1.1754944e-38, %v2437
        %v2439 = vsel %vm2436, %v2438, %v2434
        %v2440 = vmul.f32 1.0, %v2439
        %v2441 = vpack.c.bf16 %v2361, %v2361
        %v2442 = vpack.c.bf16 %v2363, %v2363
        %2443 = vst [vmem:[%s654] sm:$0xf] %v2441
        %2444 = vst [vmem:[%s654 + $0x8] sm:$0xf] %v2442
        %v2445 = vpack.c.bf16 %v2425, %v2425
        %v2446 = vpack.c.bf16 %v2440, %v2440
        %2447 = vst [vmem:[%s654 + $0x4] sm:$0xf] %v2445
        %2448 = vst [vmem:[%s654 + $0xc] sm:$0xf] %v2446
        %s2449 = sand.u32 %s368, 1
        %s2450 = scalar_lea.sflag [#allocation4], %s2449
        %s2451 = sand.u32 %s368, 1
        %s2452 = smul.addr %s2451, 16
        %s2453 = scalar_lea.vmem [#allocation14], %s2452
        // Predicated region
        $region109: #{tpu_custom_call.1} parent=79 // pred_check
          %p2454 = pneg %p378
        $region110: #{tpu_custom_call.1} parent=79 // pred_check_branch
          %2456 = sbr.rel (%p2454) target = $region112
        $region111: #{tpu_custom_call.1} parent=79 // pred_region
          %s2457 = smul.u32 2, %s35
          %2459 = vsyncadd %s2450, 0
          %s2460 = smul.addr %s2457, 2
          %s2461 = smul.addr %s2460, 4
          %s2462 = scalar_lea.hbm %s15, %s2461
          %s2463 = sshll.u32 %s2453, 4
          %s2464 = int_to_ptr.vmem [resolvable:$true] %s2463
          %s2465 = sshll.u32 %s2462, 4
          %s2466 = int_to_ptr.hbm [resolvable:$true] %s2465
          %2471 = dma.vmem_to_hbm [thread:$0]  %s2464, 256, %s2466, %s2450, 128, 128, 8
        $region112: #{tpu_custom_call.1} parent=79 // pred_fallthru
          _
      $region80: #{tpu_custom_call.1} parent=5 // pred_fallthru
        _
      %p2472 = scmp.le.s32.totalorder 2, %s30
      // Predicated region
      $region113: #{tpu_custom_call.1} parent=5 // pred_check
        %p2473 = pneg %p2472
      $region114: #{tpu_custom_call.1} parent=5 // pred_check_branch
        %2475 = sbr.rel (%p2473) target = $region116
      $region115: #{tpu_custom_call.1} parent=5 // pred_region
        %s2476 = ssub.s32 %s30, 2
        // Predicated region
        $region117: #{tpu_custom_call.1} parent=115 // pred_check
          %p2477 = pneg %p384
        $region118: #{tpu_custom_call.1} parent=115 // pred_check_branch
          %2479 = sbr.rel (%p2477) target = $region120
        $region119: #{tpu_custom_call.1} parent=115 // pred_region
          %s2480 = sand.u32 %s369, 1
          %s2481 = scalar_lea.sflag [#allocation4], %s2480
          %s2482 = sand.u32 %s369, 1
          %s2483 = smul.addr %s2482, 16
          %s2484 = scalar_lea.vmem [#allocation14], %s2483
          %2486 = dma.done %s2481, 256
        $region120: #{tpu_custom_call.1} parent=115 // pred_fallthru
          _
      $region116: #{tpu_custom_call.1} parent=5 // pred_fallthru
        _
    $region6: #{tpu_custom_call.1} parent=1 // loop_footer
      %s34 = sadd.s32 1, %s30
    $region7: #{tpu_custom_call.1} parent=1 // loop_footer_branch
      %29 = sbr.rel target = $region3
    $region8: #{tpu_custom_call.1} parent=1 // loop_exit
      _
    %2487 = vsyncpa [#allocation3], 1
    %s2488 = scalar_lea.sflag [#allocation3], 1
    %2489 = vsyncpa %s2488, 1
    %2490 = vsyncpa [#allocation6], 1
    %2491 = vsyncpa [#allocation9], 1
    %2492 = vsyncpa [#allocation12], 1
    %2493 = vsyncpa [#allocation4], 1
    %s2494 = scalar_lea.sflag [#allocation4], 1
    %2495 = vsyncpa %s2494, 1

</llo_original>
